<compile_context>
chip_gen: v7x
topology: tpu7x:2x2x1
jax: 0.10.0
libtpu: 0.0.40
codegen_flags: <defaults>
</compile_context>

<pallas_src>
import functools

import jax
import jax.numpy as jnp
from jax.experimental import pallas as pl
from jax.experimental.pallas import tpu as pltpu

BN_EPS = 1e-5


# ------------------------------ Fused kernel --------------------------------

def _down_kernel(x_ref, w_ref, aux_ref, o_ref, pad_ref, feat_ref, col_ref, *,
                 hh, wh, cin, half, growth, n_dense, cout):
    """One batch element of the whole Down block.

    x_ref   : (1, 4, hh, wh, cin)  the 4 members of each 2x2 pool window
    w_ref   : (n_conv, Kpad, Cpad) packed conv weights (im2col layout, 0-padded)
    aux_ref : (n_conv + 2*n_dense, Cpad) rows = conv biases, dense BN scales,
              dense BN shifts (0-padded)
    o_ref   : (1, hh, wh, cout)
    pad_ref : (hh+2, wh+2, Cmax) VMEM, zero-padded conv-input buffer (reused)
    feat_ref: (hh*wh, 2*half)    VMEM, the dense-block feature concat
    col_ref : (hh*wh, Kpad)      VMEM, im2col slab
    """
    hw = hh * wh
    n_conv = n_dense + 3  # dc1, dc2, dense 0..n-1, transition

    # Zero the padded buffer once per grid step -> 1-px halo is always zero.
    pad_ref[...] = jnp.zeros(pad_ref.shape, pad_ref.dtype)

    # ---- MaxPool2d(2): elementwise max over the 4 pool members ------------
    pooled = jnp.max(x_ref[0], axis=0)                       # (hh, wh, cin)
    pad_ref[1:hh + 1, 1:wh + 1, 0:cin] = pooled

    def conv3x3(widx, c_in, c_out, relu):
        # im2col: 9 shifted taps of the padded buffer laid out along lanes,
        # then a single MXU matmul (hw, 9*c_in) x (9*c_in, c_out).
        for k in range(9):
            dy, dx = divmod(k, 3)
            tap = pad_ref[dy:dy + hh, dx:dx + wh, 0:c_in]     # (hh, wh, c_in)
            col_ref[:, k * c_in:(k + 1) * c_in] = tap.reshape(hw, c_in)
        col = col_ref[:, 0:9 * c_in].astype(jnp.bfloat16)
        w = w_ref[widx, 0:9 * c_in, 0:c_out].astype(jnp.bfloat16)
        acc = jnp.dot(col, w, preferred_element_type=jnp.float32)
        acc = acc + aux_ref[widx:widx + 1, 0:c_out]           # conv bias
        if relu:
            acc = jnp.maximum(acc, 0.0)
        return acc                                            # (hw, c_out) f32

    # ---- DoubleConv: conv3x3 + BN(folded) + ReLU, twice --------------------
    h1 = conv3x3(0, cin, half, relu=True)
    pad_ref[1:hh + 1, 1:wh + 1, 0:half] = h1.reshape(hh, wh, half)
    conv_out = conv3x3(1, half, half, relu=True)
    feat_ref[:, 0:half] = conv_out

    # ---- DenseBlock: per layer  BN -> ReLU -> conv3x3 (dropout == identity)
    c = half
    for i in range(n_dense):
        sc = aux_ref[n_conv + i:n_conv + i + 1, 0:c]                  # (1, c)
        sh = aux_ref[n_conv + n_dense + i:n_conv + n_dense + i + 1, 0:c]
        act = jnp.maximum(feat_ref[:, 0:c] * sc + sh, 0.0)            # (hw, c)
        pad_ref[1:hh + 1, 1:wh + 1, 0:c] = act.reshape(hh, wh, c)
        newf = conv3x3(2 + i, c, growth, relu=False)                  # (hw, g)
        feat_ref[:, c:c + growth] = newf          # in-place "concat"
        c += growth

    # ---- transition 1x1 conv -----------------------------------------------
    feat = feat_ref[:, 0:c].astype(jnp.bfloat16)                      # (hw, 2*half)
    wt = w_ref[n_conv - 1, 0:c, 0:cout].astype(jnp.bfloat16)
    y = jnp.dot(feat, wt, preferred_element_type=jnp.float32)
    y = y + aux_ref[n_conv - 1:n_conv, 0:cout]
    o_ref[0] = y.reshape(hh, wh, cout).astype(o_ref.dtype)


# ----------------------------- Parameter init -------------------------------

def _conv_params(key, kh, kw, cin, cout):
    kw_key, kb_key = jax.random.split(key)
    w = 0.1 * jax.random.normal(kw_key, (kh, kw, cin, cout), jnp.float32)
    b = 0.1 * jax.random.normal(kb_key, (cout,), jnp.float32)
    return w, b


def _bn_params(key, c):
    k1, k2, k3, k4 = jax.random.split(key, 4)
    gamma = 1.0 + 0.1 * jax.random.normal(k1, (c,), jnp.float32)
    beta = 0.1 * jax.random.normal(k2, (c,), jnp.float32)
    mean = 0.1 * jax.random.normal(k3, (c,), jnp.float32)
    var = 1.0 + 0.1 * jnp.abs(jax.random.normal(k4, (c,), jnp.float32))
    return gamma, beta, mean, var


def _fold_bn_after_conv(w, b, bn):
    # conv -> BN  ==>  conv with scaled weights / shifted bias
    gamma, beta, mean, var = bn
    s = gamma / jnp.sqrt(var + BN_EPS)
    return w * s, (b - mean) * s + beta


def _bn_scale_shift(bn):
    gamma, beta, mean, var = bn
    s = gamma / jnp.sqrt(var + BN_EPS)
    return s, beta - mean * s


def init_down_params(key, in_channels, out_channels, dense_layers=4):
    half = out_channels // 2
    growth = out_channels // (2 * dense_layers)
    keys = jax.random.split(key, 6 + 2 * dense_layers)
    p = {}
    # DoubleConv: conv3x3 -> BN -> ReLU, conv3x3 -> BN -> ReLU
    p["dc_w1"], p["dc_b1"] = _conv_params(keys[0], 3, 3, in_channels, half)
    p["dc_bn1"] = _bn_params(keys[1], half)
    p["dc_w2"], p["dc_b2"] = _conv_params(keys[2], 3, 3, half, half)
    p["dc_bn2"] = _bn_params(keys[3], half)
    # DenseBlock: per layer BN -> ReLU -> conv3x3 -> Dropout
    p["dense"] = []
    c = half
    for i in range(dense_layers):
        bn = _bn_params(keys[4 + 2 * i], c)
        w, b = _conv_params(keys[5 + 2 * i], 3, 3, c, growth)
        p["dense"].append((bn, w, b))
        c += growth
    # transition conv1x1: (half + dense_layers*growth) == 2*half -> out_channels
    wt, bt = _conv_params(keys[-2], 1, 1, 2 * half, out_channels)
    p["tr_w"], p["tr_b"] = wt[0, 0], bt
    return p


# ---------------------------- Packing (host side) ---------------------------

def _pack_params(params):
    """Pack all conv weights / biases / dense-layer BN params into 2 arrays."""
    n_dense = len(params["dense"])

    convs = []
    w, b = _fold_bn_after_conv(params["dc_w1"], params["dc_b1"], params["dc_bn1"])
    convs.append((w.reshape(-1, w.shape[-1]), b))           # (9*cin, half)
    w, b = _fold_bn_after_conv(params["dc_w2"], params["dc_b2"], params["dc_bn2"])
    convs.append((w.reshape(-1, w.shape[-1]), b))           # (9*half, half)
    scales, shifts = [], []
    for bn, w, b in params["dense"]:
        s, t = _bn_scale_shift(bn)
        scales.append(s)
        shifts.append(t)
        convs.append((w.reshape(-1, w.shape[-1]), b))       # (9*c_i, growth)
    convs.append((params["tr_w"], params["tr_b"]))          # (2*half, out)

    n_conv = len(convs)
    kmax = max(int(w.shape[0]) for w, _ in convs)
    kpad = max(8, -(-kmax // 8) * 8)                        # 126 -> 128
    cpad = max(max(int(w.shape[1]) for w, _ in convs),
               max(int(s.shape[0]) for s in scales))

    w_pack = jnp.zeros((n_conv, kpad, cpad), jnp.float32)
    aux = jnp.zeros((n_conv + 2 * n_dense, cpad), jnp.float32)
    for i, (w, b) in enumerate(convs):
        w_pack = w_pack.at[i, :w.shape[0], :w.shape[1]].set(w)
        aux = aux.at[i, :b.shape[0]].set(b)
    for i, (s, t) in enumerate(zip(scales, shifts)):
        aux = aux.at[n_conv + i, :s.shape[0]].set(s)
        aux = aux.at[n_conv + n_dense + i, :t.shape[0]].set(t)
    return w_pack, aux


# ------------------------------- Forward ------------------------------------

def down_forward(params, x_nchw):
    N, in_ch, H, W = x_nchw.shape
    assert H % 2 == 0 and W % 2 == 0, "MaxPool2d(2): use even spatial dims"
    half = params["dc_w1"].shape[-1]
    n_dense = len(params["dense"])
    growth = params["dense"][0][1].shape[-1]
    out_ch = params["tr_b"].shape[0]
    hh, wh = H // 2, W // 2
    hw = hh * wh
    c_feat = half + n_dense * growth
    n_conv = n_dense + 3

    w_pack, aux = _pack_params(params)
    kpad, cpad = int(w_pack.shape[1]), int(w_pack.shape[2])
    n_aux = int(aux.shape[0])

    # Layout plumbing only: NCHW -> NHWC, then group the 4 members of each
    # 2x2 pool window on a leading axis so the kernel pools with one reduce.
    x_nhwc = jnp.transpose(x_nchw, (0, 2, 3, 1))
    x_prep = (x_nhwc.reshape(N, hh, 2, wh, 2, in_ch)
                     .transpose(0, 2, 4, 1, 3, 5)
                     .reshape(N, 4, hh, wh, in_ch))

    kern = functools.partial(_down_kernel, hh=hh, wh=wh, cin=in_ch, half=half,
                             growth=growth, n_dense=n_dense, cout=out_ch)

    y = pl.pallas_call(
        kern,
        out_shape=jax.ShapeDtypeStruct((N, hh, wh, out_ch), x_nchw.dtype),
        grid=(N,),
        in_specs=[
            pl.BlockSpec((1, 4, hh, wh, in_ch), lambda n: (n, 0, 0, 0, 0)),
            pl.BlockSpec((n_conv, kpad, cpad), lambda n: (0, 0, 0)),
            pl.BlockSpec((n_aux, cpad), lambda n: (0, 0)),
        ],
        out_specs=pl.BlockSpec((1, hh, wh, out_ch), lambda n: (n, 0, 0, 0)),
        scratch_shapes=[
            pltpu.VMEM((hh + 2, wh + 2, max(in_ch, c_feat)), jnp.float32),  # pad
            pltpu.VMEM((hw, c_feat), jnp.float32),                          # feat
            pltpu.VMEM((hw, kpad), jnp.float32),                            # im2col
        ],
        compiler_params=pltpu.CompilerParams(
            dimension_semantics=("parallel",)),
    )(x_prep, w_pack, aux)

    # back to NCHW for PyTorch-equivalent output
    return jnp.transpose(y, (0, 3, 1, 2))


if __name__ == "__main__":
    in_channels, out_channels = 4, 16
    N, H, W = 2, 16, 16

    root = jax.random.PRNGKey(0)
    kx, kp = jax.random.split(root)
    x = jax.random.normal(kx, (N, in_channels, H, W), jnp.float32)  # NCHW
    params = init_down_params(kp, in_channels, out_channels, dense_layers=4)

    fwd = jax.jit(down_forward)
    y = fwd(params, x)
    y = jax.block_until_ready(y)
    assert y.shape == (N, out_channels, H // 2, W // 2), y.shape
    assert bool(jnp.all(jnp.isfinite(y)))
    print("KERNEL_OK")
</pallas_src>

<mosaic_0001>
module attributes {stable_mosaic.version = 11 : i64} {
  func.func @_down_kernel(%arg0: i32, %arg1: memref<1x4x8x8x4xf32, #tpu.memory_space<vmem>>, %arg2: memref<7x128x16xf32, #tpu.memory_space<vmem>>, %arg3: memref<15x16xf32, #tpu.memory_space<vmem>>, %arg4: memref<1x8x8x16xf32, #tpu.memory_space<vmem>>, %arg5: memref<10x10x16xf32, #tpu.memory_space<vmem>>, %arg6: memref<64x16xf32, #tpu.memory_space<vmem>>, %arg7: memref<64x128xf32, #tpu.memory_space<vmem>>) attributes {dimension_semantics = [#tpu.dimension_semantics<parallel>], iteration_bounds = array<i64: 2>, scalar_prefetch = 0 : i64, scratch_operands = 3 : i64, tpu.core_type = #tpu.core_type<tc>, window_params = [{transform_indices = @transform_0, window_bounds = array<i64: 1, 4, 8, 8, 4>}, {pipeline_mode = #tpu.pipeline_mode<synchronous>, transform_indices = @transform_1, window_bounds = array<i64: 7, 128, 16>}, {pipeline_mode = #tpu.pipeline_mode<synchronous>, transform_indices = @transform_2, window_bounds = array<i64: 15, 16>}, {transform_indices = @transform_3, window_bounds = array<i64: 1, 8, 8, 16>}]} {
    %cst = arith.constant 0.000000e+00 : f32
    %0 = vector.broadcast %cst : f32 to vector<10x10x16xf32>
    %c0 = arith.constant 0 : index
    %c0_0 = arith.constant 0 : index
    %c0_1 = arith.constant 0 : index
    %1 = vector.load %arg5[%c0, %c0_0, %c0_1] : memref<10x10x16xf32, #tpu.memory_space<vmem>>, vector<10x10x16xf32>
    tpu.vector_store %arg5[%c0, %c0_0, %c0_1], %0 {strides = array<i32>} : memref<10x10x16xf32, #tpu.memory_space<vmem>>, vector<10x10x16xf32>,
    %c0_2 = arith.constant 0 : index
    %c0_3 = arith.constant 0 : index
    %c0_4 = arith.constant 0 : index
    %c0_5 = arith.constant 0 : index
    %c0_6 = arith.constant 0 : index
    %2 = vector.load %arg1[%c0_2, %c0_3, %c0_4, %c0_5, %c0_6] : memref<1x4x8x8x4xf32, #tpu.memory_space<vmem>>, vector<1x4x8x8x4xf32>
    %3 = vector.shape_cast %2 : vector<1x4x8x8x4xf32> to vector<4x8x8x4xf32>
    %cst_7 = arith.constant dense<0xFF800000> : vector<8x8x4xf32>
    %4 = vector.multi_reduction <maximumf>, %3, %cst_7 [0] : vector<4x8x8x4xf32> to vector<8x8x4xf32>
    %c1 = arith.constant 1 : index
    %c1_8 = arith.constant 1 : index
    %c0_9 = arith.constant 0 : index
    %5 = vector.load %arg5[%c1, %c1_8, %c0_9] : memref<10x10x16xf32, #tpu.memory_space<vmem>>, vector<8x8x4xf32>
    tpu.vector_store %arg5[%c1, %c1_8, %c0_9], %4 {strides = array<i32>} : memref<10x10x16xf32, #tpu.memory_space<vmem>>, vector<8x8x4xf32>,
    %c0_10 = arith.constant 0 : index
    %c0_11 = arith.constant 0 : index
    %c0_12 = arith.constant 0 : index
    %6 = vector.load %arg5[%c0_10, %c0_11, %c0_12] : memref<10x10x16xf32, #tpu.memory_space<vmem>>, vector<8x8x4xf32>
    %7 = vector.shape_cast %6 : vector<8x8x4xf32> to vector<64x4xf32>
    %c0_13 = arith.constant 0 : index
    %c0_14 = arith.constant 0 : index
    %8 = vector.load %arg7[%c0_13, %c0_14] : memref<64x128xf32, #tpu.memory_space<vmem>>, vector<64x4xf32>
    tpu.vector_store %arg7[%c0_13, %c0_14], %7 {strides = array<i32>} : memref<64x128xf32, #tpu.memory_space<vmem>>, vector<64x4xf32>,
    %c0_15 = arith.constant 0 : index
    %c1_16 = arith.constant 1 : index
    %c0_17 = arith.constant 0 : index
    %9 = vector.load %arg5[%c0_15, %c1_16, %c0_17] : memref<10x10x16xf32, #tpu.memory_space<vmem>>, vector<8x8x4xf32>
    %10 = vector.shape_cast %9 : vector<8x8x4xf32> to vector<64x4xf32>
    %c0_18 = arith.constant 0 : index
    %c4 = arith.constant 4 : index
    %11 = vector.load %arg7[%c0_18, %c4] : memref<64x128xf32, #tpu.memory_space<vmem>>, vector<64x4xf32>
    tpu.vector_store %arg7[%c0_18, %c4], %10 {strides = array<i32>} : memref<64x128xf32, #tpu.memory_space<vmem>>, vector<64x4xf32>,
    %c0_19 = arith.constant 0 : index
    %c2 = arith.constant 2 : index
    %c0_20 = arith.constant 0 : index
    %12 = vector.load %arg5[%c0_19, %c2, %c0_20] : memref<10x10x16xf32, #tpu.memory_space<vmem>>, vector<8x8x4xf32>
    %13 = vector.shape_cast %12 : vector<8x8x4xf32> to vector<64x4xf32>
    %c0_21 = arith.constant 0 : index
    %c8 = arith.constant 8 : index
    %14 = vector.load %arg7[%c0_21, %c8] : memref<64x128xf32, #tpu.memory_space<vmem>>, vector<64x4xf32>
    tpu.vector_store %arg7[%c0_21, %c8], %13 {strides = array<i32>} : memref<64x128xf32, #tpu.memory_space<vmem>>, vector<64x4xf32>,
    %c1_22 = arith.constant 1 : index
    %c0_23 = arith.constant 0 : index
    %c0_24 = arith.constant 0 : index
    %15 = vector.load %arg5[%c1_22, %c0_23, %c0_24] : memref<10x10x16xf32, #tpu.memory_space<vmem>>, vector<8x8x4xf32>
    %16 = vector.shape_cast %15 : vector<8x8x4xf32> to vector<64x4xf32>
    %c0_25 = arith.constant 0 : index
    %c12 = arith.constant 12 : index
    %17 = vector.load %arg7[%c0_25, %c12] : memref<64x128xf32, #tpu.memory_space<vmem>>, vector<64x4xf32>
    tpu.vector_store %arg7[%c0_25, %c12], %16 {strides = array<i32>} : memref<64x128xf32, #tpu.memory_space<vmem>>, vector<64x4xf32>,
    %c1_26 = arith.constant 1 : index
    %c1_27 = arith.constant 1 : index
    %c0_28 = arith.constant 0 : index
    %18 = vector.load %arg5[%c1_26, %c1_27, %c0_28] : memref<10x10x16xf32, #tpu.memory_space<vmem>>, vector<8x8x4xf32>
    %19 = vector.shape_cast %18 : vector<8x8x4xf32> to vector<64x4xf32>
    %c0_29 = arith.constant 0 : index
    %c16 = arith.constant 16 : index
    %20 = vector.load %arg7[%c0_29, %c16] : memref<64x128xf32, #tpu.memory_space<vmem>>, vector<64x4xf32>
    tpu.vector_store %arg7[%c0_29, %c16], %19 {strides = array<i32>} : memref<64x128xf32, #tpu.memory_space<vmem>>, vector<64x4xf32>,
    %c1_30 = arith.constant 1 : index
    %c2_31 = arith.constant 2 : index
    %c0_32 = arith.constant 0 : index
    %21 = vector.load %arg5[%c1_30, %c2_31, %c0_32] : memref<10x10x16xf32, #tpu.memory_space<vmem>>, vector<8x8x4xf32>
    %22 = vector.shape_cast %21 : vector<8x8x4xf32> to vector<64x4xf32>
    %c0_33 = arith.constant 0 : index
    %c20 = arith.constant 20 : index
    %23 = vector.load %arg7[%c0_33, %c20] : memref<64x128xf32, #tpu.memory_space<vmem>>, vector<64x4xf32>
    tpu.vector_store %arg7[%c0_33, %c20], %22 {strides = array<i32>} : memref<64x128xf32, #tpu.memory_space<vmem>>, vector<64x4xf32>,
    %c2_34 = arith.constant 2 : index
    %c0_35 = arith.constant 0 : index
    %c0_36 = arith.constant 0 : index
    %24 = vector.load %arg5[%c2_34, %c0_35, %c0_36] : memref<10x10x16xf32, #tpu.memory_space<vmem>>, vector<8x8x4xf32>
    %25 = vector.shape_cast %24 : vector<8x8x4xf32> to vector<64x4xf32>
    %c0_37 = arith.constant 0 : index
    %c24 = arith.constant 24 : index
    %26 = vector.load %arg7[%c0_37, %c24] : memref<64x128xf32, #tpu.memory_space<vmem>>, vector<64x4xf32>
    tpu.vector_store %arg7[%c0_37, %c24], %25 {strides = array<i32>} : memref<64x128xf32, #tpu.memory_space<vmem>>, vector<64x4xf32>,
    %c2_38 = arith.constant 2 : index
    %c1_39 = arith.constant 1 : index
    %c0_40 = arith.constant 0 : index
    %27 = vector.load %arg5[%c2_38, %c1_39, %c0_40] : memref<10x10x16xf32, #tpu.memory_space<vmem>>, vector<8x8x4xf32>
    %28 = vector.shape_cast %27 : vector<8x8x4xf32> to vector<64x4xf32>
    %c0_41 = arith.constant 0 : index
    %c28 = arith.constant 28 : index
    %29 = vector.load %arg7[%c0_41, %c28] : memref<64x128xf32, #tpu.memory_space<vmem>>, vector<64x4xf32>
    tpu.vector_store %arg7[%c0_41, %c28], %28 {strides = array<i32>} : memref<64x128xf32, #tpu.memory_space<vmem>>, vector<64x4xf32>,
    %c2_42 = arith.constant 2 : index
    %c2_43 = arith.constant 2 : index
    %c0_44 = arith.constant 0 : index
    %30 = vector.load %arg5[%c2_42, %c2_43, %c0_44] : memref<10x10x16xf32, #tpu.memory_space<vmem>>, vector<8x8x4xf32>
    %31 = vector.shape_cast %30 : vector<8x8x4xf32> to vector<64x4xf32>
    %c0_45 = arith.constant 0 : index
    %c32 = arith.constant 32 : index
    %32 = vector.load %arg7[%c0_45, %c32] : memref<64x128xf32, #tpu.memory_space<vmem>>, vector<64x4xf32>
    tpu.vector_store %arg7[%c0_45, %c32], %31 {strides = array<i32>} : memref<64x128xf32, #tpu.memory_space<vmem>>, vector<64x4xf32>,
    %c0_46 = arith.constant 0 : index
    %c0_47 = arith.constant 0 : index
    %33 = vector.load %arg7[%c0_46, %c0_47] : memref<64x128xf32, #tpu.memory_space<vmem>>, vector<64x36xf32>
    %34 = arith.truncf %33 : vector<64x36xf32> to vector<64x36xbf16>
    %c0_48 = arith.constant 0 : index
    %c0_49 = arith.constant 0 : index
    %c0_50 = arith.constant 0 : index
    %35 = vector.load %arg2[%c0_48, %c0_49, %c0_50] : memref<7x128x16xf32, #tpu.memory_space<vmem>>, vector<1x36x8xf32>
    %36 = vector.shape_cast %35 : vector<1x36x8xf32> to vector<36x8xf32>
    %37 = arith.truncf %36 : vector<36x8xf32> to vector<36x8xbf16>
    %cst_51 = arith.constant dense<0.000000e+00> : vector<64x8xf32>
    %38 = tpu.matmul %34, %37, %cst_51 {dimension_numbers = #tpu.dot_dimension_numbers<[1], [0], [0], [1], [0, 0, 1, 1], [], []>} : vector<64x36xbf16>, vector<36x8xbf16>, vector<64x8xf32> -> vector<64x8xf32>
    %c0_52 = arith.constant 0 : index
    %c0_53 = arith.constant 0 : index
    %39 = vector.load %arg3[%c0_52, %c0_53] : memref<15x16xf32, #tpu.memory_space<vmem>>, vector<1x8xf32>
    %40 = vector.broadcast %39 : vector<1x8xf32> to vector<64x8xf32>
    %41 = arith.addf %38, %40 : vector<64x8xf32>
    %cst_54 = arith.constant 0.000000e+00 : f32
    %42 = vector.broadcast %cst_54 : f32 to vector<64x8xf32>
    %43 = arith.maximumf %41, %42 : vector<64x8xf32>
    %44 = vector.shape_cast %43 : vector<64x8xf32> to vector<8x8x8xf32>
    %c1_55 = arith.constant 1 : index
    %c1_56 = arith.constant 1 : index
    %c0_57 = arith.constant 0 : index
    %45 = vector.load %arg5[%c1_55, %c1_56, %c0_57] : memref<10x10x16xf32, #tpu.memory_space<vmem>>, vector<8x8x8xf32>
    tpu.vector_store %arg5[%c1_55, %c1_56, %c0_57], %44 {strides = array<i32>} : memref<10x10x16xf32, #tpu.memory_space<vmem>>, vector<8x8x8xf32>,
    %c0_58 = arith.constant 0 : index
    %c0_59 = arith.constant 0 : index
    %c0_60 = arith.constant 0 : index
    %46 = vector.load %arg5[%c0_58, %c0_59, %c0_60] : memref<10x10x16xf32, #tpu.memory_space<vmem>>, vector<8x8x8xf32>
    %47 = vector.shape_cast %46 : vector<8x8x8xf32> to vector<64x8xf32>
    %c0_61 = arith.constant 0 : index
    %c0_62 = arith.constant 0 : index
    %48 = vector.load %arg7[%c0_61, %c0_62] : memref<64x128xf32, #tpu.memory_space<vmem>>, vector<64x8xf32>
    tpu.vector_store %arg7[%c0_61, %c0_62], %47 {strides = array<i32>} : memref<64x128xf32, #tpu.memory_space<vmem>>, vector<64x8xf32>,
    %c0_63 = arith.constant 0 : index
    %c1_64 = arith.constant 1 : index
    %c0_65 = arith.constant 0 : index
    %49 = vector.load %arg5[%c0_63, %c1_64, %c0_65] : memref<10x10x16xf32, #tpu.memory_space<vmem>>, vector<8x8x8xf32>
    %50 = vector.shape_cast %49 : vector<8x8x8xf32> to vector<64x8xf32>
    %c0_66 = arith.constant 0 : index
    %c8_67 = arith.constant 8 : index
    %51 = vector.load %arg7[%c0_66, %c8_67] : memref<64x128xf32, #tpu.memory_space<vmem>>, vector<64x8xf32>
    tpu.vector_store %arg7[%c0_66, %c8_67], %50 {strides = array<i32>} : memref<64x128xf32, #tpu.memory_space<vmem>>, vector<64x8xf32>,
    %c0_68 = arith.constant 0 : index
    %c2_69 = arith.constant 2 : index
    %c0_70 = arith.constant 0 : index
    %52 = vector.load %arg5[%c0_68, %c2_69, %c0_70] : memref<10x10x16xf32, #tpu.memory_space<vmem>>, vector<8x8x8xf32>
    %53 = vector.shape_cast %52 : vector<8x8x8xf32> to vector<64x8xf32>
    %c0_71 = arith.constant 0 : index
    %c16_72 = arith.constant 16 : index
    %54 = vector.load %arg7[%c0_71, %c16_72] : memref<64x128xf32, #tpu.memory_space<vmem>>, vector<64x8xf32>
    tpu.vector_store %arg7[%c0_71, %c16_72], %53 {strides = array<i32>} : memref<64x128xf32, #tpu.memory_space<vmem>>, vector<64x8xf32>,
    %c1_73 = arith.constant 1 : index
    %c0_74 = arith.constant 0 : index
    %c0_75 = arith.constant 0 : index
    %55 = vector.load %arg5[%c1_73, %c0_74, %c0_75] : memref<10x10x16xf32, #tpu.memory_space<vmem>>, vector<8x8x8xf32>
    %56 = vector.shape_cast %55 : vector<8x8x8xf32> to vector<64x8xf32>
    %c0_76 = arith.constant 0 : index
    %c24_77 = arith.constant 24 : index
    %57 = vector.load %arg7[%c0_76, %c24_77] : memref<64x128xf32, #tpu.memory_space<vmem>>, vector<64x8xf32>
    tpu.vector_store %arg7[%c0_76, %c24_77], %56 {strides = array<i32>} : memref<64x128xf32, #tpu.memory_space<vmem>>, vector<64x8xf32>,
    %c1_78 = arith.constant 1 : index
    %c1_79 = arith.constant 1 : index
    %c0_80 = arith.constant 0 : index
    %58 = vector.load %arg5[%c1_78, %c1_79, %c0_80] : memref<10x10x16xf32, #tpu.memory_space<vmem>>, vector<8x8x8xf32>
    %59 = vector.shape_cast %58 : vector<8x8x8xf32> to vector<64x8xf32>
    %c0_81 = arith.constant 0 : index
    %c32_82 = arith.constant 32 : index
    %60 = vector.load %arg7[%c0_81, %c32_82] : memref<64x128xf32, #tpu.memory_space<vmem>>, vector<64x8xf32>
    tpu.vector_store %arg7[%c0_81, %c32_82], %59 {strides = array<i32>} : memref<64x128xf32, #tpu.memory_space<vmem>>, vector<64x8xf32>,
    %c1_83 = arith.constant 1 : index
    %c2_84 = arith.constant 2 : index
    %c0_85 = arith.constant 0 : index
    %61 = vector.load %arg5[%c1_83, %c2_84, %c0_85] : memref<10x10x16xf32, #tpu.memory_space<vmem>>, vector<8x8x8xf32>
    %62 = vector.shape_cast %61 : vector<8x8x8xf32> to vector<64x8xf32>
    %c0_86 = arith.constant 0 : index
    %c40 = arith.constant 40 : index
    %63 = vector.load %arg7[%c0_86, %c40] : memref<64x128xf32, #tpu.memory_space<vmem>>, vector<64x8xf32>
    tpu.vector_store %arg7[%c0_86, %c40], %62 {strides = array<i32>} : memref<64x128xf32, #tpu.memory_space<vmem>>, vector<64x8xf32>,
    %c2_87 = arith.constant 2 : index
    %c0_88 = arith.constant 0 : index
    %c0_89 = arith.constant 0 : index
    %64 = vector.load %arg5[%c2_87, %c0_88, %c0_89] : memref<10x10x16xf32, #tpu.memory_space<vmem>>, vector<8x8x8xf32>
    %65 = vector.shape_cast %64 : vector<8x8x8xf32> to vector<64x8xf32>
    %c0_90 = arith.constant 0 : index
    %c48 = arith.constant 48 : index
    %66 = vector.load %arg7[%c0_90, %c48] : memref<64x128xf32, #tpu.memory_space<vmem>>, vector<64x8xf32>
    tpu.vector_store %arg7[%c0_90, %c48], %65 {strides = array<i32>} : memref<64x128xf32, #tpu.memory_space<vmem>>, vector<64x8xf32>,
    %c2_91 = arith.constant 2 : index
    %c1_92 = arith.constant 1 : index
    %c0_93 = arith.constant 0 : index
    %67 = vector.load %arg5[%c2_91, %c1_92, %c0_93] : memref<10x10x16xf32, #tpu.memory_space<vmem>>, vector<8x8x8xf32>
    %68 = vector.shape_cast %67 : vector<8x8x8xf32> to vector<64x8xf32>
    %c0_94 = arith.constant 0 : index
    %c56 = arith.constant 56 : index
    %69 = vector.load %arg7[%c0_94, %c56] : memref<64x128xf32, #tpu.memory_space<vmem>>, vector<64x8xf32>
    tpu.vector_store %arg7[%c0_94, %c56], %68 {strides = array<i32>} : memref<64x128xf32, #tpu.memory_space<vmem>>, vector<64x8xf32>,
    %c2_95 = arith.constant 2 : index
    %c2_96 = arith.constant 2 : index
    %c0_97 = arith.constant 0 : index
    %70 = vector.load %arg5[%c2_95, %c2_96, %c0_97] : memref<10x10x16xf32, #tpu.memory_space<vmem>>, vector<8x8x8xf32>
    %71 = vector.shape_cast %70 : vector<8x8x8xf32> to vector<64x8xf32>
    %c0_98 = arith.constant 0 : index
    %c64 = arith.constant 64 : index
    %72 = vector.load %arg7[%c0_98, %c64] : memref<64x128xf32, #tpu.memory_space<vmem>>, vector<64x8xf32>
    tpu.vector_store %arg7[%c0_98, %c64], %71 {strides = array<i32>} : memref<64x128xf32, #tpu.memory_space<vmem>>, vector<64x8xf32>,
    %c0_99 = arith.constant 0 : index
    %c0_100 = arith.constant 0 : index
    %73 = vector.load %arg7[%c0_99, %c0_100] : memref<64x128xf32, #tpu.memory_space<vmem>>, vector<64x72xf32>
    %74 = arith.truncf %73 : vector<64x72xf32> to vector<64x72xbf16>
    %c1_101 = arith.constant 1 : index
    %c0_102 = arith.constant 0 : index
    %c0_103 = arith.constant 0 : index
    %75 = vector.load %arg2[%c1_101, %c0_102, %c0_103] : memref<7x128x16xf32, #tpu.memory_space<vmem>>, vector<1x72x8xf32>
    %76 = vector.shape_cast %75 : vector<1x72x8xf32> to vector<72x8xf32>
    %77 = arith.truncf %76 : vector<72x8xf32> to vector<72x8xbf16>
    %cst_104 = arith.constant dense<0.000000e+00> : vector<64x8xf32>
    %78 = tpu.matmul %74, %77, %cst_104 {dimension_numbers = #tpu.dot_dimension_numbers<[1], [0], [0], [1], [0, 0, 1, 1], [], []>} : vector<64x72xbf16>, vector<72x8xbf16>, vector<64x8xf32> -> vector<64x8xf32>
    %c1_105 = arith.constant 1 : index
    %c0_106 = arith.constant 0 : index
    %79 = vector.load %arg3[%c1_105, %c0_106] : memref<15x16xf32, #tpu.memory_space<vmem>>, vector<1x8xf32>
    %80 = vector.broadcast %79 : vector<1x8xf32> to vector<64x8xf32>
    %81 = arith.addf %78, %80 : vector<64x8xf32>
    %cst_107 = arith.constant 0.000000e+00 : f32
    %82 = vector.broadcast %cst_107 : f32 to vector<64x8xf32>
    %83 = arith.maximumf %81, %82 : vector<64x8xf32>
    %c0_108 = arith.constant 0 : index
    %c0_109 = arith.constant 0 : index
    %84 = vector.load %arg6[%c0_108, %c0_109] : memref<64x16xf32, #tpu.memory_space<vmem>>, vector<64x8xf32>
    tpu.vector_store %arg6[%c0_108, %c0_109], %83 {strides = array<i32>} : memref<64x16xf32, #tpu.memory_space<vmem>>, vector<64x8xf32>,
    %c7 = arith.constant 7 : index
    %c0_110 = arith.constant 0 : index
    %85 = vector.load %arg3[%c7, %c0_110] : memref<15x16xf32, #tpu.memory_space<vmem>>, vector<1x8xf32>
    %c11 = arith.constant 11 : index
    %c0_111 = arith.constant 0 : index
    %86 = vector.load %arg3[%c11, %c0_111] : memref<15x16xf32, #tpu.memory_space<vmem>>, vector<1x8xf32>
    %c0_112 = arith.constant 0 : index
    %c0_113 = arith.constant 0 : index
    %87 = vector.load %arg6[%c0_112, %c0_113] : memref<64x16xf32, #tpu.memory_space<vmem>>, vector<64x8xf32>
    %88 = vector.broadcast %85 : vector<1x8xf32> to vector<64x8xf32>
    %89 = arith.mulf %87, %88 : vector<64x8xf32>
    %90 = vector.broadcast %86 : vector<1x8xf32> to vector<64x8xf32>
    %91 = arith.addf %89, %90 : vector<64x8xf32>
    %cst_114 = arith.constant 0.000000e+00 : f32
    %92 = vector.broadcast %cst_114 : f32 to vector<64x8xf32>
    %93 = arith.maximumf %91, %92 : vector<64x8xf32>
    %94 = vector.shape_cast %93 : vector<64x8xf32> to vector<8x8x8xf32>
    %c1_115 = arith.constant 1 : index
    %c1_116 = arith.constant 1 : index
    %c0_117 = arith.constant 0 : index
    %95 = vector.load %arg5[%c1_115, %c1_116, %c0_117] : memref<10x10x16xf32, #tpu.memory_space<vmem>>, vector<8x8x8xf32>
    tpu.vector_store %arg5[%c1_115, %c1_116, %c0_117], %94 {strides = array<i32>} : memref<10x10x16xf32, #tpu.memory_space<vmem>>, vector<8x8x8xf32>,
    %c0_118 = arith.constant 0 : index
    %c0_119 = arith.constant 0 : index
    %c0_120 = arith.constant 0 : index
    %96 = vector.load %arg5[%c0_118, %c0_119, %c0_120] : memref<10x10x16xf32, #tpu.memory_space<vmem>>, vector<8x8x8xf32>
    %97 = vector.shape_cast %96 : vector<8x8x8xf32> to vector<64x8xf32>
    %c0_121 = arith.constant 0 : index
    %c0_122 = arith.constant 0 : index
    %98 = vector.load %arg7[%c0_121, %c0_122] : memref<64x128xf32, #tpu.memory_space<vmem>>, vector<64x8xf32>
    tpu.vector_store %arg7[%c0_121, %c0_122], %97 {strides = array<i32>} : memref<64x128xf32, #tpu.memory_space<vmem>>, vector<64x8xf32>,
    %c0_123 = arith.constant 0 : index
    %c1_124 = arith.constant 1 : index
    %c0_125 = arith.constant 0 : index
    %99 = vector.load %arg5[%c0_123, %c1_124, %c0_125] : memref<10x10x16xf32, #tpu.memory_space<vmem>>, vector<8x8x8xf32>
    %100 = vector.shape_cast %99 : vector<8x8x8xf32> to vector<64x8xf32>
    %c0_126 = arith.constant 0 : index
    %c8_127 = arith.constant 8 : index
    %101 = vector.load %arg7[%c0_126, %c8_127] : memref<64x128xf32, #tpu.memory_space<vmem>>, vector<64x8xf32>
    tpu.vector_store %arg7[%c0_126, %c8_127], %100 {strides = array<i32>} : memref<64x128xf32, #tpu.memory_space<vmem>>, vector<64x8xf32>,
    %c0_128 = arith.constant 0 : index
    %c2_129 = arith.constant 2 : index
    %c0_130 = arith.constant 0 : index
    %102 = vector.load %arg5[%c0_128, %c2_129, %c0_130] : memref<10x10x16xf32, #tpu.memory_space<vmem>>, vector<8x8x8xf32>
    %103 = vector.shape_cast %102 : vector<8x8x8xf32> to vector<64x8xf32>
    %c0_131 = arith.constant 0 : index
    %c16_132 = arith.constant 16 : index
    %104 = vector.load %arg7[%c0_131, %c16_132] : memref<64x128xf32, #tpu.memory_space<vmem>>, vector<64x8xf32>
    tpu.vector_store %arg7[%c0_131, %c16_132], %103 {strides = array<i32>} : memref<64x128xf32, #tpu.memory_space<vmem>>, vector<64x8xf32>,
    %c1_133 = arith.constant 1 : index
    %c0_134 = arith.constant 0 : index
    %c0_135 = arith.constant 0 : index
    %105 = vector.load %arg5[%c1_133, %c0_134, %c0_135] : memref<10x10x16xf32, #tpu.memory_space<vmem>>, vector<8x8x8xf32>
    %106 = vector.shape_cast %105 : vector<8x8x8xf32> to vector<64x8xf32>
    %c0_136 = arith.constant 0 : index
    %c24_137 = arith.constant 24 : index
    %107 = vector.load %arg7[%c0_136, %c24_137] : memref<64x128xf32, #tpu.memory_space<vmem>>, vector<64x8xf32>
    tpu.vector_store %arg7[%c0_136, %c24_137], %106 {strides = array<i32>} : memref<64x128xf32, #tpu.memory_space<vmem>>, vector<64x8xf32>,
    %c1_138 = arith.constant 1 : index
    %c1_139 = arith.constant 1 : index
    %c0_140 = arith.constant 0 : index
    %108 = vector.load %arg5[%c1_138, %c1_139, %c0_140] : memref<10x10x16xf32, #tpu.memory_space<vmem>>, vector<8x8x8xf32>
    %109 = vector.shape_cast %108 : vector<8x8x8xf32> to vector<64x8xf32>
    %c0_141 = arith.constant 0 : index
    %c32_142 = arith.constant 32 : index
    %110 = vector.load %arg7[%c0_141, %c32_142] : memref<64x128xf32, #tpu.memory_space<vmem>>, vector<64x8xf32>
    tpu.vector_store %arg7[%c0_141, %c32_142], %109 {strides = array<i32>} : memref<64x128xf32, #tpu.memory_space<vmem>>, vector<64x8xf32>,
    %c1_143 = arith.constant 1 : index
    %c2_144 = arith.constant 2 : index
    %c0_145 = arith.constant 0 : index
    %111 = vector.load %arg5[%c1_143, %c2_144, %c0_145] : memref<10x10x16xf32, #tpu.memory_space<vmem>>, vector<8x8x8xf32>
    %112 = vector.shape_cast %111 : vector<8x8x8xf32> to vector<64x8xf32>
    %c0_146 = arith.constant 0 : index
    %c40_147 = arith.constant 40 : index
    %113 = vector.load %arg7[%c0_146, %c40_147] : memref<64x128xf32, #tpu.memory_space<vmem>>, vector<64x8xf32>
    tpu.vector_store %arg7[%c0_146, %c40_147], %112 {strides = array<i32>} : memref<64x128xf32, #tpu.memory_space<vmem>>, vector<64x8xf32>,
    %c2_148 = arith.constant 2 : index
    %c0_149 = arith.constant 0 : index
    %c0_150 = arith.constant 0 : index
    %114 = vector.load %arg5[%c2_148, %c0_149, %c0_150] : memref<10x10x16xf32, #tpu.memory_space<vmem>>, vector<8x8x8xf32>
    %115 = vector.shape_cast %114 : vector<8x8x8xf32> to vector<64x8xf32>
    %c0_151 = arith.constant 0 : index
    %c48_152 = arith.constant 48 : index
    %116 = vector.load %arg7[%c0_151, %c48_152] : memref<64x128xf32, #tpu.memory_space<vmem>>, vector<64x8xf32>
    tpu.vector_store %arg7[%c0_151, %c48_152], %115 {strides = array<i32>} : memref<64x128xf32, #tpu.memory_space<vmem>>, vector<64x8xf32>,
    %c2_153 = arith.constant 2 : index
    %c1_154 = arith.constant 1 : index
    %c0_155 = arith.constant 0 : index
    %117 = vector.load %arg5[%c2_153, %c1_154, %c0_155] : memref<10x10x16xf32, #tpu.memory_space<vmem>>, vector<8x8x8xf32>
    %118 = vector.shape_cast %117 : vector<8x8x8xf32> to vector<64x8xf32>
    %c0_156 = arith.constant 0 : index
    %c56_157 = arith.constant 56 : index
    %119 = vector.load %arg7[%c0_156, %c56_157] : memref<64x128xf32, #tpu.memory_space<vmem>>, vector<64x8xf32>
    tpu.vector_store %arg7[%c0_156, %c56_157], %118 {strides = array<i32>} : memref<64x128xf32, #tpu.memory_space<vmem>>, vector<64x8xf32>,
    %c2_158 = arith.constant 2 : index
    %c2_159 = arith.constant 2 : index
    %c0_160 = arith.constant 0 : index
    %120 = vector.load %arg5[%c2_158, %c2_159, %c0_160] : memref<10x10x16xf32, #tpu.memory_space<vmem>>, vector<8x8x8xf32>
    %121 = vector.shape_cast %120 : vector<8x8x8xf32> to vector<64x8xf32>
    %c0_161 = arith.constant 0 : index
    %c64_162 = arith.constant 64 : index
    %122 = vector.load %arg7[%c0_161, %c64_162] : memref<64x128xf32, #tpu.memory_space<vmem>>, vector<64x8xf32>
    tpu.vector_store %arg7[%c0_161, %c64_162], %121 {strides = array<i32>} : memref<64x128xf32, #tpu.memory_space<vmem>>, vector<64x8xf32>,
    %c0_163 = arith.constant 0 : index
    %c0_164 = arith.constant 0 : index
    %123 = vector.load %arg7[%c0_163, %c0_164] : memref<64x128xf32, #tpu.memory_space<vmem>>, vector<64x72xf32>
    %124 = arith.truncf %123 : vector<64x72xf32> to vector<64x72xbf16>
    %c2_165 = arith.constant 2 : index
    %c0_166 = arith.constant 0 : index
    %c0_167 = arith.constant 0 : index
    %125 = vector.load %arg2[%c2_165, %c0_166, %c0_167] : memref<7x128x16xf32, #tpu.memory_space<vmem>>, vector<1x72x2xf32>
    %126 = vector.shape_cast %125 : vector<1x72x2xf32> to vector<72x2xf32>
    %127 = arith.truncf %126 : vector<72x2xf32> to vector<72x2xbf16>
    %cst_168 = arith.constant dense<0.000000e+00> : vector<64x2xf32>
    %128 = tpu.matmul %124, %127, %cst_168 {dimension_numbers = #tpu.dot_dimension_numbers<[1], [0], [0], [1], [0, 0, 1, 1], [], []>} : vector<64x72xbf16>, vector<72x2xbf16>, vector<64x2xf32> -> vector<64x2xf32>
    %c2_169 = arith.constant 2 : index
    %c0_170 = arith.constant 0 : index
    %129 = vector.load %arg3[%c2_169, %c0_170] : memref<15x16xf32, #tpu.memory_space<vmem>>, vector<1x2xf32>
    %130 = vector.broadcast %129 : vector<1x2xf32> to vector<64x2xf32>
    %131 = arith.addf %128, %130 : vector<64x2xf32>
    %c0_171 = arith.constant 0 : index
    %c8_172 = arith.constant 8 : index
    %132 = vector.load %arg6[%c0_171, %c8_172] : memref<64x16xf32, #tpu.memory_space<vmem>>, vector<64x2xf32>
    tpu.vector_store %arg6[%c0_171, %c8_172], %131 {strides = array<i32>} : memref<64x16xf32, #tpu.memory_space<vmem>>, vector<64x2xf32>,
    %c8_173 = arith.constant 8 : index
    %c0_174 = arith.constant 0 : index
    %133 = vector.load %arg3[%c8_173, %c0_174] : memref<15x16xf32, #tpu.memory_space<vmem>>, vector<1x10xf32>
    %c12_175 = arith.constant 12 : index
    %c0_176 = arith.constant 0 : index
    %134 = vector.load %arg3[%c12_175, %c0_176] : memref<15x16xf32, #tpu.memory_space<vmem>>, vector<1x10xf32>
    %c0_177 = arith.constant 0 : index
    %c0_178 = arith.constant 0 : index
    %135 = vector.load %arg6[%c0_177, %c0_178] : memref<64x16xf32, #tpu.memory_space<vmem>>, vector<64x10xf32>
    %136 = vector.broadcast %133 : vector<1x10xf32> to vector<64x10xf32>
    %137 = arith.mulf %135, %136 : vector<64x10xf32>
    %138 = vector.broadcast %134 : vector<1x10xf32> to vector<64x10xf32>
    %139 = arith.addf %137, %138 : vector<64x10xf32>
    %cst_179 = arith.constant 0.000000e+00 : f32
    %140 = vector.broadcast %cst_179 : f32 to vector<64x10xf32>
    %141 = arith.maximumf %139, %140 : vector<64x10xf32>
    %142 = vector.shape_cast %141 : vector<64x10xf32> to vector<8x8x10xf32>
    %c1_180 = arith.constant 1 : index
    %c1_181 = arith.constant 1 : index
    %c0_182 = arith.constant 0 : index
    %143 = vector.load %arg5[%c1_180, %c1_181, %c0_182] : memref<10x10x16xf32, #tpu.memory_space<vmem>>, vector<8x8x10xf32>
    tpu.vector_store %arg5[%c1_180, %c1_181, %c0_182], %142 {strides = array<i32>} : memref<10x10x16xf32, #tpu.memory_space<vmem>>, vector<8x8x10xf32>,
    %c0_183 = arith.constant 0 : index
    %c0_184 = arith.constant 0 : index
    %c0_185 = arith.constant 0 : index
    %144 = vector.load %arg5[%c0_183, %c0_184, %c0_185] : memref<10x10x16xf32, #tpu.memory_space<vmem>>, vector<8x8x10xf32>
    %145 = vector.shape_cast %144 : vector<8x8x10xf32> to vector<64x10xf32>
    %c0_186 = arith.constant 0 : index
    %c0_187 = arith.constant 0 : index
    %146 = vector.load %arg7[%c0_186, %c0_187] : memref<64x128xf32, #tpu.memory_space<vmem>>, vector<64x10xf32>
    tpu.vector_store %arg7[%c0_186, %c0_187], %145 {strides = array<i32>} : memref<64x128xf32, #tpu.memory_space<vmem>>, vector<64x10xf32>,
    %c0_188 = arith.constant 0 : index
    %c1_189 = arith.constant 1 : index
    %c0_190 = arith.constant 0 : index
    %147 = vector.load %arg5[%c0_188, %c1_189, %c0_190] : memref<10x10x16xf32, #tpu.memory_space<vmem>>, vector<8x8x10xf32>
    %148 = vector.shape_cast %147 : vector<8x8x10xf32> to vector<64x10xf32>
    %c0_191 = arith.constant 0 : index
    %c10 = arith.constant 10 : index
    %149 = vector.load %arg7[%c0_191, %c10] : memref<64x128xf32, #tpu.memory_space<vmem>>, vector<64x10xf32>
    tpu.vector_store %arg7[%c0_191, %c10], %148 {strides = array<i32>} : memref<64x128xf32, #tpu.memory_space<vmem>>, vector<64x10xf32>,
    %c0_192 = arith.constant 0 : index
    %c2_193 = arith.constant 2 : index
    %c0_194 = arith.constant 0 : index
    %150 = vector.load %arg5[%c0_192, %c2_193, %c0_194] : memref<10x10x16xf32, #tpu.memory_space<vmem>>, vector<8x8x10xf32>
    %151 = vector.shape_cast %150 : vector<8x8x10xf32> to vector<64x10xf32>
    %c0_195 = arith.constant 0 : index
    %c20_196 = arith.constant 20 : index
    %152 = vector.load %arg7[%c0_195, %c20_196] : memref<64x128xf32, #tpu.memory_space<vmem>>, vector<64x10xf32>
    tpu.vector_store %arg7[%c0_195, %c20_196], %151 {strides = array<i32>} : memref<64x128xf32, #tpu.memory_space<vmem>>, vector<64x10xf32>,
    %c1_197 = arith.constant 1 : index
    %c0_198 = arith.constant 0 : index
    %c0_199 = arith.constant 0 : index
    %153 = vector.load %arg5[%c1_197, %c0_198, %c0_199] : memref<10x10x16xf32, #tpu.memory_space<vmem>>, vector<8x8x10xf32>
    %154 = vector.shape_cast %153 : vector<8x8x10xf32> to vector<64x10xf32>
    %c0_200 = arith.constant 0 : index
    %c30 = arith.constant 30 : index
    %155 = vector.load %arg7[%c0_200, %c30] : memref<64x128xf32, #tpu.memory_space<vmem>>, vector<64x10xf32>
    tpu.vector_store %arg7[%c0_200, %c30], %154 {strides = array<i32>} : memref<64x128xf32, #tpu.memory_space<vmem>>, vector<64x10xf32>,
    %c1_201 = arith.constant 1 : index
    %c1_202 = arith.constant 1 : index
    %c0_203 = arith.constant 0 : index
    %156 = vector.load %arg5[%c1_201, %c1_202, %c0_203] : memref<10x10x16xf32, #tpu.memory_space<vmem>>, vector<8x8x10xf32>
    %157 = vector.shape_cast %156 : vector<8x8x10xf32> to vector<64x10xf32>
    %c0_204 = arith.constant 0 : index
    %c40_205 = arith.constant 40 : index
    %158 = vector.load %arg7[%c0_204, %c40_205] : memref<64x128xf32, #tpu.memory_space<vmem>>, vector<64x10xf32>
    tpu.vector_store %arg7[%c0_204, %c40_205], %157 {strides = array<i32>} : memref<64x128xf32, #tpu.memory_space<vmem>>, vector<64x10xf32>,
    %c1_206 = arith.constant 1 : index
    %c2_207 = arith.constant 2 : index
    %c0_208 = arith.constant 0 : index
    %159 = vector.load %arg5[%c1_206, %c2_207, %c0_208] : memref<10x10x16xf32, #tpu.memory_space<vmem>>, vector<8x8x10xf32>
    %160 = vector.shape_cast %159 : vector<8x8x10xf32> to vector<64x10xf32>
    %c0_209 = arith.constant 0 : index
    %c50 = arith.constant 50 : index
    %161 = vector.load %arg7[%c0_209, %c50] : memref<64x128xf32, #tpu.memory_space<vmem>>, vector<64x10xf32>
    tpu.vector_store %arg7[%c0_209, %c50], %160 {strides = array<i32>} : memref<64x128xf32, #tpu.memory_space<vmem>>, vector<64x10xf32>,
    %c2_210 = arith.constant 2 : index
    %c0_211 = arith.constant 0 : index
    %c0_212 = arith.constant 0 : index
    %162 = vector.load %arg5[%c2_210, %c0_211, %c0_212] : memref<10x10x16xf32, #tpu.memory_space<vmem>>, vector<8x8x10xf32>
    %163 = vector.shape_cast %162 : vector<8x8x10xf32> to vector<64x10xf32>
    %c0_213 = arith.constant 0 : index
    %c60 = arith.constant 60 : index
    %164 = vector.load %arg7[%c0_213, %c60] : memref<64x128xf32, #tpu.memory_space<vmem>>, vector<64x10xf32>
    tpu.vector_store %arg7[%c0_213, %c60], %163 {strides = array<i32>} : memref<64x128xf32, #tpu.memory_space<vmem>>, vector<64x10xf32>,
    %c2_214 = arith.constant 2 : index
    %c1_215 = arith.constant 1 : index
    %c0_216 = arith.constant 0 : index
    %165 = vector.load %arg5[%c2_214, %c1_215, %c0_216] : memref<10x10x16xf32, #tpu.memory_space<vmem>>, vector<8x8x10xf32>
    %166 = vector.shape_cast %165 : vector<8x8x10xf32> to vector<64x10xf32>
    %c0_217 = arith.constant 0 : index
    %c70 = arith.constant 70 : index
    %167 = vector.load %arg7[%c0_217, %c70] : memref<64x128xf32, #tpu.memory_space<vmem>>, vector<64x10xf32>
    tpu.vector_store %arg7[%c0_217, %c70], %166 {strides = array<i32>} : memref<64x128xf32, #tpu.memory_space<vmem>>, vector<64x10xf32>,
    %c2_218 = arith.constant 2 : index
    %c2_219 = arith.constant 2 : index
    %c0_220 = arith.constant 0 : index
    %168 = vector.load %arg5[%c2_218, %c2_219, %c0_220] : memref<10x10x16xf32, #tpu.memory_space<vmem>>, vector<8x8x10xf32>
    %169 = vector.shape_cast %168 : vector<8x8x10xf32> to vector<64x10xf32>
    %c0_221 = arith.constant 0 : index
    %c80 = arith.constant 80 : index
    %170 = vector.load %arg7[%c0_221, %c80] : memref<64x128xf32, #tpu.memory_space<vmem>>, vector<64x10xf32>
    tpu.vector_store %arg7[%c0_221, %c80], %169 {strides = array<i32>} : memref<64x128xf32, #tpu.memory_space<vmem>>, vector<64x10xf32>,
    %c0_222 = arith.constant 0 : index
    %c0_223 = arith.constant 0 : index
    %171 = vector.load %arg7[%c0_222, %c0_223] : memref<64x128xf32, #tpu.memory_space<vmem>>, vector<64x90xf32>
    %172 = arith.truncf %171 : vector<64x90xf32> to vector<64x90xbf16>
    %c3 = arith.constant 3 : index
    %c0_224 = arith.constant 0 : index
    %c0_225 = arith.constant 0 : index
    %173 = vector.load %arg2[%c3, %c0_224, %c0_225] : memref<7x128x16xf32, #tpu.memory_space<vmem>>, vector<1x90x2xf32>
    %174 = vector.shape_cast %173 : vector<1x90x2xf32> to vector<90x2xf32>
    %175 = arith.truncf %174 : vector<90x2xf32> to vector<90x2xbf16>
    %cst_226 = arith.constant dense<0.000000e+00> : vector<64x2xf32>
    %176 = tpu.matmul %172, %175, %cst_226 {dimension_numbers = #tpu.dot_dimension_numbers<[1], [0], [0], [1], [0, 0, 1, 1], [], []>} : vector<64x90xbf16>, vector<90x2xbf16>, vector<64x2xf32> -> vector<64x2xf32>
    %c3_227 = arith.constant 3 : index
    %c0_228 = arith.constant 0 : index
    %177 = vector.load %arg3[%c3_227, %c0_228] : memref<15x16xf32, #tpu.memory_space<vmem>>, vector<1x2xf32>
    %178 = vector.broadcast %177 : vector<1x2xf32> to vector<64x2xf32>
    %179 = arith.addf %176, %178 : vector<64x2xf32>
    %c0_229 = arith.constant 0 : index
    %c10_230 = arith.constant 10 : index
    %180 = vector.load %arg6[%c0_229, %c10_230] : memref<64x16xf32, #tpu.memory_space<vmem>>, vector<64x2xf32>
    tpu.vector_store %arg6[%c0_229, %c10_230], %179 {strides = array<i32>} : memref<64x16xf32, #tpu.memory_space<vmem>>, vector<64x2xf32>,
    %c9 = arith.constant 9 : index
    %c0_231 = arith.constant 0 : index
    %181 = vector.load %arg3[%c9, %c0_231] : memref<15x16xf32, #tpu.memory_space<vmem>>, vector<1x12xf32>
    %c13 = arith.constant 13 : index
    %c0_232 = arith.constant 0 : index
    %182 = vector.load %arg3[%c13, %c0_232] : memref<15x16xf32, #tpu.memory_space<vmem>>, vector<1x12xf32>
    %c0_233 = arith.constant 0 : index
    %c0_234 = arith.constant 0 : index
    %183 = vector.load %arg6[%c0_233, %c0_234] : memref<64x16xf32, #tpu.memory_space<vmem>>, vector<64x12xf32>
    %184 = vector.broadcast %181 : vector<1x12xf32> to vector<64x12xf32>
    %185 = arith.mulf %183, %184 : vector<64x12xf32>
    %186 = vector.broadcast %182 : vector<1x12xf32> to vector<64x12xf32>
    %187 = arith.addf %185, %186 : vector<64x12xf32>
    %cst_235 = arith.constant 0.000000e+00 : f32
    %188 = vector.broadcast %cst_235 : f32 to vector<64x12xf32>
    %189 = arith.maximumf %187, %188 : vector<64x12xf32>
    %190 = vector.shape_cast %189 : vector<64x12xf32> to vector<8x8x12xf32>
    %c1_236 = arith.constant 1 : index
    %c1_237 = arith.constant 1 : index
    %c0_238 = arith.constant 0 : index
    %191 = vector.load %arg5[%c1_236, %c1_237, %c0_238] : memref<10x10x16xf32, #tpu.memory_space<vmem>>, vector<8x8x12xf32>
    tpu.vector_store %arg5[%c1_236, %c1_237, %c0_238], %190 {strides = array<i32>} : memref<10x10x16xf32, #tpu.memory_space<vmem>>, vector<8x8x12xf32>,
    %c0_239 = arith.constant 0 : index
    %c0_240 = arith.constant 0 : index
    %c0_241 = arith.constant 0 : index
    %192 = vector.load %arg5[%c0_239, %c0_240, %c0_241] : memref<10x10x16xf32, #tpu.memory_space<vmem>>, vector<8x8x12xf32>
    %193 = vector.shape_cast %192 : vector<8x8x12xf32> to vector<64x12xf32>
    %c0_242 = arith.constant 0 : index
    %c0_243 = arith.constant 0 : index
    %194 = vector.load %arg7[%c0_242, %c0_243] : memref<64x128xf32, #tpu.memory_space<vmem>>, vector<64x12xf32>
    tpu.vector_store %arg7[%c0_242, %c0_243], %193 {strides = array<i32>} : memref<64x128xf32, #tpu.memory_space<vmem>>, vector<64x12xf32>,
    %c0_244 = arith.constant 0 : index
    %c1_245 = arith.constant 1 : index
    %c0_246 = arith.constant 0 : index
    %195 = vector.load %arg5[%c0_244, %c1_245, %c0_246] : memref<10x10x16xf32, #tpu.memory_space<vmem>>, vector<8x8x12xf32>
    %196 = vector.shape_cast %195 : vector<8x8x12xf32> to vector<64x12xf32>
    %c0_247 = arith.constant 0 : index
    %c12_248 = arith.constant 12 : index
    %197 = vector.load %arg7[%c0_247, %c12_248] : memref<64x128xf32, #tpu.memory_space<vmem>>, vector<64x12xf32>
    tpu.vector_store %arg7[%c0_247, %c12_248], %196 {strides = array<i32>} : memref<64x128xf32, #tpu.memory_space<vmem>>, vector<64x12xf32>,
    %c0_249 = arith.constant 0 : index
    %c2_250 = arith.constant 2 : index
    %c0_251 = arith.constant 0 : index
    %198 = vector.load %arg5[%c0_249, %c2_250, %c0_251] : memref<10x10x16xf32, #tpu.memory_space<vmem>>, vector<8x8x12xf32>
    %199 = vector.shape_cast %198 : vector<8x8x12xf32> to vector<64x12xf32>
    %c0_252 = arith.constant 0 : index
    %c24_253 = arith.constant 24 : index
    %200 = vector.load %arg7[%c0_252, %c24_253] : memref<64x128xf32, #tpu.memory_space<vmem>>, vector<64x12xf32>
    tpu.vector_store %arg7[%c0_252, %c24_253], %199 {strides = array<i32>} : memref<64x128xf32, #tpu.memory_space<vmem>>, vector<64x12xf32>,
    %c1_254 = arith.constant 1 : index
    %c0_255 = arith.constant 0 : index
    %c0_256 = arith.constant 0 : index
    %201 = vector.load %arg5[%c1_254, %c0_255, %c0_256] : memref<10x10x16xf32, #tpu.memory_space<vmem>>, vector<8x8x12xf32>
    %202 = vector.shape_cast %201 : vector<8x8x12xf32> to vector<64x12xf32>
    %c0_257 = arith.constant 0 : index
    %c36 = arith.constant 36 : index
    %203 = vector.load %arg7[%c0_257, %c36] : memref<64x128xf32, #tpu.memory_space<vmem>>, vector<64x12xf32>
    tpu.vector_store %arg7[%c0_257, %c36], %202 {strides = array<i32>} : memref<64x128xf32, #tpu.memory_space<vmem>>, vector<64x12xf32>,
    %c1_258 = arith.constant 1 : index
    %c1_259 = arith.constant 1 : index
    %c0_260 = arith.constant 0 : index
    %204 = vector.load %arg5[%c1_258, %c1_259, %c0_260] : memref<10x10x16xf32, #tpu.memory_space<vmem>>, vector<8x8x12xf32>
    %205 = vector.shape_cast %204 : vector<8x8x12xf32> to vector<64x12xf32>
    %c0_261 = arith.constant 0 : index
    %c48_262 = arith.constant 48 : index
    %206 = vector.load %arg7[%c0_261, %c48_262] : memref<64x128xf32, #tpu.memory_space<vmem>>, vector<64x12xf32>
    tpu.vector_store %arg7[%c0_261, %c48_262], %205 {strides = array<i32>} : memref<64x128xf32, #tpu.memory_space<vmem>>, vector<64x12xf32>,
    %c1_263 = arith.constant 1 : index
    %c2_264 = arith.constant 2 : index
    %c0_265 = arith.constant 0 : index
    %207 = vector.load %arg5[%c1_263, %c2_264, %c0_265] : memref<10x10x16xf32, #tpu.memory_space<vmem>>, vector<8x8x12xf32>
    %208 = vector.shape_cast %207 : vector<8x8x12xf32> to vector<64x12xf32>
    %c0_266 = arith.constant 0 : index
    %c60_267 = arith.constant 60 : index
    %209 = vector.load %arg7[%c0_266, %c60_267] : memref<64x128xf32, #tpu.memory_space<vmem>>, vector<64x12xf32>
    tpu.vector_store %arg7[%c0_266, %c60_267], %208 {strides = array<i32>} : memref<64x128xf32, #tpu.memory_space<vmem>>, vector<64x12xf32>,
    %c2_268 = arith.constant 2 : index
    %c0_269 = arith.constant 0 : index
    %c0_270 = arith.constant 0 : index
    %210 = vector.load %arg5[%c2_268, %c0_269, %c0_270] : memref<10x10x16xf32, #tpu.memory_space<vmem>>, vector<8x8x12xf32>
    %211 = vector.shape_cast %210 : vector<8x8x12xf32> to vector<64x12xf32>
    %c0_271 = arith.constant 0 : index
    %c72 = arith.constant 72 : index
    %212 = vector.load %arg7[%c0_271, %c72] : memref<64x128xf32, #tpu.memory_space<vmem>>, vector<64x12xf32>
    tpu.vector_store %arg7[%c0_271, %c72], %211 {strides = array<i32>} : memref<64x128xf32, #tpu.memory_space<vmem>>, vector<64x12xf32>,
    %c2_272 = arith.constant 2 : index
    %c1_273 = arith.constant 1 : index
    %c0_274 = arith.constant 0 : index
    %213 = vector.load %arg5[%c2_272, %c1_273, %c0_274] : memref<10x10x16xf32, #tpu.memory_space<vmem>>, vector<8x8x12xf32>
    %214 = vector.shape_cast %213 : vector<8x8x12xf32> to vector<64x12xf32>
    %c0_275 = arith.constant 0 : index
    %c84 = arith.constant 84 : index
    %215 = vector.load %arg7[%c0_275, %c84] : memref<64x128xf32, #tpu.memory_space<vmem>>, vector<64x12xf32>
    tpu.vector_store %arg7[%c0_275, %c84], %214 {strides = array<i32>} : memref<64x128xf32, #tpu.memory_space<vmem>>, vector<64x12xf32>,
    %c2_276 = arith.constant 2 : index
    %c2_277 = arith.constant 2 : index
    %c0_278 = arith.constant 0 : index
    %216 = vector.load %arg5[%c2_276, %c2_277, %c0_278] : memref<10x10x16xf32, #tpu.memory_space<vmem>>, vector<8x8x12xf32>
    %217 = vector.shape_cast %216 : vector<8x8x12xf32> to vector<64x12xf32>
    %c0_279 = arith.constant 0 : index
    %c96 = arith.constant 96 : index
    %218 = vector.load %arg7[%c0_279, %c96] : memref<64x128xf32, #tpu.memory_space<vmem>>, vector<64x12xf32>
    tpu.vector_store %arg7[%c0_279, %c96], %217 {strides = array<i32>} : memref<64x128xf32, #tpu.memory_space<vmem>>, vector<64x12xf32>,
    %c0_280 = arith.constant 0 : index
    %c0_281 = arith.constant 0 : index
    %219 = vector.load %arg7[%c0_280, %c0_281] : memref<64x128xf32, #tpu.memory_space<vmem>>, vector<64x108xf32>
    %220 = arith.truncf %219 : vector<64x108xf32> to vector<64x108xbf16>
    %c4_282 = arith.constant 4 : index
    %c0_283 = arith.constant 0 : index
    %c0_284 = arith.constant 0 : index
    %221 = vector.load %arg2[%c4_282, %c0_283, %c0_284] : memref<7x128x16xf32, #tpu.memory_space<vmem>>, vector<1x108x2xf32>
    %222 = vector.shape_cast %221 : vector<1x108x2xf32> to vector<108x2xf32>
    %223 = arith.truncf %222 : vector<108x2xf32> to vector<108x2xbf16>
    %cst_285 = arith.constant dense<0.000000e+00> : vector<64x2xf32>
    %224 = tpu.matmul %220, %223, %cst_285 {dimension_numbers = #tpu.dot_dimension_numbers<[1], [0], [0], [1], [0, 0, 1, 1], [], []>} : vector<64x108xbf16>, vector<108x2xbf16>, vector<64x2xf32> -> vector<64x2xf32>
    %c4_286 = arith.constant 4 : index
    %c0_287 = arith.constant 0 : index
    %225 = vector.load %arg3[%c4_286, %c0_287] : memref<15x16xf32, #tpu.memory_space<vmem>>, vector<1x2xf32>
    %226 = vector.broadcast %225 : vector<1x2xf32> to vector<64x2xf32>
    %227 = arith.addf %224, %226 : vector<64x2xf32>
    %c0_288 = arith.constant 0 : index
    %c12_289 = arith.constant 12 : index
    %228 = vector.load %arg6[%c0_288, %c12_289] : memref<64x16xf32, #tpu.memory_space<vmem>>, vector<64x2xf32>
    tpu.vector_store %arg6[%c0_288, %c12_289], %227 {strides = array<i32>} : memref<64x16xf32, #tpu.memory_space<vmem>>, vector<64x2xf32>,
    %c10_290 = arith.constant 10 : index
    %c0_291 = arith.constant 0 : index
    %229 = vector.load %arg3[%c10_290, %c0_291] : memref<15x16xf32, #tpu.memory_space<vmem>>, vector<1x14xf32>
    %c14 = arith.constant 14 : index
    %c0_292 = arith.constant 0 : index
    %230 = vector.load %arg3[%c14, %c0_292] : memref<15x16xf32, #tpu.memory_space<vmem>>, vector<1x14xf32>
    %c0_293 = arith.constant 0 : index
    %c0_294 = arith.constant 0 : index
    %231 = vector.load %arg6[%c0_293, %c0_294] : memref<64x16xf32, #tpu.memory_space<vmem>>, vector<64x14xf32>
    %232 = vector.broadcast %229 : vector<1x14xf32> to vector<64x14xf32>
    %233 = arith.mulf %231, %232 : vector<64x14xf32>
    %234 = vector.broadcast %230 : vector<1x14xf32> to vector<64x14xf32>
    %235 = arith.addf %233, %234 : vector<64x14xf32>
    %cst_295 = arith.constant 0.000000e+00 : f32
    %236 = vector.broadcast %cst_295 : f32 to vector<64x14xf32>
    %237 = arith.maximumf %235, %236 : vector<64x14xf32>
    %238 = vector.shape_cast %237 : vector<64x14xf32> to vector<8x8x14xf32>
    %c1_296 = arith.constant 1 : index
    %c1_297 = arith.constant 1 : index
    %c0_298 = arith.constant 0 : index
    %239 = vector.load %arg5[%c1_296, %c1_297, %c0_298] : memref<10x10x16xf32, #tpu.memory_space<vmem>>, vector<8x8x14xf32>
    tpu.vector_store %arg5[%c1_296, %c1_297, %c0_298], %238 {strides = array<i32>} : memref<10x10x16xf32, #tpu.memory_space<vmem>>, vector<8x8x14xf32>,
    %c0_299 = arith.constant 0 : index
    %c0_300 = arith.constant 0 : index
    %c0_301 = arith.constant 0 : index
    %240 = vector.load %arg5[%c0_299, %c0_300, %c0_301] : memref<10x10x16xf32, #tpu.memory_space<vmem>>, vector<8x8x14xf32>
    %241 = vector.shape_cast %240 : vector<8x8x14xf32> to vector<64x14xf32>
    %c0_302 = arith.constant 0 : index
    %c0_303 = arith.constant 0 : index
    %242 = vector.load %arg7[%c0_302, %c0_303] : memref<64x128xf32, #tpu.memory_space<vmem>>, vector<64x14xf32>
    tpu.vector_store %arg7[%c0_302, %c0_303], %241 {strides = array<i32>} : memref<64x128xf32, #tpu.memory_space<vmem>>, vector<64x14xf32>,
    %c0_304 = arith.constant 0 : index
    %c1_305 = arith.constant 1 : index
    %c0_306 = arith.constant 0 : index
    %243 = vector.load %arg5[%c0_304, %c1_305, %c0_306] : memref<10x10x16xf32, #tpu.memory_space<vmem>>, vector<8x8x14xf32>
    %244 = vector.shape_cast %243 : vector<8x8x14xf32> to vector<64x14xf32>
    %c0_307 = arith.constant 0 : index
    %c14_308 = arith.constant 14 : index
    %245 = vector.load %arg7[%c0_307, %c14_308] : memref<64x128xf32, #tpu.memory_space<vmem>>, vector<64x14xf32>
    tpu.vector_store %arg7[%c0_307, %c14_308], %244 {strides = array<i32>} : memref<64x128xf32, #tpu.memory_space<vmem>>, vector<64x14xf32>,
    %c0_309 = arith.constant 0 : index
    %c2_310 = arith.constant 2 : index
    %c0_311 = arith.constant 0 : index
    %246 = vector.load %arg5[%c0_309, %c2_310, %c0_311] : memref<10x10x16xf32, #tpu.memory_space<vmem>>, vector<8x8x14xf32>
    %247 = vector.shape_cast %246 : vector<8x8x14xf32> to vector<64x14xf32>
    %c0_312 = arith.constant 0 : index
    %c28_313 = arith.constant 28 : index
    %248 = vector.load %arg7[%c0_312, %c28_313] : memref<64x128xf32, #tpu.memory_space<vmem>>, vector<64x14xf32>
    tpu.vector_store %arg7[%c0_312, %c28_313], %247 {strides = array<i32>} : memref<64x128xf32, #tpu.memory_space<vmem>>, vector<64x14xf32>,
    %c1_314 = arith.constant 1 : index
    %c0_315 = arith.constant 0 : index
    %c0_316 = arith.constant 0 : index
    %249 = vector.load %arg5[%c1_314, %c0_315, %c0_316] : memref<10x10x16xf32, #tpu.memory_space<vmem>>, vector<8x8x14xf32>
    %250 = vector.shape_cast %249 : vector<8x8x14xf32> to vector<64x14xf32>
    %c0_317 = arith.constant 0 : index
    %c42 = arith.constant 42 : index
    %251 = vector.load %arg7[%c0_317, %c42] : memref<64x128xf32, #tpu.memory_space<vmem>>, vector<64x14xf32>
    tpu.vector_store %arg7[%c0_317, %c42], %250 {strides = array<i32>} : memref<64x128xf32, #tpu.memory_space<vmem>>, vector<64x14xf32>,
    %c1_318 = arith.constant 1 : index
    %c1_319 = arith.constant 1 : index
    %c0_320 = arith.constant 0 : index
    %252 = vector.load %arg5[%c1_318, %c1_319, %c0_320] : memref<10x10x16xf32, #tpu.memory_space<vmem>>, vector<8x8x14xf32>
    %253 = vector.shape_cast %252 : vector<8x8x14xf32> to vector<64x14xf32>
    %c0_321 = arith.constant 0 : index
    %c56_322 = arith.constant 56 : index
    %254 = vector.load %arg7[%c0_321, %c56_322] : memref<64x128xf32, #tpu.memory_space<vmem>>, vector<64x14xf32>
    tpu.vector_store %arg7[%c0_321, %c56_322], %253 {strides = array<i32>} : memref<64x128xf32, #tpu.memory_space<vmem>>, vector<64x14xf32>,
    %c1_323 = arith.constant 1 : index
    %c2_324 = arith.constant 2 : index
    %c0_325 = arith.constant 0 : index
    %255 = vector.load %arg5[%c1_323, %c2_324, %c0_325] : memref<10x10x16xf32, #tpu.memory_space<vmem>>, vector<8x8x14xf32>
    %256 = vector.shape_cast %255 : vector<8x8x14xf32> to vector<64x14xf32>
    %c0_326 = arith.constant 0 : index
    %c70_327 = arith.constant 70 : index
    %257 = vector.load %arg7[%c0_326, %c70_327] : memref<64x128xf32, #tpu.memory_space<vmem>>, vector<64x14xf32>
    tpu.vector_store %arg7[%c0_326, %c70_327], %256 {strides = array<i32>} : memref<64x128xf32, #tpu.memory_space<vmem>>, vector<64x14xf32>,
    %c2_328 = arith.constant 2 : index
    %c0_329 = arith.constant 0 : index
    %c0_330 = arith.constant 0 : index
    %258 = vector.load %arg5[%c2_328, %c0_329, %c0_330] : memref<10x10x16xf32, #tpu.memory_space<vmem>>, vector<8x8x14xf32>
    %259 = vector.shape_cast %258 : vector<8x8x14xf32> to vector<64x14xf32>
    %c0_331 = arith.constant 0 : index
    %c84_332 = arith.constant 84 : index
    %260 = vector.load %arg7[%c0_331, %c84_332] : memref<64x128xf32, #tpu.memory_space<vmem>>, vector<64x14xf32>
    tpu.vector_store %arg7[%c0_331, %c84_332], %259 {strides = array<i32>} : memref<64x128xf32, #tpu.memory_space<vmem>>, vector<64x14xf32>,
    %c2_333 = arith.constant 2 : index
    %c1_334 = arith.constant 1 : index
    %c0_335 = arith.constant 0 : index
    %261 = vector.load %arg5[%c2_333, %c1_334, %c0_335] : memref<10x10x16xf32, #tpu.memory_space<vmem>>, vector<8x8x14xf32>
    %262 = vector.shape_cast %261 : vector<8x8x14xf32> to vector<64x14xf32>
    %c0_336 = arith.constant 0 : index
    %c98 = arith.constant 98 : index
    %263 = vector.load %arg7[%c0_336, %c98] : memref<64x128xf32, #tpu.memory_space<vmem>>, vector<64x14xf32>
    tpu.vector_store %arg7[%c0_336, %c98], %262 {strides = array<i32>} : memref<64x128xf32, #tpu.memory_space<vmem>>, vector<64x14xf32>,
    %c2_337 = arith.constant 2 : index
    %c2_338 = arith.constant 2 : index
    %c0_339 = arith.constant 0 : index
    %264 = vector.load %arg5[%c2_337, %c2_338, %c0_339] : memref<10x10x16xf32, #tpu.memory_space<vmem>>, vector<8x8x14xf32>
    %265 = vector.shape_cast %264 : vector<8x8x14xf32> to vector<64x14xf32>
    %c0_340 = arith.constant 0 : index
    %c112 = arith.constant 112 : index
    %266 = vector.load %arg7[%c0_340, %c112] : memref<64x128xf32, #tpu.memory_space<vmem>>, vector<64x14xf32>
    tpu.vector_store %arg7[%c0_340, %c112], %265 {strides = array<i32>} : memref<64x128xf32, #tpu.memory_space<vmem>>, vector<64x14xf32>,
    %c0_341 = arith.constant 0 : index
    %c0_342 = arith.constant 0 : index
    %267 = vector.load %arg7[%c0_341, %c0_342] : memref<64x128xf32, #tpu.memory_space<vmem>>, vector<64x126xf32>
    %268 = arith.truncf %267 : vector<64x126xf32> to vector<64x126xbf16>
    %c5 = arith.constant 5 : index
    %c0_343 = arith.constant 0 : index
    %c0_344 = arith.constant 0 : index
    %269 = vector.load %arg2[%c5, %c0_343, %c0_344] : memref<7x128x16xf32, #tpu.memory_space<vmem>>, vector<1x126x2xf32>
    %270 = vector.shape_cast %269 : vector<1x126x2xf32> to vector<126x2xf32>
    %271 = arith.truncf %270 : vector<126x2xf32> to vector<126x2xbf16>
    %cst_345 = arith.constant dense<0.000000e+00> : vector<64x2xf32>
    %272 = tpu.matmul %268, %271, %cst_345 {dimension_numbers = #tpu.dot_dimension_numbers<[1], [0], [0], [1], [0, 0, 1, 1], [], []>} : vector<64x126xbf16>, vector<126x2xbf16>, vector<64x2xf32> -> vector<64x2xf32>
    %c5_346 = arith.constant 5 : index
    %c0_347 = arith.constant 0 : index
    %273 = vector.load %arg3[%c5_346, %c0_347] : memref<15x16xf32, #tpu.memory_space<vmem>>, vector<1x2xf32>
    %274 = vector.broadcast %273 : vector<1x2xf32> to vector<64x2xf32>
    %275 = arith.addf %272, %274 : vector<64x2xf32>
    %c0_348 = arith.constant 0 : index
    %c14_349 = arith.constant 14 : index
    %276 = vector.load %arg6[%c0_348, %c14_349] : memref<64x16xf32, #tpu.memory_space<vmem>>, vector<64x2xf32>
    tpu.vector_store %arg6[%c0_348, %c14_349], %275 {strides = array<i32>} : memref<64x16xf32, #tpu.memory_space<vmem>>, vector<64x2xf32>,
    %c0_350 = arith.constant 0 : index
    %c0_351 = arith.constant 0 : index
    %277 = vector.load %arg6[%c0_350, %c0_351] : memref<64x16xf32, #tpu.memory_space<vmem>>, vector<64x16xf32>
    %278 = arith.truncf %277 : vector<64x16xf32> to vector<64x16xbf16>
    %c6 = arith.constant 6 : index
    %c0_352 = arith.constant 0 : index
    %c0_353 = arith.constant 0 : index
    %279 = vector.load %arg2[%c6, %c0_352, %c0_353] : memref<7x128x16xf32, #tpu.memory_space<vmem>>, vector<1x16x16xf32>
    %280 = vector.shape_cast %279 : vector<1x16x16xf32> to vector<16x16xf32>
    %281 = arith.truncf %280 : vector<16x16xf32> to vector<16x16xbf16>
    %cst_354 = arith.constant dense<0.000000e+00> : vector<64x16xf32>
    %282 = tpu.matmul %278, %281, %cst_354 {dimension_numbers = #tpu.dot_dimension_numbers<[1], [0], [0], [1], [0, 0, 1, 1], [], []>} : vector<64x16xbf16>, vector<16x16xbf16>, vector<64x16xf32> -> vector<64x16xf32>
    %c6_355 = arith.constant 6 : index
    %c0_356 = arith.constant 0 : index
    %283 = vector.load %arg3[%c6_355, %c0_356] : memref<15x16xf32, #tpu.memory_space<vmem>>, vector<1x16xf32>
    %284 = vector.broadcast %283 : vector<1x16xf32> to vector<64x16xf32>
    %285 = arith.addf %282, %284 : vector<64x16xf32>
    %286 = vector.shape_cast %285 : vector<64x16xf32> to vector<8x8x16xf32>
    %c0_357 = arith.constant 0 : index
    %c0_358 = arith.constant 0 : index
    %c0_359 = arith.constant 0 : index
    %c0_360 = arith.constant 0 : index
    %287 = vector.load %arg4[%c0_357, %c0_358, %c0_359, %c0_360] : memref<1x8x8x16xf32, #tpu.memory_space<vmem>>, vector<1x8x8x16xf32>
    %288 = vector.shape_cast %287 : vector<1x8x8x16xf32> to vector<8x8x16xf32>
    %289 = vector.shape_cast %286 : vector<8x8x16xf32> to vector<1x8x8x16xf32>
    tpu.vector_store %arg4[%c0_357, %c0_358, %c0_359, %c0_360], %289 {strides = array<i32>} : memref<1x8x8x16xf32, #tpu.memory_space<vmem>>, vector<1x8x8x16xf32>,
    return
  }
  func.func @transform_0(%arg0: i32) -> (i32, i32, i32, i32, i32) {
    %c0_i32 = arith.constant 0 : i32
    %c0_i32_0 = arith.constant 0 : i32
    %c0_i32_1 = arith.constant 0 : i32
    %c0_i32_2 = arith.constant 0 : i32
    %c0_i32_3 = arith.constant 0 : i32
    return %arg0, %c0_i32, %c0_i32_0, %c0_i32_1, %c0_i32_2 : i32, i32, i32, i32, i32
  }
  func.func @transform_1(%arg0: i32) -> (i32, i32, i32) {
    %c0_i32 = arith.constant 0 : i32
    %c0_i32_0 = arith.constant 0 : i32
    %c0_i32_1 = arith.constant 0 : i32
    %c0_i32_2 = arith.constant 0 : i32
    return %c0_i32, %c0_i32_0, %c0_i32_1 : i32, i32, i32
  }
  func.func @transform_2(%arg0: i32) -> (i32, i32) {
    %c0_i32 = arith.constant 0 : i32
    %c0_i32_0 = arith.constant 0 : i32
    %c0_i32_1 = arith.constant 0 : i32
    return %c0_i32, %c0_i32_0 : i32, i32
  }
  func.func @transform_3(%arg0: i32) -> (i32, i32, i32, i32) {
    %c0_i32 = arith.constant 0 : i32
    %c0_i32_0 = arith.constant 0 : i32
    %c0_i32_1 = arith.constant 0 : i32
    %c0_i32_2 = arith.constant 0 : i32
    return %arg0, %c0_i32, %c0_i32_0, %c0_i32_1 : i32, i32, i32, i32
  }
}

</mosaic_0001>

<llo_original>
// kernel: down_forward.1
$region0: #{down_forward.1}
  #allocation0 [shape = 'u32[]', space=smem, size = 0x4, offset = 0x4, fixed_abs, tag = 'smem constant byte address 0x4 - core index']
  #allocation1 [shape = 'u32[144,128]{1,0:T(1,128)}', space=vmem, size = 0x12000, scoped, tag = 'internal scratch']
  #allocation2 [shape = 'f32[10,10,16]{2,1,0:T(8,128)}', space=vmem, size = 0x14000, scoped, tag = 'scratch operand']
  #allocation3 [shape = 'f32[64,16]{1,0:T(8,128)}', space=vmem, size = 0x8000, scoped, tag = 'scratch operand']
  #allocation4 [shape = 'f32[64,128]{1,0:T(8,128)}', space=vmem, size = 0x8000, scoped, tag = 'scratch operand']
  %s0 = inlined_call_operand.vmem [shape: f32[2,4,8,8,4], index: 0, kind: input, shape index: {}]
  %s1 = inlined_call_operand.vmem [shape: f32[7,128,16], index: 1, kind: input, shape index: {}]
  %s2 = inlined_call_operand.vmem [shape: f32[15,16], index: 2, kind: input, shape index: {}]
  %s3 = inlined_call_operand.hbm [shape: f32[2,8,8,16], index: 3, kind: output, shape index: {}]
  %s4 = sld [smem:[#allocation0]]
  $region45: #{down_forward.1} parent=0
    _
  %s6 = ssub.s32 1, %s4
  %s7 = scalar_select 0, %s6, %s4
  $region1: #{down_forward.1} parent=0
    #allocation5 [shape = 'u8[65536]{0}', space=vmem, size = 0x10000, scoped, tag = 'output window, operand 0']
    #allocation6 [shape = 's32[2]{0}', space=sflag, size = 0x8, scoped, tag = 'scoped memory for down_forward.1']
    %8 = vsyncpa [#allocation6], 0
    %s9 = scalar_lea.sflag [#allocation6], 1
    %10 = vsyncpa %s9, 0
    loop: start=0, step=1, limit=4
    $region2: #{down_forward.1} parent=1 // loop_pre_header
      _
    $region3: #{down_forward.1} parent=1 // loop_header
      %s12 = sphi 0, %s16
      %p13 = scmp.ge.s32.totalorder %s12, 4
      %s22 = sphi 0, %s24
      %s25 = sphi 0, %s22
      %s26 = sphi 0, %s25
      %s42 = sphi 0, %s26
      %s46 = sphi 0, %s46
      %s48 = sphi 0, %s46
      %s49 = sphi 0, %s48
      %s63 = sphi 0, %s49
      %s67 = sphi 0, %s67
      %s69 = sphi 0, %s67
      %s70 = sphi 0, %s69
      %s84 = sphi 0, %s70
      %s90 = sphi 0, %s92
      %s93 = sphi 0, %s90
      %s94 = sphi 0, %s93
      %s110 = sphi 0, %s94
    $region4: #{down_forward.1} parent=1 // loop_header_branch
      %15 = sbr.rel (%p13) target = $region8
    $region5: #{down_forward.1} parent=1 // loop_body
      %s17 = ssub.s32 %s12, 1
      %s18 = ssub.s32 %s12, 2
      %s19 = sadd.s32 %s12, 1
      %s20 = ssub.s32 %s12, %s19
      %p21 = scmp.eq.s32.totalorder %s20, 0
      %s23 = sadd.s32 %s22, 1
      %s24 = scalar_select %p21, %s22, %s23
      %p27 = pneg %p21
      %p28 = scmp.eq.s32.totalorder %s12, 1
      %p29 = por %p27, %p28
      %p30 = scmp.ne.s32.totalorder %s22, %s25
      %p31 = scmp.eq.s32.totalorder %s12, 0
      %p32 = por %p30, %p31
      %p33 = scmp.ne.s32.totalorder %s22, %s25
      %p34 = scmp.eq.s32.totalorder %s17, 1
      %p35 = por %p33, %p34
      %p36 = scmp.ne.s32.totalorder %s25, %s26
      %p37 = scmp.eq.s32.totalorder %s17, 0
      %p38 = por %p36, %p37
      %p39 = scmp.ne.s32.totalorder %s25, %s26
      %p40 = scmp.eq.s32.totalorder %s18, 1
      %p41 = por %p39, %p40
      %p43 = scmp.ne.s32.totalorder %s26, %s42
      %p44 = scmp.eq.s32.totalorder %s18, 0
      %p45 = por %p43, %p44
      %s47 = sadd.s32 %s46, 1
      %p50 = scmp.eq.s32.totalorder %s12, 1
      %p51 = scmp.ne.s32.totalorder %s46, %s48
      %p52 = scmp.eq.s32.totalorder %s12, 0
      %p53 = por %p51, %p52
      %p54 = scmp.ne.s32.totalorder %s46, %s48
      %p55 = scmp.eq.s32.totalorder %s17, 1
      %p56 = por %p54, %p55
      %p57 = scmp.ne.s32.totalorder %s48, %s49
      %p58 = scmp.eq.s32.totalorder %s17, 0
      %p59 = por %p57, %p58
      %p60 = scmp.ne.s32.totalorder %s48, %s49
      %p61 = scmp.eq.s32.totalorder %s18, 1
      %p62 = por %p60, %p61
      %p64 = scmp.ne.s32.totalorder %s49, %s63
      %p65 = scmp.eq.s32.totalorder %s18, 0
      %p66 = por %p64, %p65
      %s68 = sadd.s32 %s67, 1
      %p71 = scmp.eq.s32.totalorder %s12, 1
      %p72 = scmp.ne.s32.totalorder %s67, %s69
      %p73 = scmp.eq.s32.totalorder %s12, 0
      %p74 = por %p72, %p73
      %p75 = scmp.ne.s32.totalorder %s67, %s69
      %p76 = scmp.eq.s32.totalorder %s17, 1
      %p77 = por %p75, %p76
      %p78 = scmp.ne.s32.totalorder %s69, %s70
      %p79 = scmp.eq.s32.totalorder %s17, 0
      %p80 = por %p78, %p79
      %p81 = scmp.ne.s32.totalorder %s69, %s70
      %p82 = scmp.eq.s32.totalorder %s18, 1
      %p83 = por %p81, %p82
      %p85 = scmp.ne.s32.totalorder %s70, %s84
      %p86 = scmp.eq.s32.totalorder %s18, 0
      %p87 = por %p85, %p86
      %s88 = ssub.s32 %s12, %s19
      %p89 = scmp.eq.s32.totalorder %s88, 0
      %s91 = sadd.s32 %s90, 1
      %s92 = scalar_select %p89, %s90, %s91
      %p95 = pneg %p89
      %p96 = scmp.eq.s32.totalorder %s12, 1
      %p97 = por %p95, %p96
      %p98 = scmp.ne.s32.totalorder %s90, %s93
      %p99 = scmp.eq.s32.totalorder %s12, 0
      %p100 = por %p98, %p99
      %p101 = scmp.ne.s32.totalorder %s90, %s93
      %p102 = scmp.eq.s32.totalorder %s17, 1
      %p103 = por %p101, %p102
      %p104 = scmp.ne.s32.totalorder %s93, %s94
      %p105 = scmp.eq.s32.totalorder %s17, 0
      %p106 = por %p104, %p105
      %p107 = scmp.ne.s32.totalorder %s93, %s94
      %p108 = scmp.eq.s32.totalorder %s18, 1
      %p109 = por %p107, %p108
      %p111 = scmp.ne.s32.totalorder %s94, %s110
      %p112 = scmp.eq.s32.totalorder %s18, 0
      %p113 = por %p111, %p112
      %p114 = scmp.le.s32.totalorder 1, %s12
      %p115 = scmp.lt.s32.totalorder %s12, 3
      %p116 = pnand %p114, %p115
      %p117 = pneg %p116
      // Predicated region
      $region9: #{down_forward.1} parent=5 // pred_check
        _
      $region10: #{down_forward.1} parent=5 // pred_check_branch
        %119 = sbr.rel (%p116) target = $region12
      $region11: #{down_forward.1} parent=5 // pred_region
        %s120 = ssub.s32 %s12, 1
        // Predicated region
        $region13: #{down_forward.1} parent=11 // pred_check
          %p121 = pneg %p59
        $region14: #{down_forward.1} parent=11 // pred_check_branch
          %123 = sbr.rel (%p121) target = $region16
        $region15: #{down_forward.1} parent=11 // pred_region
          _
        $region16: #{down_forward.1} parent=11 // pred_fallthru
          _
        // Predicated region
        $region17: #{down_forward.1} parent=11 // pred_check
          %p124 = pneg %p80
        $region18: #{down_forward.1} parent=11 // pred_check_branch
          %126 = sbr.rel (%p124) target = $region20
        $region19: #{down_forward.1} parent=11 // pred_region
          _
        $region20: #{down_forward.1} parent=11 // pred_fallthru
          _
      $region12: #{down_forward.1} parent=5 // pred_fallthru
        _
      %p127 = scmp.lt.s32.totalorder %s12, 2
      // Predicated region
      $region21: #{down_forward.1} parent=5 // pred_check
        %p128 = pneg %p127
      $region22: #{down_forward.1} parent=5 // pred_check_branch
        %130 = sbr.rel (%p128) target = $region24
      $region23: #{down_forward.1} parent=5 // pred_region
        // Predicated region
        $region25: #{down_forward.1} parent=23 // pred_check
          %p131 = pneg %p32
        $region26: #{down_forward.1} parent=23 // pred_check_branch
          %133 = sbr.rel (%p131) target = $region28
        $region27: #{down_forward.1} parent=23 // pred_region
          %p134 = scmp.lt.s32.totalorder %s12, 1
          %s135 = scalar_select %p134, %s12, 1
          %s136 = smul.addr %s135, 32
          %s137 = smul.addr %s136, 8
          %s138 = scalar_lea.vmem %s0, %s137
        $region28: #{down_forward.1} parent=23 // pred_fallthru
          _
      $region24: #{down_forward.1} parent=5 // pred_fallthru
        _
      %p139 = scmp.le.s32.totalorder 1, %s12
      %p140 = scmp.lt.s32.totalorder %s12, 3
      %p141 = pnand %p139, %p140
      %p142 = pneg %p141
      // Predicated region
      $region29: #{down_forward.1} parent=5 // pred_check
        _
      $region30: #{down_forward.1} parent=5 // pred_check_branch
        %144 = sbr.rel (%p141) target = $region32
      $region31: #{down_forward.1} parent=5 // pred_region
        %s145 = ssub.s32 %s12, 1
        %p146 = scmp.lt.s32.totalorder %s17, 1
        %s147 = scalar_select %p146, %s17, 1
        %s148 = smul.addr %s147, 32
        %s149 = smul.addr %s148, 8
        %s150 = scalar_lea.vmem %s0, %s149
        %p151 = pneg %p38
        %p152 = pneg %p35
        %p153 = pneg %p59
        %p154 = pneg %p56
        %p155 = pneg %p80
        %p156 = pneg %p77
        %p157 = pneg %p106
        %p158 = pneg %p103
        %s159 = sand.u32 %s93, 1
        %s160 = scalar_lea.sflag [#allocation6], %s159
        %s161 = sand.u32 %s93, 1
        %s162 = smul.addr %s161, 64
        %s163 = scalar_lea.vmem [#allocation5], %s162
        %p164 = scmp.lt.s32.totalorder %s17, 1
        %s165 = scalar_select %p164, %s17, 1
        %s166 = smul.addr %s165, 32
        %s167 = smul.addr %s166, 8
        %s168 = scalar_lea.vmem %s0, %s167
        %vm170 = vcmask 130048
        %171 = vst.msk [vmem:[#allocation2] sm:$0xff] %vm170, 0.0
        %vm172 = vcmask 123904
        %173 = vst.msk [vmem:[#allocation2 + $0x8] sm:$0x3] %vm172, 0.0
        %174 = vst.msk [vmem:[#allocation2 + $0x10] sm:$0xff] %vm170, 0.0
        %175 = vst.msk [vmem:[#allocation2 + $0x18] sm:$0x3] %vm172, 0.0
        %176 = vst.msk [vmem:[#allocation2 + $0x20] sm:$0xff] %vm170, 0.0
        %177 = vst.msk [vmem:[#allocation2 + $0x28] sm:$0x3] %vm172, 0.0
        %178 = vst.msk [vmem:[#allocation2 + $0x30] sm:$0xff] %vm170, 0.0
        %179 = vst.msk [vmem:[#allocation2 + $0x38] sm:$0x3] %vm172, 0.0
        %180 = vst.msk [vmem:[#allocation2 + $0x40] sm:$0xff] %vm170, 0.0
        %181 = vst.msk [vmem:[#allocation2 + $0x48] sm:$0x3] %vm172, 0.0
        %182 = vst.msk [vmem:[#allocation2 + $0x50] sm:$0xff] %vm170, 0.0
        %183 = vst.msk [vmem:[#allocation2 + $0x58] sm:$0x3] %vm172, 0.0
        %184 = vst.msk [vmem:[#allocation2 + $0x60] sm:$0xff] %vm170, 0.0
        %185 = vst.msk [vmem:[#allocation2 + $0x68] sm:$0x3] %vm172, 0.0
        %186 = vst.msk [vmem:[#allocation2 + $0x70] sm:$0xff] %vm170, 0.0
        %187 = vst.msk [vmem:[#allocation2 + $0x78] sm:$0x3] %vm172, 0.0
        %188 = vst.msk [vmem:[#allocation2 + $0x80] sm:$0xff] %vm170, 0.0
        %189 = vst.msk [vmem:[#allocation2 + $0x88] sm:$0x3] %vm172, 0.0
        %190 = vst.msk [vmem:[#allocation2 + $0x90] sm:$0xff] %vm170, 0.0
        %191 = vst.msk [vmem:[#allocation2 + $0x98] sm:$0x3] %vm172, 0.0
        %v192 = vld [vmem:[%s168] sm:$0xff]
        %v193 = vld [vmem:[%s168 + $0x8] sm:$0xff]
        %v194 = vld [vmem:[%s168 + $0x10] sm:$0xff]
        %v195 = vld [vmem:[%s168 + $0x18] sm:$0xff]
        %v196 = vld [vmem:[%s168 + $0x20] sm:$0xff]
        %v197 = vld [vmem:[%s168 + $0x28] sm:$0xff]
        %v198 = vld [vmem:[%s168 + $0x30] sm:$0xff]
        %v199 = vld [vmem:[%s168 + $0x38] sm:$0xff]
        %v200 = vld [vmem:[%s168 + $0x40] sm:$0xff]
        %v201 = vld [vmem:[%s168 + $0x48] sm:$0xff]
        %v202 = vld [vmem:[%s168 + $0x50] sm:$0xff]
        %v203 = vld [vmem:[%s168 + $0x58] sm:$0xff]
        %v204 = vld [vmem:[%s168 + $0x60] sm:$0xff]
        %v205 = vld [vmem:[%s168 + $0x68] sm:$0xff]
        %v206 = vld [vmem:[%s168 + $0x70] sm:$0xff]
        %v207 = vld [vmem:[%s168 + $0x78] sm:$0xff]
        %v208 = vld [vmem:[%s168 + $0x80] sm:$0xff]
        %v209 = vld [vmem:[%s168 + $0x88] sm:$0xff]
        %v210 = vld [vmem:[%s168 + $0x90] sm:$0xff]
        %v211 = vld [vmem:[%s168 + $0x98] sm:$0xff]
        %v212 = vld [vmem:[%s168 + $0xa0] sm:$0xff]
        %v213 = vld [vmem:[%s168 + $0xa8] sm:$0xff]
        %v214 = vld [vmem:[%s168 + $0xb0] sm:$0xff]
        %v215 = vld [vmem:[%s168 + $0xb8] sm:$0xff]
        %v216 = vld [vmem:[%s168 + $0xc0] sm:$0xff]
        %v217 = vld [vmem:[%s168 + $0xc8] sm:$0xff]
        %v218 = vld [vmem:[%s168 + $0xd0] sm:$0xff]
        %v219 = vld [vmem:[%s168 + $0xd8] sm:$0xff]
        %v220 = vld [vmem:[%s168 + $0xe0] sm:$0xff]
        %v221 = vld [vmem:[%s168 + $0xe8] sm:$0xff]
        %v222 = vld [vmem:[%s168 + $0xf0] sm:$0xff]
        %v223 = vld [vmem:[%s168 + $0xf8] sm:$0xff]
        %vm224 = vcmask 31744
        %v225 = vsel %vm224, %v192, -inf
        %v226 = vsel %vm224, %v200, -inf
        %v227 = vmax.f32 %v225, %v226
        %v228 = vsel %vm224, %v208, -inf
        %v229 = vmax.f32 %v227, %v228
        %v230 = vsel %vm224, %v216, -inf
        %v231 = vmax.f32 %v229, %v230
        %v232 = vsel %vm224, %v193, -inf
        %v233 = vsel %vm224, %v201, -inf
        %v234 = vmax.f32 %v232, %v233
        %v235 = vsel %vm224, %v209, -inf
        %v236 = vmax.f32 %v234, %v235
        %v237 = vsel %vm224, %v217, -inf
        %v238 = vmax.f32 %v236, %v237
        %v239 = vsel %vm224, %v194, -inf
        %v240 = vsel %vm224, %v202, -inf
        %v241 = vmax.f32 %v239, %v240
        %v242 = vsel %vm224, %v210, -inf
        %v243 = vmax.f32 %v241, %v242
        %v244 = vsel %vm224, %v218, -inf
        %v245 = vmax.f32 %v243, %v244
        %v246 = vsel %vm224, %v195, -inf
        %v247 = vsel %vm224, %v203, -inf
        %v248 = vmax.f32 %v246, %v247
        %v249 = vsel %vm224, %v211, -inf
        %v250 = vmax.f32 %v248, %v249
        %v251 = vsel %vm224, %v219, -inf
        %v252 = vmax.f32 %v250, %v251
        %v253 = vsel %vm224, %v196, -inf
        %v254 = vsel %vm224, %v204, -inf
        %v255 = vmax.f32 %v253, %v254
        %v256 = vsel %vm224, %v212, -inf
        %v257 = vmax.f32 %v255, %v256
        %v258 = vsel %vm224, %v220, -inf
        %v259 = vmax.f32 %v257, %v258
        %v260 = vsel %vm224, %v197, -inf
        %v261 = vsel %vm224, %v205, -inf
        %v262 = vmax.f32 %v260, %v261
        %v263 = vsel %vm224, %v213, -inf
        %v264 = vmax.f32 %v262, %v263
        %v265 = vsel %vm224, %v221, -inf
        %v266 = vmax.f32 %v264, %v265
        %v267 = vsel %vm224, %v198, -inf
        %v268 = vsel %vm224, %v206, -inf
        %v269 = vmax.f32 %v267, %v268
        %v270 = vsel %vm224, %v214, -inf
        %v271 = vmax.f32 %v269, %v270
        %v272 = vsel %vm224, %v222, -inf
        %v273 = vmax.f32 %v271, %v272
        %v274 = vsel %vm224, %v199, -inf
        %v275 = vsel %vm224, %v207, -inf
        %v276 = vmax.f32 %v274, %v275
        %v277 = vsel %vm224, %v215, -inf
        %v278 = vmax.f32 %v276, %v277
        %v279 = vsel %vm224, %v223, -inf
        %v280 = vmax.f32 %v278, %v279
        %s281 = scalar_lea.vmem [#allocation2], 16
        %282 = vst.msk [vmem:[%s281 + $0x1] sm:$0xff] %vm224, %v231
        %283 = vst.msk [vmem:[%s281 + $0x11] sm:$0xff] %vm224, %v238
        %284 = vst.msk [vmem:[%s281 + $0x21] sm:$0xff] %vm224, %v245
        %285 = vst.msk [vmem:[%s281 + $0x31] sm:$0xff] %vm224, %v252
        %286 = vst.msk [vmem:[%s281 + $0x41] sm:$0xff] %vm224, %v259
        %287 = vst.msk [vmem:[%s281 + $0x51] sm:$0xff] %vm224, %v266
        %288 = vst.msk [vmem:[%s281 + $0x61] sm:$0xff] %vm224, %v273
        %289 = vst.msk [vmem:[%s281 + $0x71] sm:$0xff] %vm224, %v280
        %v290 = vld [vmem:[#allocation2] sm:$0xff]
        %v291 = vld [vmem:[#allocation2 + $0x10] sm:$0xff]
        %v292 = vld [vmem:[#allocation2 + $0x20] sm:$0xff]
        %v293 = vld [vmem:[#allocation2 + $0x30] sm:$0xff]
        %v294 = vld [vmem:[#allocation2 + $0x40] sm:$0xff]
        %v295 = vld [vmem:[#allocation2 + $0x50] sm:$0xff]
        %v296 = vld [vmem:[#allocation2 + $0x60] sm:$0xff]
        %v297 = vld [vmem:[#allocation2 + $0x70] sm:$0xff]
        %298 = vst.msk [vmem:[#allocation4] sm:$0xff] %vm224, %v290
        %299 = vst.msk [vmem:[#allocation4 + $0x8] sm:$0xff] %vm224, %v291
        %300 = vst.msk [vmem:[#allocation4 + $0x10] sm:$0xff] %vm224, %v292
        %301 = vst.msk [vmem:[#allocation4 + $0x18] sm:$0xff] %vm224, %v293
        %302 = vst.msk [vmem:[#allocation4 + $0x20] sm:$0xff] %vm224, %v294
        %303 = vst.msk [vmem:[#allocation4 + $0x28] sm:$0xff] %vm224, %v295
        %304 = vst.msk [vmem:[#allocation4 + $0x30] sm:$0xff] %vm224, %v296
        %305 = vst.msk [vmem:[#allocation4 + $0x38] sm:$0xff] %vm224, %v297
        %v306 = vld [vmem:[#allocation2 + $0x1] sm:$0xff]
        %v307 = vld [vmem:[#allocation2 + $0x11] sm:$0xff]
        %v308 = vld [vmem:[#allocation2 + $0x21] sm:$0xff]
        %v309 = vld [vmem:[#allocation2 + $0x31] sm:$0xff]
        %v310 = vld [vmem:[#allocation2 + $0x41] sm:$0xff]
        %v311 = vld [vmem:[#allocation2 + $0x51] sm:$0xff]
        %v312 = vld [vmem:[#allocation2 + $0x61] sm:$0xff]
        %v313 = vld [vmem:[#allocation2 + $0x71] sm:$0xff]
        %322 = vrot.lane.b32.xlu0 %v306, 4
        %v323 = vpop.permute.xlu0 %322
        %324 = vrot.lane.b32.xlu0 %v307, 4
        %v325 = vpop.permute.xlu0 %324
        %326 = vrot.lane.b32.xlu0 %v308, 4
        %v327 = vpop.permute.xlu0 %326
        %328 = vrot.lane.b32.xlu0 %v309, 4
        %v329 = vpop.permute.xlu0 %328
        %330 = vrot.lane.b32.xlu0 %v310, 4
        %v331 = vpop.permute.xlu0 %330
        %332 = vrot.lane.b32.xlu0 %v311, 4
        %v333 = vpop.permute.xlu0 %332
        %334 = vrot.lane.b32.xlu0 %v312, 4
        %v335 = vpop.permute.xlu0 %334
        %336 = vrot.lane.b32.xlu0 %v313, 4
        %v337 = vpop.permute.xlu0 %336
        %vm346 = vcmask 64544
        %347 = vst.msk [vmem:[#allocation4] sm:$0xff] %vm346, %v323
        %348 = vst.msk [vmem:[#allocation4 + $0x8] sm:$0xff] %vm346, %v325
        %349 = vst.msk [vmem:[#allocation4 + $0x10] sm:$0xff] %vm346, %v327
        %350 = vst.msk [vmem:[#allocation4 + $0x18] sm:$0xff] %vm346, %v329
        %351 = vst.msk [vmem:[#allocation4 + $0x20] sm:$0xff] %vm346, %v331
        %352 = vst.msk [vmem:[#allocation4 + $0x28] sm:$0xff] %vm346, %v333
        %353 = vst.msk [vmem:[#allocation4 + $0x30] sm:$0xff] %vm346, %v335
        %354 = vst.msk [vmem:[#allocation4 + $0x38] sm:$0xff] %vm346, %v337
        %v355 = vld [vmem:[#allocation2 + $0x2] sm:$0xff]
        %v356 = vld [vmem:[#allocation2 + $0x12] sm:$0xff]
        %v357 = vld [vmem:[#allocation2 + $0x22] sm:$0xff]
        %v358 = vld [vmem:[#allocation2 + $0x32] sm:$0xff]
        %v359 = vld [vmem:[#allocation2 + $0x42] sm:$0xff]
        %v360 = vld [vmem:[#allocation2 + $0x52] sm:$0xff]
        %v361 = vld [vmem:[#allocation2 + $0x62] sm:$0xff]
        %v362 = vld [vmem:[#allocation2 + $0x72] sm:$0xff]
        %371 = vrot.lane.b32.xlu0 %v355, 8
        %v372 = vpop.permute.xlu0 %371
        %373 = vrot.lane.b32.xlu0 %v356, 8
        %v374 = vpop.permute.xlu0 %373
        %375 = vrot.lane.b32.xlu0 %v357, 8
        %v376 = vpop.permute.xlu0 %375
        %377 = vrot.lane.b32.xlu0 %v358, 8
        %v378 = vpop.permute.xlu0 %377
        %379 = vrot.lane.b32.xlu0 %v359, 8
        %v380 = vpop.permute.xlu0 %379
        %381 = vrot.lane.b32.xlu0 %v360, 8
        %v382 = vpop.permute.xlu0 %381
        %383 = vrot.lane.b32.xlu0 %v361, 8
        %v384 = vpop.permute.xlu0 %383
        %385 = vrot.lane.b32.xlu0 %v362, 8
        %v386 = vpop.permute.xlu0 %385
        %vm395 = vcmask 97344
        %396 = vst.msk [vmem:[#allocation4] sm:$0xff] %vm395, %v372
        %397 = vst.msk [vmem:[#allocation4 + $0x8] sm:$0xff] %vm395, %v374
        %398 = vst.msk [vmem:[#allocation4 + $0x10] sm:$0xff] %vm395, %v376
        %399 = vst.msk [vmem:[#allocation4 + $0x18] sm:$0xff] %vm395, %v378
        %400 = vst.msk [vmem:[#allocation4 + $0x20] sm:$0xff] %vm395, %v380
        %401 = vst.msk [vmem:[#allocation4 + $0x28] sm:$0xff] %vm395, %v382
        %402 = vst.msk [vmem:[#allocation4 + $0x30] sm:$0xff] %vm395, %v384
        %403 = vst.msk [vmem:[#allocation4 + $0x38] sm:$0xff] %vm395, %v386
        %v404 = vld [vmem:[%s281] sm:$0xff]
        %v405 = vld [vmem:[%s281 + $0x10] sm:$0xff]
        %v406 = vld [vmem:[%s281 + $0x20] sm:$0xff]
        %v407 = vld [vmem:[%s281 + $0x30] sm:$0xff]
        %v408 = vld [vmem:[%s281 + $0x40] sm:$0xff]
        %v409 = vld [vmem:[%s281 + $0x50] sm:$0xff]
        %v410 = vld [vmem:[%s281 + $0x60] sm:$0xff]
        %v411 = vld [vmem:[%s281 + $0x70] sm:$0xff]
        %420 = vrot.lane.b32.xlu0 %v404, 12
        %v421 = vpop.permute.xlu0 %420
        %422 = vrot.lane.b32.xlu0 %v405, 12
        %v423 = vpop.permute.xlu0 %422
        %424 = vrot.lane.b32.xlu0 %v406, 12
        %v425 = vpop.permute.xlu0 %424
        %426 = vrot.lane.b32.xlu0 %v407, 12
        %v427 = vpop.permute.xlu0 %426
        %428 = vrot.lane.b32.xlu0 %v408, 12
        %v429 = vpop.permute.xlu0 %428
        %430 = vrot.lane.b32.xlu0 %v409, 12
        %v431 = vpop.permute.xlu0 %430
        %432 = vrot.lane.b32.xlu0 %v410, 12
        %v433 = vpop.permute.xlu0 %432
        %434 = vrot.lane.b32.xlu0 %v411, 12
        %v435 = vpop.permute.xlu0 %434
        %vm444 = vcmask 130144
        %445 = vst.msk [vmem:[#allocation4] sm:$0xff] %vm444, %v421
        %446 = vst.msk [vmem:[#allocation4 + $0x8] sm:$0xff] %vm444, %v423
        %447 = vst.msk [vmem:[#allocation4 + $0x10] sm:$0xff] %vm444, %v425
        %448 = vst.msk [vmem:[#allocation4 + $0x18] sm:$0xff] %vm444, %v427
        %449 = vst.msk [vmem:[#allocation4 + $0x20] sm:$0xff] %vm444, %v429
        %450 = vst.msk [vmem:[#allocation4 + $0x28] sm:$0xff] %vm444, %v431
        %451 = vst.msk [vmem:[#allocation4 + $0x30] sm:$0xff] %vm444, %v433
        %452 = vst.msk [vmem:[#allocation4 + $0x38] sm:$0xff] %vm444, %v435
        %v453 = vld [vmem:[%s281 + $0x1] sm:$0xff]
        %v454 = vld [vmem:[%s281 + $0x11] sm:$0xff]
        %v455 = vld [vmem:[%s281 + $0x21] sm:$0xff]
        %v456 = vld [vmem:[%s281 + $0x31] sm:$0xff]
        %v457 = vld [vmem:[%s281 + $0x41] sm:$0xff]
        %v458 = vld [vmem:[%s281 + $0x51] sm:$0xff]
        %v459 = vld [vmem:[%s281 + $0x61] sm:$0xff]
        %v460 = vld [vmem:[%s281 + $0x71] sm:$0xff]
        %469 = vrot.lane.b32.xlu0 %v453, 16
        %v470 = vpop.permute.xlu0 %469
        %471 = vrot.lane.b32.xlu0 %v454, 16
        %v472 = vpop.permute.xlu0 %471
        %473 = vrot.lane.b32.xlu0 %v455, 16
        %v474 = vpop.permute.xlu0 %473
        %475 = vrot.lane.b32.xlu0 %v456, 16
        %v476 = vpop.permute.xlu0 %475
        %477 = vrot.lane.b32.xlu0 %v457, 16
        %v478 = vpop.permute.xlu0 %477
        %479 = vrot.lane.b32.xlu0 %v458, 16
        %v480 = vpop.permute.xlu0 %479
        %481 = vrot.lane.b32.xlu0 %v459, 16
        %v482 = vpop.permute.xlu0 %481
        %483 = vrot.lane.b32.xlu0 %v460, 16
        %v484 = vpop.permute.xlu0 %483
        %vm493 = vcmask 162944
        %494 = vst.msk [vmem:[#allocation4] sm:$0xff] %vm493, %v470
        %495 = vst.msk [vmem:[#allocation4 + $0x8] sm:$0xff] %vm493, %v472
        %496 = vst.msk [vmem:[#allocation4 + $0x10] sm:$0xff] %vm493, %v474
        %497 = vst.msk [vmem:[#allocation4 + $0x18] sm:$0xff] %vm493, %v476
        %498 = vst.msk [vmem:[#allocation4 + $0x20] sm:$0xff] %vm493, %v478
        %499 = vst.msk [vmem:[#allocation4 + $0x28] sm:$0xff] %vm493, %v480
        %500 = vst.msk [vmem:[#allocation4 + $0x30] sm:$0xff] %vm493, %v482
        %501 = vst.msk [vmem:[#allocation4 + $0x38] sm:$0xff] %vm493, %v484
        %v502 = vld [vmem:[%s281 + $0x2] sm:$0xff]
        %v503 = vld [vmem:[%s281 + $0x12] sm:$0xff]
        %v504 = vld [vmem:[%s281 + $0x22] sm:$0xff]
        %v505 = vld [vmem:[%s281 + $0x32] sm:$0xff]
        %v506 = vld [vmem:[%s281 + $0x42] sm:$0xff]
        %v507 = vld [vmem:[%s281 + $0x52] sm:$0xff]
        %v508 = vld [vmem:[%s281 + $0x62] sm:$0xff]
        %v509 = vld [vmem:[%s281 + $0x72] sm:$0xff]
        %518 = vrot.lane.b32.xlu0 %v502, 20
        %v519 = vpop.permute.xlu0 %518
        %520 = vrot.lane.b32.xlu0 %v503, 20
        %v521 = vpop.permute.xlu0 %520
        %522 = vrot.lane.b32.xlu0 %v504, 20
        %v523 = vpop.permute.xlu0 %522
        %524 = vrot.lane.b32.xlu0 %v505, 20
        %v525 = vpop.permute.xlu0 %524
        %526 = vrot.lane.b32.xlu0 %v506, 20
        %v527 = vpop.permute.xlu0 %526
        %528 = vrot.lane.b32.xlu0 %v507, 20
        %v529 = vpop.permute.xlu0 %528
        %530 = vrot.lane.b32.xlu0 %v508, 20
        %v531 = vpop.permute.xlu0 %530
        %532 = vrot.lane.b32.xlu0 %v509, 20
        %v533 = vpop.permute.xlu0 %532
        %vm542 = vcmask 195744
        %543 = vst.msk [vmem:[#allocation4] sm:$0xff] %vm542, %v519
        %544 = vst.msk [vmem:[#allocation4 + $0x8] sm:$0xff] %vm542, %v521
        %545 = vst.msk [vmem:[#allocation4 + $0x10] sm:$0xff] %vm542, %v523
        %546 = vst.msk [vmem:[#allocation4 + $0x18] sm:$0xff] %vm542, %v525
        %547 = vst.msk [vmem:[#allocation4 + $0x20] sm:$0xff] %vm542, %v527
        %548 = vst.msk [vmem:[#allocation4 + $0x28] sm:$0xff] %vm542, %v529
        %549 = vst.msk [vmem:[#allocation4 + $0x30] sm:$0xff] %vm542, %v531
        %550 = vst.msk [vmem:[#allocation4 + $0x38] sm:$0xff] %vm542, %v533
        %s551 = scalar_lea.vmem [#allocation2], 32
        %v552 = vld [vmem:[%s551] sm:$0xff]
        %v553 = vld [vmem:[%s551 + $0x10] sm:$0xff]
        %v554 = vld [vmem:[%s551 + $0x20] sm:$0xff]
        %v555 = vld [vmem:[%s551 + $0x30] sm:$0xff]
        %v556 = vld [vmem:[%s551 + $0x40] sm:$0xff]
        %v557 = vld [vmem:[%s551 + $0x50] sm:$0xff]
        %v558 = vld [vmem:[%s551 + $0x60] sm:$0xff]
        %v559 = vld [vmem:[%s551 + $0x70] sm:$0xff]
        %568 = vrot.lane.b32.xlu0 %v552, 24
        %v569 = vpop.permute.xlu0 %568
        %570 = vrot.lane.b32.xlu0 %v553, 24
        %v571 = vpop.permute.xlu0 %570
        %572 = vrot.lane.b32.xlu0 %v554, 24
        %v573 = vpop.permute.xlu0 %572
        %574 = vrot.lane.b32.xlu0 %v555, 24
        %v575 = vpop.permute.xlu0 %574
        %576 = vrot.lane.b32.xlu0 %v556, 24
        %v577 = vpop.permute.xlu0 %576
        %578 = vrot.lane.b32.xlu0 %v557, 24
        %v579 = vpop.permute.xlu0 %578
        %580 = vrot.lane.b32.xlu0 %v558, 24
        %v581 = vpop.permute.xlu0 %580
        %582 = vrot.lane.b32.xlu0 %v559, 24
        %v583 = vpop.permute.xlu0 %582
        %vm592 = vcmask 228544
        %593 = vst.msk [vmem:[#allocation4] sm:$0xff] %vm592, %v569
        %594 = vst.msk [vmem:[#allocation4 + $0x8] sm:$0xff] %vm592, %v571
        %595 = vst.msk [vmem:[#allocation4 + $0x10] sm:$0xff] %vm592, %v573
        %596 = vst.msk [vmem:[#allocation4 + $0x18] sm:$0xff] %vm592, %v575
        %597 = vst.msk [vmem:[#allocation4 + $0x20] sm:$0xff] %vm592, %v577
        %598 = vst.msk [vmem:[#allocation4 + $0x28] sm:$0xff] %vm592, %v579
        %599 = vst.msk [vmem:[#allocation4 + $0x30] sm:$0xff] %vm592, %v581
        %600 = vst.msk [vmem:[#allocation4 + $0x38] sm:$0xff] %vm592, %v583
        %v601 = vld [vmem:[%s551 + $0x1] sm:$0xff]
        %v602 = vld [vmem:[%s551 + $0x11] sm:$0xff]
        %v603 = vld [vmem:[%s551 + $0x21] sm:$0xff]
        %v604 = vld [vmem:[%s551 + $0x31] sm:$0xff]
        %v605 = vld [vmem:[%s551 + $0x41] sm:$0xff]
        %v606 = vld [vmem:[%s551 + $0x51] sm:$0xff]
        %v607 = vld [vmem:[%s551 + $0x61] sm:$0xff]
        %v608 = vld [vmem:[%s551 + $0x71] sm:$0xff]
        %617 = vrot.lane.b32.xlu0 %v601, 28
        %v618 = vpop.permute.xlu0 %617
        %619 = vrot.lane.b32.xlu0 %v602, 28
        %v620 = vpop.permute.xlu0 %619
        %621 = vrot.lane.b32.xlu0 %v603, 28
        %v622 = vpop.permute.xlu0 %621
        %623 = vrot.lane.b32.xlu0 %v604, 28
        %v624 = vpop.permute.xlu0 %623
        %625 = vrot.lane.b32.xlu0 %v605, 28
        %v626 = vpop.permute.xlu0 %625
        %627 = vrot.lane.b32.xlu0 %v606, 28
        %v628 = vpop.permute.xlu0 %627
        %629 = vrot.lane.b32.xlu0 %v607, 28
        %v630 = vpop.permute.xlu0 %629
        %631 = vrot.lane.b32.xlu0 %v608, 28
        %v632 = vpop.permute.xlu0 %631
        %vm641 = vcmask 261344
        %642 = vst.msk [vmem:[#allocation4] sm:$0xff] %vm641, %v618
        %643 = vst.msk [vmem:[#allocation4 + $0x8] sm:$0xff] %vm641, %v620
        %644 = vst.msk [vmem:[#allocation4 + $0x10] sm:$0xff] %vm641, %v622
        %645 = vst.msk [vmem:[#allocation4 + $0x18] sm:$0xff] %vm641, %v624
        %646 = vst.msk [vmem:[#allocation4 + $0x20] sm:$0xff] %vm641, %v626
        %647 = vst.msk [vmem:[#allocation4 + $0x28] sm:$0xff] %vm641, %v628
        %648 = vst.msk [vmem:[#allocation4 + $0x30] sm:$0xff] %vm641, %v630
        %649 = vst.msk [vmem:[#allocation4 + $0x38] sm:$0xff] %vm641, %v632
        %v650 = vld [vmem:[%s551 + $0x2] sm:$0xff]
        %v651 = vld [vmem:[%s551 + $0x12] sm:$0xff]
        %v652 = vld [vmem:[%s551 + $0x22] sm:$0xff]
        %v653 = vld [vmem:[%s551 + $0x32] sm:$0xff]
        %v654 = vld [vmem:[%s551 + $0x42] sm:$0xff]
        %v655 = vld [vmem:[%s551 + $0x52] sm:$0xff]
        %v656 = vld [vmem:[%s551 + $0x62] sm:$0xff]
        %v657 = vld [vmem:[%s551 + $0x72] sm:$0xff]
        %666 = vrot.lane.b32.xlu0 %v650, 32
        %v667 = vpop.permute.xlu0 %666
        %668 = vrot.lane.b32.xlu0 %v651, 32
        %v669 = vpop.permute.xlu0 %668
        %670 = vrot.lane.b32.xlu0 %v652, 32
        %v671 = vpop.permute.xlu0 %670
        %672 = vrot.lane.b32.xlu0 %v653, 32
        %v673 = vpop.permute.xlu0 %672
        %674 = vrot.lane.b32.xlu0 %v654, 32
        %v675 = vpop.permute.xlu0 %674
        %676 = vrot.lane.b32.xlu0 %v655, 32
        %v677 = vpop.permute.xlu0 %676
        %678 = vrot.lane.b32.xlu0 %v656, 32
        %v679 = vpop.permute.xlu0 %678
        %680 = vrot.lane.b32.xlu0 %v657, 32
        %v681 = vpop.permute.xlu0 %680
        %vm690 = vcmask 294144
        %691 = vst.msk [vmem:[#allocation4] sm:$0xff] %vm690, %v667
        %692 = vst.msk [vmem:[#allocation4 + $0x8] sm:$0xff] %vm690, %v669
        %693 = vst.msk [vmem:[#allocation4 + $0x10] sm:$0xff] %vm690, %v671
        %694 = vst.msk [vmem:[#allocation4 + $0x18] sm:$0xff] %vm690, %v673
        %695 = vst.msk [vmem:[#allocation4 + $0x20] sm:$0xff] %vm690, %v675
        %696 = vst.msk [vmem:[#allocation4 + $0x28] sm:$0xff] %vm690, %v677
        %697 = vst.msk [vmem:[#allocation4 + $0x30] sm:$0xff] %vm690, %v679
        %698 = vst.msk [vmem:[#allocation4 + $0x38] sm:$0xff] %vm690, %v681
        %v699 = vld [vmem:[#allocation4] sm:$0xff]
        %v700 = vld [vmem:[#allocation4 + $0x8] sm:$0xff]
        %v701 = vld [vmem:[#allocation4 + $0x10] sm:$0xff]
        %v702 = vld [vmem:[#allocation4 + $0x18] sm:$0xff]
        %v703 = vld [vmem:[#allocation4 + $0x20] sm:$0xff]
        %v704 = vld [vmem:[#allocation4 + $0x28] sm:$0xff]
        %v705 = vld [vmem:[#allocation4 + $0x30] sm:$0xff]
        %v706 = vld [vmem:[#allocation4 + $0x38] sm:$0xff]
        %v707 = vpack.c.bf16 %v700, %v699
        %v708 = vpack.c.bf16 %v702, %v701
        %v709 = vpack.c.bf16 %v704, %v703
        %v710 = vpack.c.bf16 %v706, %v705
        %v711 = vld [vmem:[%s1] sm:$0xff]
        %v712 = vld [vmem:[%s1 + $0x8] sm:$0xff]
        %v713 = vld [vmem:[%s1 + $0x10] sm:$0xff]
        %v714 = vld [vmem:[%s1 + $0x18] sm:$0xff]
        %v715 = vld [vmem:[%s1 + $0x20] sm:$0xf]
        %v716 = vpack.c.bf16 %v712, %v711
        %v717 = vpack.c.bf16 %v714, %v713
        %v718 = vpack.c.bf16 %v715, %v715
        %v719 = vld [vmem:[%s2] sm:$0x1]
        %v720 = vlaneseq
        %v721 = vshrl.u32 %v720, 7
        %v722 = vsub.s32 0, %v721
        %v723 = vrot.slane %v719, %v722
        %vm724 = vcmask 293888
        %v726 = vsel %vm724, %v707, 0
        %v729 = vsel %vm724, %v708, 0
        %v732 = vsel %vm724, %v709, 0
        %v735 = vsel %vm724, %v710, 0
        %vm737 = vcmask 1041408
        %v739 = vsel %vm737, %v718, 0
        %741 = vmatprep.subr.bf16.mxu0 0
        %742 = vmatpush1.bf16.msra.mxu0 %v716
        %743 = vmatprep.subr.bf16.mxu0 0
        %744 = vmatpush1.bf16.msra.mxu0 %v717
        %745 = vmatprep.subr.bf16.mxu0 0
        %746 = vmatpush1.bf16.msra.mxu0 %v739
        %747 = vmatprep.subr.bf16.mxu0 0
        %748 = vmatpush1.bf16.msra.mxu0 0
        %749 = vmatprep.subr.bf16.mxu0 0
        %750 = vmatpush1.bf16.msra.mxu0 0
        %751 = vmatprep.subr.bf16.mxu0 0
        %752 = vmatpush1.bf16.msra.mxu0 0
        %753 = vmatprep.subr.bf16.mxu0 0
        %754 = vmatpush1.bf16.msra.mxu0 0
        %755 = vmatprep.subr.bf16.mxu0 0
        %756 = vmatpush1.bf16.msra.mxu0 0
        %757 = vmatprep.subr.bf16.mxu0 0
        %758 = vmatpush1.bf16.msra.mxu0 0
        %759 = vmatprep.subr.bf16.mxu0 0
        %760 = vmatpush1.bf16.msra.mxu0 0
        %761 = vmatprep.subr.bf16.mxu0 0
        %762 = vmatpush1.bf16.msra.mxu0 0
        %763 = vmatprep.subr.bf16.mxu0 0
        %764 = vmatpush1.bf16.msra.mxu0 0
        %765 = vmatprep.subr.bf16.mxu0 0
        %766 = vmatpush1.bf16.msra.mxu0 0
        %767 = vmatprep.subr.bf16.mxu0 0
        %768 = vmatpush1.bf16.msra.mxu0 0
        %769 = vmatprep.subr.bf16.mxu0 0
        %770 = vmatpush1.bf16.msra.mxu0 0
        %771 = vmatprep.subr.bf16.mxu0 0
        %772 = vmatpush1.bf16.msra.mxu0 0
        %773 = vmatprep.mubr.bf16.mxu0 0
        %774 = vmatmul.mubr.bf16.gmra.mrb[0].mxu0 %v726
        %v775 = vpop.f32.mrb[0].mxu0
        %v776 = vadd.f32 %v723, %v775
        %v777 = vpop.f32.mrb[0].mxu0
        %v778 = vpop.f32.mrb[0].mxu0
        %v779 = vadd.f32 %v723, %v778
        %v780 = vpop.f32.mrb[0].mxu0
        %781 = vmatprep.mubr.bf16.mxu0 0
        %782 = vmatmul.mubr.bf16.gmra.mrb[0].mxu0 %v729
        %v783 = vpop.f32.mrb[0].mxu0
        %v784 = vadd.f32 %v723, %v783
        %v785 = vpop.f32.mrb[0].mxu0
        %v786 = vpop.f32.mrb[0].mxu0
        %v787 = vadd.f32 %v723, %v786
        %v788 = vpop.f32.mrb[0].mxu0
        %789 = vmatprep.mubr.bf16.mxu0 0
        %790 = vmatmul.mubr.bf16.gmra.mrb[0].mxu0 %v732
        %v791 = vpop.f32.mrb[0].mxu0
        %v792 = vadd.f32 %v723, %v791
        %v793 = vpop.f32.mrb[0].mxu0
        %v794 = vpop.f32.mrb[0].mxu0
        %v795 = vadd.f32 %v723, %v794
        %v796 = vpop.f32.mrb[0].mxu0
        %797 = vmatprep.mubr.bf16.mxu0 0
        %798 = vmatmul.mubr.bf16.gmra.mrb[0].mxu0 %v735
        %v799 = vpop.f32.mrb[0].mxu0
        %v800 = vadd.f32 %v723, %v799
        %v801 = vpop.f32.mrb[0].mxu0
        %v802 = vpop.f32.mrb[0].mxu0
        %v803 = vadd.f32 %v723, %v802
        %v804 = vpop.f32.mrb[0].mxu0
        %805 = vdwg.mxu0
        %v806 = vmax.f32 %v776, 0.0
        %v807 = vmax.f32 %v779, 0.0
        %v808 = vmax.f32 %v784, 0.0
        %v809 = vmax.f32 %v787, 0.0
        %v810 = vmax.f32 %v792, 0.0
        %v811 = vmax.f32 %v795, 0.0
        %v812 = vmax.f32 %v800, 0.0
        %v813 = vmax.f32 %v803, 0.0
        %vm814 = vcmask 64512
        %815 = vst.msk [vmem:[%s281 + $0x1] sm:$0xff] %vm814, %v806
        %816 = vst.msk [vmem:[%s281 + $0x11] sm:$0xff] %vm814, %v807
        %817 = vst.msk [vmem:[%s281 + $0x21] sm:$0xff] %vm814, %v808
        %818 = vst.msk [vmem:[%s281 + $0x31] sm:$0xff] %vm814, %v809
        %819 = vst.msk [vmem:[%s281 + $0x41] sm:$0xff] %vm814, %v810
        %820 = vst.msk [vmem:[%s281 + $0x51] sm:$0xff] %vm814, %v811
        %821 = vst.msk [vmem:[%s281 + $0x61] sm:$0xff] %vm814, %v812
        %822 = vst.msk [vmem:[%s281 + $0x71] sm:$0xff] %vm814, %v813
        %v823 = vld [vmem:[#allocation2] sm:$0xff]
        %v824 = vld [vmem:[#allocation2 + $0x10] sm:$0xff]
        %v825 = vld [vmem:[#allocation2 + $0x20] sm:$0xff]
        %v826 = vld [vmem:[#allocation2 + $0x30] sm:$0xff]
        %v827 = vld [vmem:[#allocation2 + $0x40] sm:$0xff]
        %v828 = vld [vmem:[#allocation2 + $0x50] sm:$0xff]
        %v829 = vld [vmem:[#allocation2 + $0x60] sm:$0xff]
        %v830 = vld [vmem:[#allocation2 + $0x70] sm:$0xff]
        %831 = vst.msk [vmem:[#allocation4] sm:$0xff] %vm814, %v823
        %832 = vst.msk [vmem:[#allocation4 + $0x8] sm:$0xff] %vm814, %v824
        %833 = vst.msk [vmem:[#allocation4 + $0x10] sm:$0xff] %vm814, %v825
        %834 = vst.msk [vmem:[#allocation4 + $0x18] sm:$0xff] %vm814, %v826
        %835 = vst.msk [vmem:[#allocation4 + $0x20] sm:$0xff] %vm814, %v827
        %836 = vst.msk [vmem:[#allocation4 + $0x28] sm:$0xff] %vm814, %v828
        %837 = vst.msk [vmem:[#allocation4 + $0x30] sm:$0xff] %vm814, %v829
        %838 = vst.msk [vmem:[#allocation4 + $0x38] sm:$0xff] %vm814, %v830
        %v839 = vld [vmem:[#allocation2 + $0x1] sm:$0xff]
        %v840 = vld [vmem:[#allocation2 + $0x11] sm:$0xff]
        %v841 = vld [vmem:[#allocation2 + $0x21] sm:$0xff]
        %v842 = vld [vmem:[#allocation2 + $0x31] sm:$0xff]
        %v843 = vld [vmem:[#allocation2 + $0x41] sm:$0xff]
        %v844 = vld [vmem:[#allocation2 + $0x51] sm:$0xff]
        %v845 = vld [vmem:[#allocation2 + $0x61] sm:$0xff]
        %v846 = vld [vmem:[#allocation2 + $0x71] sm:$0xff]
        %855 = vrot.lane.b32.xlu0 %v839, 8
        %v856 = vpop.permute.xlu0 %855
        %857 = vrot.lane.b32.xlu0 %v840, 8
        %v858 = vpop.permute.xlu0 %857
        %859 = vrot.lane.b32.xlu0 %v841, 8
        %v860 = vpop.permute.xlu0 %859
        %861 = vrot.lane.b32.xlu0 %v842, 8
        %v862 = vpop.permute.xlu0 %861
        %863 = vrot.lane.b32.xlu0 %v843, 8
        %v864 = vpop.permute.xlu0 %863
        %865 = vrot.lane.b32.xlu0 %v844, 8
        %v866 = vpop.permute.xlu0 %865
        %867 = vrot.lane.b32.xlu0 %v845, 8
        %v868 = vpop.permute.xlu0 %867
        %869 = vrot.lane.b32.xlu0 %v846, 8
        %v870 = vpop.permute.xlu0 %869
        %vm879 = vcmask 130112
        %880 = vst.msk [vmem:[#allocation4] sm:$0xff] %vm879, %v856
        %881 = vst.msk [vmem:[#allocation4 + $0x8] sm:$0xff] %vm879, %v858
        %882 = vst.msk [vmem:[#allocation4 + $0x10] sm:$0xff] %vm879, %v860
        %883 = vst.msk [vmem:[#allocation4 + $0x18] sm:$0xff] %vm879, %v862
        %884 = vst.msk [vmem:[#allocation4 + $0x20] sm:$0xff] %vm879, %v864
        %885 = vst.msk [vmem:[#allocation4 + $0x28] sm:$0xff] %vm879, %v866
        %886 = vst.msk [vmem:[#allocation4 + $0x30] sm:$0xff] %vm879, %v868
        %887 = vst.msk [vmem:[#allocation4 + $0x38] sm:$0xff] %vm879, %v870
        %v888 = vld [vmem:[#allocation2 + $0x2] sm:$0xff]
        %v889 = vld [vmem:[#allocation2 + $0x12] sm:$0xff]
        %v890 = vld [vmem:[#allocation2 + $0x22] sm:$0xff]
        %v891 = vld [vmem:[#allocation2 + $0x32] sm:$0xff]
        %v892 = vld [vmem:[#allocation2 + $0x42] sm:$0xff]
        %v893 = vld [vmem:[#allocation2 + $0x52] sm:$0xff]
        %v894 = vld [vmem:[#allocation2 + $0x62] sm:$0xff]
        %v895 = vld [vmem:[#allocation2 + $0x72] sm:$0xff]
        %904 = vrot.lane.b32.xlu0 %v888, 16
        %v905 = vpop.permute.xlu0 %904
        %906 = vrot.lane.b32.xlu0 %v889, 16
        %v907 = vpop.permute.xlu0 %906
        %908 = vrot.lane.b32.xlu0 %v890, 16
        %v909 = vpop.permute.xlu0 %908
        %910 = vrot.lane.b32.xlu0 %v891, 16
        %v911 = vpop.permute.xlu0 %910
        %912 = vrot.lane.b32.xlu0 %v892, 16
        %v913 = vpop.permute.xlu0 %912
        %914 = vrot.lane.b32.xlu0 %v893, 16
        %v915 = vpop.permute.xlu0 %914
        %916 = vrot.lane.b32.xlu0 %v894, 16
        %v917 = vpop.permute.xlu0 %916
        %918 = vrot.lane.b32.xlu0 %v895, 16
        %v919 = vpop.permute.xlu0 %918
        %vm928 = vcmask 195712
        %929 = vst.msk [vmem:[#allocation4] sm:$0xff] %vm928, %v905
        %930 = vst.msk [vmem:[#allocation4 + $0x8] sm:$0xff] %vm928, %v907
        %931 = vst.msk [vmem:[#allocation4 + $0x10] sm:$0xff] %vm928, %v909
        %932 = vst.msk [vmem:[#allocation4 + $0x18] sm:$0xff] %vm928, %v911
        %933 = vst.msk [vmem:[#allocation4 + $0x20] sm:$0xff] %vm928, %v913
        %934 = vst.msk [vmem:[#allocation4 + $0x28] sm:$0xff] %vm928, %v915
        %935 = vst.msk [vmem:[#allocation4 + $0x30] sm:$0xff] %vm928, %v917
        %936 = vst.msk [vmem:[#allocation4 + $0x38] sm:$0xff] %vm928, %v919
        %v937 = vld [vmem:[%s281] sm:$0xff]
        %v938 = vld [vmem:[%s281 + $0x10] sm:$0xff]
        %v939 = vld [vmem:[%s281 + $0x20] sm:$0xff]
        %v940 = vld [vmem:[%s281 + $0x30] sm:$0xff]
        %v941 = vld [vmem:[%s281 + $0x40] sm:$0xff]
        %v942 = vld [vmem:[%s281 + $0x50] sm:$0xff]
        %v943 = vld [vmem:[%s281 + $0x60] sm:$0xff]
        %v944 = vld [vmem:[%s281 + $0x70] sm:$0xff]
        %953 = vrot.lane.b32.xlu0 %v937, 24
        %v954 = vpop.permute.xlu0 %953
        %955 = vrot.lane.b32.xlu0 %v938, 24
        %v956 = vpop.permute.xlu0 %955
        %957 = vrot.lane.b32.xlu0 %v939, 24
        %v958 = vpop.permute.xlu0 %957
        %959 = vrot.lane.b32.xlu0 %v940, 24
        %v960 = vpop.permute.xlu0 %959
        %961 = vrot.lane.b32.xlu0 %v941, 24
        %v962 = vpop.permute.xlu0 %961
        %963 = vrot.lane.b32.xlu0 %v942, 24
        %v964 = vpop.permute.xlu0 %963
        %965 = vrot.lane.b32.xlu0 %v943, 24
        %v966 = vpop.permute.xlu0 %965
        %967 = vrot.lane.b32.xlu0 %v944, 24
        %v968 = vpop.permute.xlu0 %967
        %vm977 = vcmask 261312
        %978 = vst.msk [vmem:[#allocation4] sm:$0xff] %vm977, %v954
        %979 = vst.msk [vmem:[#allocation4 + $0x8] sm:$0xff] %vm977, %v956
        %980 = vst.msk [vmem:[#allocation4 + $0x10] sm:$0xff] %vm977, %v958
        %981 = vst.msk [vmem:[#allocation4 + $0x18] sm:$0xff] %vm977, %v960
        %982 = vst.msk [vmem:[#allocation4 + $0x20] sm:$0xff] %vm977, %v962
        %983 = vst.msk [vmem:[#allocation4 + $0x28] sm:$0xff] %vm977, %v964
        %984 = vst.msk [vmem:[#allocation4 + $0x30] sm:$0xff] %vm977, %v966
        %985 = vst.msk [vmem:[#allocation4 + $0x38] sm:$0xff] %vm977, %v968
        %v986 = vld [vmem:[%s281 + $0x1] sm:$0xff]
        %v987 = vld [vmem:[%s281 + $0x11] sm:$0xff]
        %v988 = vld [vmem:[%s281 + $0x21] sm:$0xff]
        %v989 = vld [vmem:[%s281 + $0x31] sm:$0xff]
        %v990 = vld [vmem:[%s281 + $0x41] sm:$0xff]
        %v991 = vld [vmem:[%s281 + $0x51] sm:$0xff]
        %v992 = vld [vmem:[%s281 + $0x61] sm:$0xff]
        %v993 = vld [vmem:[%s281 + $0x71] sm:$0xff]
        %1002 = vrot.lane.b32.xlu0 %v986, 32
        %v1003 = vpop.permute.xlu0 %1002
        %1004 = vrot.lane.b32.xlu0 %v987, 32
        %v1005 = vpop.permute.xlu0 %1004
        %1006 = vrot.lane.b32.xlu0 %v988, 32
        %v1007 = vpop.permute.xlu0 %1006
        %1008 = vrot.lane.b32.xlu0 %v989, 32
        %v1009 = vpop.permute.xlu0 %1008
        %1010 = vrot.lane.b32.xlu0 %v990, 32
        %v1011 = vpop.permute.xlu0 %1010
        %1012 = vrot.lane.b32.xlu0 %v991, 32
        %v1013 = vpop.permute.xlu0 %1012
        %1014 = vrot.lane.b32.xlu0 %v992, 32
        %v1015 = vpop.permute.xlu0 %1014
        %1016 = vrot.lane.b32.xlu0 %v993, 32
        %v1017 = vpop.permute.xlu0 %1016
        %vm1026 = vcmask 326912
        %1027 = vst.msk [vmem:[#allocation4] sm:$0xff] %vm1026, %v1003
        %1028 = vst.msk [vmem:[#allocation4 + $0x8] sm:$0xff] %vm1026, %v1005
        %1029 = vst.msk [vmem:[#allocation4 + $0x10] sm:$0xff] %vm1026, %v1007
        %1030 = vst.msk [vmem:[#allocation4 + $0x18] sm:$0xff] %vm1026, %v1009
        %1031 = vst.msk [vmem:[#allocation4 + $0x20] sm:$0xff] %vm1026, %v1011
        %1032 = vst.msk [vmem:[#allocation4 + $0x28] sm:$0xff] %vm1026, %v1013
        %1033 = vst.msk [vmem:[#allocation4 + $0x30] sm:$0xff] %vm1026, %v1015
        %1034 = vst.msk [vmem:[#allocation4 + $0x38] sm:$0xff] %vm1026, %v1017
        %v1035 = vld [vmem:[%s281 + $0x2] sm:$0xff]
        %v1036 = vld [vmem:[%s281 + $0x12] sm:$0xff]
        %v1037 = vld [vmem:[%s281 + $0x22] sm:$0xff]
        %v1038 = vld [vmem:[%s281 + $0x32] sm:$0xff]
        %v1039 = vld [vmem:[%s281 + $0x42] sm:$0xff]
        %v1040 = vld [vmem:[%s281 + $0x52] sm:$0xff]
        %v1041 = vld [vmem:[%s281 + $0x62] sm:$0xff]
        %v1042 = vld [vmem:[%s281 + $0x72] sm:$0xff]
        %1051 = vrot.lane.b32.xlu0 %v1035, 40
        %v1052 = vpop.permute.xlu0 %1051
        %1053 = vrot.lane.b32.xlu0 %v1036, 40
        %v1054 = vpop.permute.xlu0 %1053
        %1055 = vrot.lane.b32.xlu0 %v1037, 40
        %v1056 = vpop.permute.xlu0 %1055
        %1057 = vrot.lane.b32.xlu0 %v1038, 40
        %v1058 = vpop.permute.xlu0 %1057
        %1059 = vrot.lane.b32.xlu0 %v1039, 40
        %v1060 = vpop.permute.xlu0 %1059
        %1061 = vrot.lane.b32.xlu0 %v1040, 40
        %v1062 = vpop.permute.xlu0 %1061
        %1063 = vrot.lane.b32.xlu0 %v1041, 40
        %v1064 = vpop.permute.xlu0 %1063
        %1065 = vrot.lane.b32.xlu0 %v1042, 40
        %v1066 = vpop.permute.xlu0 %1065
        %vm1075 = vcmask 392512
        %1076 = vst.msk [vmem:[#allocation4] sm:$0xff] %vm1075, %v1052
        %1077 = vst.msk [vmem:[#allocation4 + $0x8] sm:$0xff] %vm1075, %v1054
        %1078 = vst.msk [vmem:[#allocation4 + $0x10] sm:$0xff] %vm1075, %v1056
        %1079 = vst.msk [vmem:[#allocation4 + $0x18] sm:$0xff] %vm1075, %v1058
        %1080 = vst.msk [vmem:[#allocation4 + $0x20] sm:$0xff] %vm1075, %v1060
        %1081 = vst.msk [vmem:[#allocation4 + $0x28] sm:$0xff] %vm1075, %v1062
        %1082 = vst.msk [vmem:[#allocation4 + $0x30] sm:$0xff] %vm1075, %v1064
        %1083 = vst.msk [vmem:[#allocation4 + $0x38] sm:$0xff] %vm1075, %v1066
        %v1084 = vld [vmem:[%s551] sm:$0xff]
        %v1085 = vld [vmem:[%s551 + $0x10] sm:$0xff]
        %v1086 = vld [vmem:[%s551 + $0x20] sm:$0xff]
        %v1087 = vld [vmem:[%s551 + $0x30] sm:$0xff]
        %v1088 = vld [vmem:[%s551 + $0x40] sm:$0xff]
        %v1089 = vld [vmem:[%s551 + $0x50] sm:$0xff]
        %v1090 = vld [vmem:[%s551 + $0x60] sm:$0xff]
        %v1091 = vld [vmem:[%s551 + $0x70] sm:$0xff]
        %1100 = vrot.lane.b32.xlu0 %v1084, 48
        %v1101 = vpop.permute.xlu0 %1100
        %1102 = vrot.lane.b32.xlu0 %v1085, 48
        %v1103 = vpop.permute.xlu0 %1102
        %1104 = vrot.lane.b32.xlu0 %v1086, 48
        %v1105 = vpop.permute.xlu0 %1104
        %1106 = vrot.lane.b32.xlu0 %v1087, 48
        %v1107 = vpop.permute.xlu0 %1106
        %1108 = vrot.lane.b32.xlu0 %v1088, 48
        %v1109 = vpop.permute.xlu0 %1108
        %1110 = vrot.lane.b32.xlu0 %v1089, 48
        %v1111 = vpop.permute.xlu0 %1110
        %1112 = vrot.lane.b32.xlu0 %v1090, 48
        %v1113 = vpop.permute.xlu0 %1112
        %1114 = vrot.lane.b32.xlu0 %v1091, 48
        %v1115 = vpop.permute.xlu0 %1114
        %vm1124 = vcmask 458112
        %1125 = vst.msk [vmem:[#allocation4] sm:$0xff] %vm1124, %v1101
        %1126 = vst.msk [vmem:[#allocation4 + $0x8] sm:$0xff] %vm1124, %v1103
        %1127 = vst.msk [vmem:[#allocation4 + $0x10] sm:$0xff] %vm1124, %v1105
        %1128 = vst.msk [vmem:[#allocation4 + $0x18] sm:$0xff] %vm1124, %v1107
        %1129 = vst.msk [vmem:[#allocation4 + $0x20] sm:$0xff] %vm1124, %v1109
        %1130 = vst.msk [vmem:[#allocation4 + $0x28] sm:$0xff] %vm1124, %v1111
        %1131 = vst.msk [vmem:[#allocation4 + $0x30] sm:$0xff] %vm1124, %v1113
        %1132 = vst.msk [vmem:[#allocation4 + $0x38] sm:$0xff] %vm1124, %v1115
        %v1133 = vld [vmem:[%s551 + $0x1] sm:$0xff]
        %v1134 = vld [vmem:[%s551 + $0x11] sm:$0xff]
        %v1135 = vld [vmem:[%s551 + $0x21] sm:$0xff]
        %v1136 = vld [vmem:[%s551 + $0x31] sm:$0xff]
        %v1137 = vld [vmem:[%s551 + $0x41] sm:$0xff]
        %v1138 = vld [vmem:[%s551 + $0x51] sm:$0xff]
        %v1139 = vld [vmem:[%s551 + $0x61] sm:$0xff]
        %v1140 = vld [vmem:[%s551 + $0x71] sm:$0xff]
        %1149 = vrot.lane.b32.xlu0 %v1133, 56
        %v1150 = vpop.permute.xlu0 %1149
        %1151 = vrot.lane.b32.xlu0 %v1134, 56
        %v1152 = vpop.permute.xlu0 %1151
        %1153 = vrot.lane.b32.xlu0 %v1135, 56
        %v1154 = vpop.permute.xlu0 %1153
        %1155 = vrot.lane.b32.xlu0 %v1136, 56
        %v1156 = vpop.permute.xlu0 %1155
        %1157 = vrot.lane.b32.xlu0 %v1137, 56
        %v1158 = vpop.permute.xlu0 %1157
        %1159 = vrot.lane.b32.xlu0 %v1138, 56
        %v1160 = vpop.permute.xlu0 %1159
        %1161 = vrot.lane.b32.xlu0 %v1139, 56
        %v1162 = vpop.permute.xlu0 %1161
        %1163 = vrot.lane.b32.xlu0 %v1140, 56
        %v1164 = vpop.permute.xlu0 %1163
        %vm1173 = vcmask 523712
        %1174 = vst.msk [vmem:[#allocation4] sm:$0xff] %vm1173, %v1150
        %1175 = vst.msk [vmem:[#allocation4 + $0x8] sm:$0xff] %vm1173, %v1152
        %1176 = vst.msk [vmem:[#allocation4 + $0x10] sm:$0xff] %vm1173, %v1154
        %1177 = vst.msk [vmem:[#allocation4 + $0x18] sm:$0xff] %vm1173, %v1156
        %1178 = vst.msk [vmem:[#allocation4 + $0x20] sm:$0xff] %vm1173, %v1158
        %1179 = vst.msk [vmem:[#allocation4 + $0x28] sm:$0xff] %vm1173, %v1160
        %1180 = vst.msk [vmem:[#allocation4 + $0x30] sm:$0xff] %vm1173, %v1162
        %1181 = vst.msk [vmem:[#allocation4 + $0x38] sm:$0xff] %vm1173, %v1164
        %v1182 = vld [vmem:[%s551 + $0x2] sm:$0xff]
        %v1183 = vld [vmem:[%s551 + $0x12] sm:$0xff]
        %v1184 = vld [vmem:[%s551 + $0x22] sm:$0xff]
        %v1185 = vld [vmem:[%s551 + $0x32] sm:$0xff]
        %v1186 = vld [vmem:[%s551 + $0x42] sm:$0xff]
        %v1187 = vld [vmem:[%s551 + $0x52] sm:$0xff]
        %v1188 = vld [vmem:[%s551 + $0x62] sm:$0xff]
        %v1189 = vld [vmem:[%s551 + $0x72] sm:$0xff]
        %1198 = vrot.lane.b32.xlu0 %v1182, 64
        %v1199 = vpop.permute.xlu0 %1198
        %1200 = vrot.lane.b32.xlu0 %v1183, 64
        %v1201 = vpop.permute.xlu0 %1200
        %1202 = vrot.lane.b32.xlu0 %v1184, 64
        %v1203 = vpop.permute.xlu0 %1202
        %1204 = vrot.lane.b32.xlu0 %v1185, 64
        %v1205 = vpop.permute.xlu0 %1204
        %1206 = vrot.lane.b32.xlu0 %v1186, 64
        %v1207 = vpop.permute.xlu0 %1206
        %1208 = vrot.lane.b32.xlu0 %v1187, 64
        %v1209 = vpop.permute.xlu0 %1208
        %1210 = vrot.lane.b32.xlu0 %v1188, 64
        %v1211 = vpop.permute.xlu0 %1210
        %1212 = vrot.lane.b32.xlu0 %v1189, 64
        %v1213 = vpop.permute.xlu0 %1212
        %vm1222 = vcmask 589312
        %1223 = vst.msk [vmem:[#allocation4] sm:$0xff] %vm1222, %v1199
        %1224 = vst.msk [vmem:[#allocation4 + $0x8] sm:$0xff] %vm1222, %v1201
        %1225 = vst.msk [vmem:[#allocation4 + $0x10] sm:$0xff] %vm1222, %v1203
        %1226 = vst.msk [vmem:[#allocation4 + $0x18] sm:$0xff] %vm1222, %v1205
        %1227 = vst.msk [vmem:[#allocation4 + $0x20] sm:$0xff] %vm1222, %v1207
        %1228 = vst.msk [vmem:[#allocation4 + $0x28] sm:$0xff] %vm1222, %v1209
        %1229 = vst.msk [vmem:[#allocation4 + $0x30] sm:$0xff] %vm1222, %v1211
        %1230 = vst.msk [vmem:[#allocation4 + $0x38] sm:$0xff] %vm1222, %v1213
        %v1231 = vld [vmem:[#allocation4] sm:$0xff]
        %v1232 = vld [vmem:[#allocation4 + $0x8] sm:$0xff]
        %v1233 = vld [vmem:[#allocation4 + $0x10] sm:$0xff]
        %v1234 = vld [vmem:[#allocation4 + $0x18] sm:$0xff]
        %v1235 = vld [vmem:[#allocation4 + $0x20] sm:$0xff]
        %v1236 = vld [vmem:[#allocation4 + $0x28] sm:$0xff]
        %v1237 = vld [vmem:[#allocation4 + $0x30] sm:$0xff]
        %v1238 = vld [vmem:[#allocation4 + $0x38] sm:$0xff]
        %v1239 = vpack.c.bf16 %v1232, %v1231
        %v1240 = vpack.c.bf16 %v1234, %v1233
        %v1241 = vpack.c.bf16 %v1236, %v1235
        %v1242 = vpack.c.bf16 %v1238, %v1237
        %s1243 = scalar_lea.vmem %s1, 128
        %v1244 = vld [vmem:[%s1243] sm:$0xff]
        %v1245 = vld [vmem:[%s1243 + $0x8] sm:$0xff]
        %v1246 = vld [vmem:[%s1243 + $0x10] sm:$0xff]
        %v1247 = vld [vmem:[%s1243 + $0x18] sm:$0xff]
        %v1248 = vld [vmem:[%s1243 + $0x20] sm:$0xff]
        %v1249 = vld [vmem:[%s1243 + $0x28] sm:$0xff]
        %v1250 = vld [vmem:[%s1243 + $0x30] sm:$0xff]
        %v1251 = vld [vmem:[%s1243 + $0x38] sm:$0xff]
        %v1252 = vld [vmem:[%s1243 + $0x40] sm:$0xff]
        %v1253 = vpack.c.bf16 %v1245, %v1244
        %v1254 = vpack.c.bf16 %v1247, %v1246
        %v1255 = vpack.c.bf16 %v1249, %v1248
        %v1256 = vpack.c.bf16 %v1251, %v1250
        %v1257 = vpack.c.bf16 %v1252, %v1252
        %v1258 = vld [vmem:[%s2 + $0x1] sm:$0x1]
        %v1259 = vlaneseq
        %v1260 = vshrl.u32 %v1259, 7
        %v1261 = vsub.s32 0, %v1260
        %v1262 = vrot.slane %v1258, %v1261
        %vm1263 = vcmask 588800
        %v1265 = vsel %vm1263, %v1239, 0
        %v1268 = vsel %vm1263, %v1240, 0
        %v1271 = vsel %vm1263, %v1241, 0
        %v1274 = vsel %vm1263, %v1242, 0
        %vm1276 = vcmask 1043456
        %v1278 = vsel %vm1276, %v1257, 0
        %1280 = vmatprep.subr.bf16.mxu0 0
        %1281 = vmatpush1.bf16.msra.mxu0 %v1253
        %1282 = vmatprep.subr.bf16.mxu0 0
        %1283 = vmatpush1.bf16.msra.mxu0 %v1254
        %1284 = vmatprep.subr.bf16.mxu0 0
        %1285 = vmatpush1.bf16.msra.mxu0 %v1255
        %1286 = vmatprep.subr.bf16.mxu0 0
        %1287 = vmatpush1.bf16.msra.mxu0 %v1256
        %1288 = vmatprep.subr.bf16.mxu0 0
        %1289 = vmatpush1.bf16.msra.mxu0 %v1278
        %1290 = vmatprep.subr.bf16.mxu0 0
        %1291 = vmatpush1.bf16.msra.mxu0 0
        %1292 = vmatprep.subr.bf16.mxu0 0
        %1293 = vmatpush1.bf16.msra.mxu0 0
        %1294 = vmatprep.subr.bf16.mxu0 0
        %1295 = vmatpush1.bf16.msra.mxu0 0
        %1296 = vmatprep.subr.bf16.mxu0 0
        %1297 = vmatpush1.bf16.msra.mxu0 0
        %1298 = vmatprep.subr.bf16.mxu0 0
        %1299 = vmatpush1.bf16.msra.mxu0 0
        %1300 = vmatprep.subr.bf16.mxu0 0
        %1301 = vmatpush1.bf16.msra.mxu0 0
        %1302 = vmatprep.subr.bf16.mxu0 0
        %1303 = vmatpush1.bf16.msra.mxu0 0
        %1304 = vmatprep.subr.bf16.mxu0 0
        %1305 = vmatpush1.bf16.msra.mxu0 0
        %1306 = vmatprep.subr.bf16.mxu0 0
        %1307 = vmatpush1.bf16.msra.mxu0 0
        %1308 = vmatprep.subr.bf16.mxu0 0
        %1309 = vmatpush1.bf16.msra.mxu0 0
        %1310 = vmatprep.subr.bf16.mxu0 0
        %1311 = vmatpush1.bf16.msra.mxu0 0
        %1312 = vmatprep.mubr.bf16.mxu0 0
        %1313 = vmatmul.mubr.bf16.gmra.mrb[0].mxu0 %v1265
        %v1314 = vpop.f32.mrb[0].mxu0
        %v1315 = vadd.f32 %v1262, %v1314
        %v1316 = vpop.f32.mrb[0].mxu0
        %v1317 = vpop.f32.mrb[0].mxu0
        %v1318 = vadd.f32 %v1262, %v1317
        %v1319 = vpop.f32.mrb[0].mxu0
        %1320 = vmatprep.mubr.bf16.mxu0 0
        %1321 = vmatmul.mubr.bf16.gmra.mrb[0].mxu0 %v1268
        %v1322 = vpop.f32.mrb[0].mxu0
        %v1323 = vadd.f32 %v1262, %v1322
        %v1324 = vpop.f32.mrb[0].mxu0
        %v1325 = vpop.f32.mrb[0].mxu0
        %v1326 = vadd.f32 %v1262, %v1325
        %v1327 = vpop.f32.mrb[0].mxu0
        %1328 = vmatprep.mubr.bf16.mxu0 0
        %1329 = vmatmul.mubr.bf16.gmra.mrb[0].mxu0 %v1271
        %v1330 = vpop.f32.mrb[0].mxu0
        %v1331 = vadd.f32 %v1262, %v1330
        %v1332 = vpop.f32.mrb[0].mxu0
        %v1333 = vpop.f32.mrb[0].mxu0
        %v1334 = vadd.f32 %v1262, %v1333
        %v1335 = vpop.f32.mrb[0].mxu0
        %1336 = vmatprep.mubr.bf16.mxu0 0
        %1337 = vmatmul.mubr.bf16.gmra.mrb[0].mxu0 %v1274
        %v1338 = vpop.f32.mrb[0].mxu0
        %v1339 = vadd.f32 %v1262, %v1338
        %v1340 = vpop.f32.mrb[0].mxu0
        %v1341 = vpop.f32.mrb[0].mxu0
        %v1342 = vadd.f32 %v1262, %v1341
        %v1343 = vpop.f32.mrb[0].mxu0
        %1344 = vdwg.mxu0
        %v1345 = vmax.f32 %v1315, 0.0
        %v1346 = vmax.f32 %v1318, 0.0
        %v1347 = vmax.f32 %v1323, 0.0
        %v1348 = vmax.f32 %v1326, 0.0
        %v1349 = vmax.f32 %v1331, 0.0
        %v1350 = vmax.f32 %v1334, 0.0
        %v1351 = vmax.f32 %v1339, 0.0
        %v1352 = vmax.f32 %v1342, 0.0
        %1353 = vst.msk [vmem:[#allocation3] sm:$0xff] %vm814, %v1345
        %1354 = vst.msk [vmem:[#allocation3 + $0x8] sm:$0xff] %vm814, %v1346
        %1355 = vst.msk [vmem:[#allocation3 + $0x10] sm:$0xff] %vm814, %v1347
        %1356 = vst.msk [vmem:[#allocation3 + $0x18] sm:$0xff] %vm814, %v1348
        %1357 = vst.msk [vmem:[#allocation3 + $0x20] sm:$0xff] %vm814, %v1349
        %1358 = vst.msk [vmem:[#allocation3 + $0x28] sm:$0xff] %vm814, %v1350
        %1359 = vst.msk [vmem:[#allocation3 + $0x30] sm:$0xff] %vm814, %v1351
        %1360 = vst.msk [vmem:[#allocation3 + $0x38] sm:$0xff] %vm814, %v1352
        %v1361 = vld [vmem:[%s2 + $0x7] sm:$0x1]
        %v1362 = vld [vmem:[%s2 + $0xb] sm:$0x1]
        %v1363 = vld [vmem:[#allocation3] sm:$0xff]
        %v1364 = vld [vmem:[#allocation3 + $0x8] sm:$0xff]
        %v1365 = vld [vmem:[#allocation3 + $0x10] sm:$0xff]
        %v1366 = vld [vmem:[#allocation3 + $0x18] sm:$0xff]
        %v1367 = vld [vmem:[#allocation3 + $0x20] sm:$0xff]
        %v1368 = vld [vmem:[#allocation3 + $0x28] sm:$0xff]
        %v1369 = vld [vmem:[#allocation3 + $0x30] sm:$0xff]
        %v1370 = vld [vmem:[#allocation3 + $0x38] sm:$0xff]
        %v1371 = vlaneseq
        %v1372 = vshrl.u32 %v1371, 7
        %v1373 = vsub.s32 0, %v1372
        %v1374 = vrot.slane %v1361, %v1373
        %v1375 = vmul.f32 %v1363, %v1374
        %v1376 = vmul.f32 %v1364, %v1374
        %v1377 = vmul.f32 %v1365, %v1374
        %v1378 = vmul.f32 %v1366, %v1374
        %v1379 = vmul.f32 %v1367, %v1374
        %v1380 = vmul.f32 %v1368, %v1374
        %v1381 = vmul.f32 %v1369, %v1374
        %v1382 = vmul.f32 %v1370, %v1374
        %v1383 = vlaneseq
        %v1384 = vshrl.u32 %v1383, 7
        %v1385 = vsub.s32 0, %v1384
        %v1386 = vrot.slane %v1362, %v1385
        %v1387 = vadd.f32 %v1375, %v1386
        %v1388 = vadd.f32 %v1376, %v1386
        %v1389 = vadd.f32 %v1377, %v1386
        %v1390 = vadd.f32 %v1378, %v1386
        %v1391 = vadd.f32 %v1379, %v1386
        %v1392 = vadd.f32 %v1380, %v1386
        %v1393 = vadd.f32 %v1381, %v1386
        %v1394 = vadd.f32 %v1382, %v1386
        %v1395 = vmax.f32 %v1387, 0.0
        %v1396 = vmax.f32 %v1388, 0.0
        %v1397 = vmax.f32 %v1389, 0.0
        %v1398 = vmax.f32 %v1390, 0.0
        %v1399 = vmax.f32 %v1391, 0.0
        %v1400 = vmax.f32 %v1392, 0.0
        %v1401 = vmax.f32 %v1393, 0.0
        %v1402 = vmax.f32 %v1394, 0.0
        %1403 = vst.msk [vmem:[%s281 + $0x1] sm:$0xff] %vm814, %v1395
        %1404 = vst.msk [vmem:[%s281 + $0x11] sm:$0xff] %vm814, %v1396
        %1405 = vst.msk [vmem:[%s281 + $0x21] sm:$0xff] %vm814, %v1397
        %1406 = vst.msk [vmem:[%s281 + $0x31] sm:$0xff] %vm814, %v1398
        %1407 = vst.msk [vmem:[%s281 + $0x41] sm:$0xff] %vm814, %v1399
        %1408 = vst.msk [vmem:[%s281 + $0x51] sm:$0xff] %vm814, %v1400
        %1409 = vst.msk [vmem:[%s281 + $0x61] sm:$0xff] %vm814, %v1401
        %1410 = vst.msk [vmem:[%s281 + $0x71] sm:$0xff] %vm814, %v1402
        %v1411 = vld [vmem:[#allocation2] sm:$0xff]
        %v1412 = vld [vmem:[#allocation2 + $0x10] sm:$0xff]
        %v1413 = vld [vmem:[#allocation2 + $0x20] sm:$0xff]
        %v1414 = vld [vmem:[#allocation2 + $0x30] sm:$0xff]
        %v1415 = vld [vmem:[#allocation2 + $0x40] sm:$0xff]
        %v1416 = vld [vmem:[#allocation2 + $0x50] sm:$0xff]
        %v1417 = vld [vmem:[#allocation2 + $0x60] sm:$0xff]
        %v1418 = vld [vmem:[#allocation2 + $0x70] sm:$0xff]
        %1419 = vst.msk [vmem:[#allocation4] sm:$0xff] %vm814, %v1411
        %1420 = vst.msk [vmem:[#allocation4 + $0x8] sm:$0xff] %vm814, %v1412
        %1421 = vst.msk [vmem:[#allocation4 + $0x10] sm:$0xff] %vm814, %v1413
        %1422 = vst.msk [vmem:[#allocation4 + $0x18] sm:$0xff] %vm814, %v1414
        %1423 = vst.msk [vmem:[#allocation4 + $0x20] sm:$0xff] %vm814, %v1415
        %1424 = vst.msk [vmem:[#allocation4 + $0x28] sm:$0xff] %vm814, %v1416
        %1425 = vst.msk [vmem:[#allocation4 + $0x30] sm:$0xff] %vm814, %v1417
        %1426 = vst.msk [vmem:[#allocation4 + $0x38] sm:$0xff] %vm814, %v1418
        %v1427 = vld [vmem:[#allocation2 + $0x1] sm:$0xff]
        %v1428 = vld [vmem:[#allocation2 + $0x11] sm:$0xff]
        %v1429 = vld [vmem:[#allocation2 + $0x21] sm:$0xff]
        %v1430 = vld [vmem:[#allocation2 + $0x31] sm:$0xff]
        %v1431 = vld [vmem:[#allocation2 + $0x41] sm:$0xff]
        %v1432 = vld [vmem:[#allocation2 + $0x51] sm:$0xff]
        %v1433 = vld [vmem:[#allocation2 + $0x61] sm:$0xff]
        %v1434 = vld [vmem:[#allocation2 + $0x71] sm:$0xff]
        %1443 = vrot.lane.b32.xlu0 %v1427, 8
        %v1444 = vpop.permute.xlu0 %1443
        %1445 = vrot.lane.b32.xlu0 %v1428, 8
        %v1446 = vpop.permute.xlu0 %1445
        %1447 = vrot.lane.b32.xlu0 %v1429, 8
        %v1448 = vpop.permute.xlu0 %1447
        %1449 = vrot.lane.b32.xlu0 %v1430, 8
        %v1450 = vpop.permute.xlu0 %1449
        %1451 = vrot.lane.b32.xlu0 %v1431, 8
        %v1452 = vpop.permute.xlu0 %1451
        %1453 = vrot.lane.b32.xlu0 %v1432, 8
        %v1454 = vpop.permute.xlu0 %1453
        %1455 = vrot.lane.b32.xlu0 %v1433, 8
        %v1456 = vpop.permute.xlu0 %1455
        %1457 = vrot.lane.b32.xlu0 %v1434, 8
        %v1458 = vpop.permute.xlu0 %1457
        %1467 = vst.msk [vmem:[#allocation4] sm:$0xff] %vm879, %v1444
        %1468 = vst.msk [vmem:[#allocation4 + $0x8] sm:$0xff] %vm879, %v1446
        %1469 = vst.msk [vmem:[#allocation4 + $0x10] sm:$0xff] %vm879, %v1448
        %1470 = vst.msk [vmem:[#allocation4 + $0x18] sm:$0xff] %vm879, %v1450
        %1471 = vst.msk [vmem:[#allocation4 + $0x20] sm:$0xff] %vm879, %v1452
        %1472 = vst.msk [vmem:[#allocation4 + $0x28] sm:$0xff] %vm879, %v1454
        %1473 = vst.msk [vmem:[#allocation4 + $0x30] sm:$0xff] %vm879, %v1456
        %1474 = vst.msk [vmem:[#allocation4 + $0x38] sm:$0xff] %vm879, %v1458
        %v1475 = vld [vmem:[#allocation2 + $0x2] sm:$0xff]
        %v1476 = vld [vmem:[#allocation2 + $0x12] sm:$0xff]
        %v1477 = vld [vmem:[#allocation2 + $0x22] sm:$0xff]
        %v1478 = vld [vmem:[#allocation2 + $0x32] sm:$0xff]
        %v1479 = vld [vmem:[#allocation2 + $0x42] sm:$0xff]
        %v1480 = vld [vmem:[#allocation2 + $0x52] sm:$0xff]
        %v1481 = vld [vmem:[#allocation2 + $0x62] sm:$0xff]
        %v1482 = vld [vmem:[#allocation2 + $0x72] sm:$0xff]
        %1491 = vrot.lane.b32.xlu0 %v1475, 16
        %v1492 = vpop.permute.xlu0 %1491
        %1493 = vrot.lane.b32.xlu0 %v1476, 16
        %v1494 = vpop.permute.xlu0 %1493
        %1495 = vrot.lane.b32.xlu0 %v1477, 16
        %v1496 = vpop.permute.xlu0 %1495
        %1497 = vrot.lane.b32.xlu0 %v1478, 16
        %v1498 = vpop.permute.xlu0 %1497
        %1499 = vrot.lane.b32.xlu0 %v1479, 16
        %v1500 = vpop.permute.xlu0 %1499
        %1501 = vrot.lane.b32.xlu0 %v1480, 16
        %v1502 = vpop.permute.xlu0 %1501
        %1503 = vrot.lane.b32.xlu0 %v1481, 16
        %v1504 = vpop.permute.xlu0 %1503
        %1505 = vrot.lane.b32.xlu0 %v1482, 16
        %v1506 = vpop.permute.xlu0 %1505
        %1515 = vst.msk [vmem:[#allocation4] sm:$0xff] %vm928, %v1492
        %1516 = vst.msk [vmem:[#allocation4 + $0x8] sm:$0xff] %vm928, %v1494
        %1517 = vst.msk [vmem:[#allocation4 + $0x10] sm:$0xff] %vm928, %v1496
        %1518 = vst.msk [vmem:[#allocation4 + $0x18] sm:$0xff] %vm928, %v1498
        %1519 = vst.msk [vmem:[#allocation4 + $0x20] sm:$0xff] %vm928, %v1500
        %1520 = vst.msk [vmem:[#allocation4 + $0x28] sm:$0xff] %vm928, %v1502
        %1521 = vst.msk [vmem:[#allocation4 + $0x30] sm:$0xff] %vm928, %v1504
        %1522 = vst.msk [vmem:[#allocation4 + $0x38] sm:$0xff] %vm928, %v1506
        %v1523 = vld [vmem:[%s281] sm:$0xff]
        %v1524 = vld [vmem:[%s281 + $0x10] sm:$0xff]
        %v1525 = vld [vmem:[%s281 + $0x20] sm:$0xff]
        %v1526 = vld [vmem:[%s281 + $0x30] sm:$0xff]
        %v1527 = vld [vmem:[%s281 + $0x40] sm:$0xff]
        %v1528 = vld [vmem:[%s281 + $0x50] sm:$0xff]
        %v1529 = vld [vmem:[%s281 + $0x60] sm:$0xff]
        %v1530 = vld [vmem:[%s281 + $0x70] sm:$0xff]
        %1539 = vrot.lane.b32.xlu0 %v1523, 24
        %v1540 = vpop.permute.xlu0 %1539
        %1541 = vrot.lane.b32.xlu0 %v1524, 24
        %v1542 = vpop.permute.xlu0 %1541
        %1543 = vrot.lane.b32.xlu0 %v1525, 24
        %v1544 = vpop.permute.xlu0 %1543
        %1545 = vrot.lane.b32.xlu0 %v1526, 24
        %v1546 = vpop.permute.xlu0 %1545
        %1547 = vrot.lane.b32.xlu0 %v1527, 24
        %v1548 = vpop.permute.xlu0 %1547
        %1549 = vrot.lane.b32.xlu0 %v1528, 24
        %v1550 = vpop.permute.xlu0 %1549
        %1551 = vrot.lane.b32.xlu0 %v1529, 24
        %v1552 = vpop.permute.xlu0 %1551
        %1553 = vrot.lane.b32.xlu0 %v1530, 24
        %v1554 = vpop.permute.xlu0 %1553
        %1563 = vst.msk [vmem:[#allocation4] sm:$0xff] %vm977, %v1540
        %1564 = vst.msk [vmem:[#allocation4 + $0x8] sm:$0xff] %vm977, %v1542
        %1565 = vst.msk [vmem:[#allocation4 + $0x10] sm:$0xff] %vm977, %v1544
        %1566 = vst.msk [vmem:[#allocation4 + $0x18] sm:$0xff] %vm977, %v1546
        %1567 = vst.msk [vmem:[#allocation4 + $0x20] sm:$0xff] %vm977, %v1548
        %1568 = vst.msk [vmem:[#allocation4 + $0x28] sm:$0xff] %vm977, %v1550
        %1569 = vst.msk [vmem:[#allocation4 + $0x30] sm:$0xff] %vm977, %v1552
        %1570 = vst.msk [vmem:[#allocation4 + $0x38] sm:$0xff] %vm977, %v1554
        %v1571 = vld [vmem:[%s281 + $0x1] sm:$0xff]
        %v1572 = vld [vmem:[%s281 + $0x11] sm:$0xff]
        %v1573 = vld [vmem:[%s281 + $0x21] sm:$0xff]
        %v1574 = vld [vmem:[%s281 + $0x31] sm:$0xff]
        %v1575 = vld [vmem:[%s281 + $0x41] sm:$0xff]
        %v1576 = vld [vmem:[%s281 + $0x51] sm:$0xff]
        %v1577 = vld [vmem:[%s281 + $0x61] sm:$0xff]
        %v1578 = vld [vmem:[%s281 + $0x71] sm:$0xff]
        %1587 = vrot.lane.b32.xlu0 %v1571, 32
        %v1588 = vpop.permute.xlu0 %1587
        %1589 = vrot.lane.b32.xlu0 %v1572, 32
        %v1590 = vpop.permute.xlu0 %1589
        %1591 = vrot.lane.b32.xlu0 %v1573, 32
        %v1592 = vpop.permute.xlu0 %1591
        %1593 = vrot.lane.b32.xlu0 %v1574, 32
        %v1594 = vpop.permute.xlu0 %1593
        %1595 = vrot.lane.b32.xlu0 %v1575, 32
        %v1596 = vpop.permute.xlu0 %1595
        %1597 = vrot.lane.b32.xlu0 %v1576, 32
        %v1598 = vpop.permute.xlu0 %1597
        %1599 = vrot.lane.b32.xlu0 %v1577, 32
        %v1600 = vpop.permute.xlu0 %1599
        %1601 = vrot.lane.b32.xlu0 %v1578, 32
        %v1602 = vpop.permute.xlu0 %1601
        %1611 = vst.msk [vmem:[#allocation4] sm:$0xff] %vm1026, %v1588
        %1612 = vst.msk [vmem:[#allocation4 + $0x8] sm:$0xff] %vm1026, %v1590
        %1613 = vst.msk [vmem:[#allocation4 + $0x10] sm:$0xff] %vm1026, %v1592
        %1614 = vst.msk [vmem:[#allocation4 + $0x18] sm:$0xff] %vm1026, %v1594
        %1615 = vst.msk [vmem:[#allocation4 + $0x20] sm:$0xff] %vm1026, %v1596
        %1616 = vst.msk [vmem:[#allocation4 + $0x28] sm:$0xff] %vm1026, %v1598
        %1617 = vst.msk [vmem:[#allocation4 + $0x30] sm:$0xff] %vm1026, %v1600
        %1618 = vst.msk [vmem:[#allocation4 + $0x38] sm:$0xff] %vm1026, %v1602
        %v1619 = vld [vmem:[%s281 + $0x2] sm:$0xff]
        %v1620 = vld [vmem:[%s281 + $0x12] sm:$0xff]
        %v1621 = vld [vmem:[%s281 + $0x22] sm:$0xff]
        %v1622 = vld [vmem:[%s281 + $0x32] sm:$0xff]
        %v1623 = vld [vmem:[%s281 + $0x42] sm:$0xff]
        %v1624 = vld [vmem:[%s281 + $0x52] sm:$0xff]
        %v1625 = vld [vmem:[%s281 + $0x62] sm:$0xff]
        %v1626 = vld [vmem:[%s281 + $0x72] sm:$0xff]
        %1635 = vrot.lane.b32.xlu0 %v1619, 40
        %v1636 = vpop.permute.xlu0 %1635
        %1637 = vrot.lane.b32.xlu0 %v1620, 40
        %v1638 = vpop.permute.xlu0 %1637
        %1639 = vrot.lane.b32.xlu0 %v1621, 40
        %v1640 = vpop.permute.xlu0 %1639
        %1641 = vrot.lane.b32.xlu0 %v1622, 40
        %v1642 = vpop.permute.xlu0 %1641
        %1643 = vrot.lane.b32.xlu0 %v1623, 40
        %v1644 = vpop.permute.xlu0 %1643
        %1645 = vrot.lane.b32.xlu0 %v1624, 40
        %v1646 = vpop.permute.xlu0 %1645
        %1647 = vrot.lane.b32.xlu0 %v1625, 40
        %v1648 = vpop.permute.xlu0 %1647
        %1649 = vrot.lane.b32.xlu0 %v1626, 40
        %v1650 = vpop.permute.xlu0 %1649
        %1659 = vst.msk [vmem:[#allocation4] sm:$0xff] %vm1075, %v1636
        %1660 = vst.msk [vmem:[#allocation4 + $0x8] sm:$0xff] %vm1075, %v1638
        %1661 = vst.msk [vmem:[#allocation4 + $0x10] sm:$0xff] %vm1075, %v1640
        %1662 = vst.msk [vmem:[#allocation4 + $0x18] sm:$0xff] %vm1075, %v1642
        %1663 = vst.msk [vmem:[#allocation4 + $0x20] sm:$0xff] %vm1075, %v1644
        %1664 = vst.msk [vmem:[#allocation4 + $0x28] sm:$0xff] %vm1075, %v1646
        %1665 = vst.msk [vmem:[#allocation4 + $0x30] sm:$0xff] %vm1075, %v1648
        %1666 = vst.msk [vmem:[#allocation4 + $0x38] sm:$0xff] %vm1075, %v1650
        %v1667 = vld [vmem:[%s551] sm:$0xff]
        %v1668 = vld [vmem:[%s551 + $0x10] sm:$0xff]
        %v1669 = vld [vmem:[%s551 + $0x20] sm:$0xff]
        %v1670 = vld [vmem:[%s551 + $0x30] sm:$0xff]
        %v1671 = vld [vmem:[%s551 + $0x40] sm:$0xff]
        %v1672 = vld [vmem:[%s551 + $0x50] sm:$0xff]
        %v1673 = vld [vmem:[%s551 + $0x60] sm:$0xff]
        %v1674 = vld [vmem:[%s551 + $0x70] sm:$0xff]
        %1683 = vrot.lane.b32.xlu0 %v1667, 48
        %v1684 = vpop.permute.xlu0 %1683
        %1685 = vrot.lane.b32.xlu0 %v1668, 48
        %v1686 = vpop.permute.xlu0 %1685
        %1687 = vrot.lane.b32.xlu0 %v1669, 48
        %v1688 = vpop.permute.xlu0 %1687
        %1689 = vrot.lane.b32.xlu0 %v1670, 48
        %v1690 = vpop.permute.xlu0 %1689
        %1691 = vrot.lane.b32.xlu0 %v1671, 48
        %v1692 = vpop.permute.xlu0 %1691
        %1693 = vrot.lane.b32.xlu0 %v1672, 48
        %v1694 = vpop.permute.xlu0 %1693
        %1695 = vrot.lane.b32.xlu0 %v1673, 48
        %v1696 = vpop.permute.xlu0 %1695
        %1697 = vrot.lane.b32.xlu0 %v1674, 48
        %v1698 = vpop.permute.xlu0 %1697
        %1707 = vst.msk [vmem:[#allocation4] sm:$0xff] %vm1124, %v1684
        %1708 = vst.msk [vmem:[#allocation4 + $0x8] sm:$0xff] %vm1124, %v1686
        %1709 = vst.msk [vmem:[#allocation4 + $0x10] sm:$0xff] %vm1124, %v1688
        %1710 = vst.msk [vmem:[#allocation4 + $0x18] sm:$0xff] %vm1124, %v1690
        %1711 = vst.msk [vmem:[#allocation4 + $0x20] sm:$0xff] %vm1124, %v1692
        %1712 = vst.msk [vmem:[#allocation4 + $0x28] sm:$0xff] %vm1124, %v1694
        %1713 = vst.msk [vmem:[#allocation4 + $0x30] sm:$0xff] %vm1124, %v1696
        %1714 = vst.msk [vmem:[#allocation4 + $0x38] sm:$0xff] %vm1124, %v1698
        %v1715 = vld [vmem:[%s551 + $0x1] sm:$0xff]
        %v1716 = vld [vmem:[%s551 + $0x11] sm:$0xff]
        %v1717 = vld [vmem:[%s551 + $0x21] sm:$0xff]
        %v1718 = vld [vmem:[%s551 + $0x31] sm:$0xff]
        %v1719 = vld [vmem:[%s551 + $0x41] sm:$0xff]
        %v1720 = vld [vmem:[%s551 + $0x51] sm:$0xff]
        %v1721 = vld [vmem:[%s551 + $0x61] sm:$0xff]
        %v1722 = vld [vmem:[%s551 + $0x71] sm:$0xff]
        %1731 = vrot.lane.b32.xlu0 %v1715, 56
        %v1732 = vpop.permute.xlu0 %1731
        %1733 = vrot.lane.b32.xlu0 %v1716, 56
        %v1734 = vpop.permute.xlu0 %1733
        %1735 = vrot.lane.b32.xlu0 %v1717, 56
        %v1736 = vpop.permute.xlu0 %1735
        %1737 = vrot.lane.b32.xlu0 %v1718, 56
        %v1738 = vpop.permute.xlu0 %1737
        %1739 = vrot.lane.b32.xlu0 %v1719, 56
        %v1740 = vpop.permute.xlu0 %1739
        %1741 = vrot.lane.b32.xlu0 %v1720, 56
        %v1742 = vpop.permute.xlu0 %1741
        %1743 = vrot.lane.b32.xlu0 %v1721, 56
        %v1744 = vpop.permute.xlu0 %1743
        %1745 = vrot.lane.b32.xlu0 %v1722, 56
        %v1746 = vpop.permute.xlu0 %1745
        %1755 = vst.msk [vmem:[#allocation4] sm:$0xff] %vm1173, %v1732
        %1756 = vst.msk [vmem:[#allocation4 + $0x8] sm:$0xff] %vm1173, %v1734
        %1757 = vst.msk [vmem:[#allocation4 + $0x10] sm:$0xff] %vm1173, %v1736
        %1758 = vst.msk [vmem:[#allocation4 + $0x18] sm:$0xff] %vm1173, %v1738
        %1759 = vst.msk [vmem:[#allocation4 + $0x20] sm:$0xff] %vm1173, %v1740
        %1760 = vst.msk [vmem:[#allocation4 + $0x28] sm:$0xff] %vm1173, %v1742
        %1761 = vst.msk [vmem:[#allocation4 + $0x30] sm:$0xff] %vm1173, %v1744
        %1762 = vst.msk [vmem:[#allocation4 + $0x38] sm:$0xff] %vm1173, %v1746
        %v1763 = vld [vmem:[%s551 + $0x2] sm:$0xff]
        %v1764 = vld [vmem:[%s551 + $0x12] sm:$0xff]
        %v1765 = vld [vmem:[%s551 + $0x22] sm:$0xff]
        %v1766 = vld [vmem:[%s551 + $0x32] sm:$0xff]
        %v1767 = vld [vmem:[%s551 + $0x42] sm:$0xff]
        %v1768 = vld [vmem:[%s551 + $0x52] sm:$0xff]
        %v1769 = vld [vmem:[%s551 + $0x62] sm:$0xff]
        %v1770 = vld [vmem:[%s551 + $0x72] sm:$0xff]
        %1779 = vrot.lane.b32.xlu0 %v1763, 64
        %v1780 = vpop.permute.xlu0 %1779
        %1781 = vrot.lane.b32.xlu0 %v1764, 64
        %v1782 = vpop.permute.xlu0 %1781
        %1783 = vrot.lane.b32.xlu0 %v1765, 64
        %v1784 = vpop.permute.xlu0 %1783
        %1785 = vrot.lane.b32.xlu0 %v1766, 64
        %v1786 = vpop.permute.xlu0 %1785
        %1787 = vrot.lane.b32.xlu0 %v1767, 64
        %v1788 = vpop.permute.xlu0 %1787
        %1789 = vrot.lane.b32.xlu0 %v1768, 64
        %v1790 = vpop.permute.xlu0 %1789
        %1791 = vrot.lane.b32.xlu0 %v1769, 64
        %v1792 = vpop.permute.xlu0 %1791
        %1793 = vrot.lane.b32.xlu0 %v1770, 64
        %v1794 = vpop.permute.xlu0 %1793
        %1803 = vst.msk [vmem:[#allocation4] sm:$0xff] %vm1222, %v1780
        %1804 = vst.msk [vmem:[#allocation4 + $0x8] sm:$0xff] %vm1222, %v1782
        %1805 = vst.msk [vmem:[#allocation4 + $0x10] sm:$0xff] %vm1222, %v1784
        %1806 = vst.msk [vmem:[#allocation4 + $0x18] sm:$0xff] %vm1222, %v1786
        %1807 = vst.msk [vmem:[#allocation4 + $0x20] sm:$0xff] %vm1222, %v1788
        %1808 = vst.msk [vmem:[#allocation4 + $0x28] sm:$0xff] %vm1222, %v1790
        %1809 = vst.msk [vmem:[#allocation4 + $0x30] sm:$0xff] %vm1222, %v1792
        %1810 = vst.msk [vmem:[#allocation4 + $0x38] sm:$0xff] %vm1222, %v1794
        %v1811 = vld [vmem:[#allocation4] sm:$0xff]
        %v1812 = vld [vmem:[#allocation4 + $0x8] sm:$0xff]
        %v1813 = vld [vmem:[#allocation4 + $0x10] sm:$0xff]
        %v1814 = vld [vmem:[#allocation4 + $0x18] sm:$0xff]
        %v1815 = vld [vmem:[#allocation4 + $0x20] sm:$0xff]
        %v1816 = vld [vmem:[#allocation4 + $0x28] sm:$0xff]
        %v1817 = vld [vmem:[#allocation4 + $0x30] sm:$0xff]
        %v1818 = vld [vmem:[#allocation4 + $0x38] sm:$0xff]
        %v1819 = vpack.c.bf16 %v1812, %v1811
        %v1820 = vpack.c.bf16 %v1814, %v1813
        %v1821 = vpack.c.bf16 %v1816, %v1815
        %v1822 = vpack.c.bf16 %v1818, %v1817
        %s1823 = scalar_lea.vmem %s1, 256
        %v1824 = vld [vmem:[%s1823] sm:$0xff]
        %v1825 = vld [vmem:[%s1823 + $0x8] sm:$0xff]
        %v1826 = vld [vmem:[%s1823 + $0x10] sm:$0xff]
        %v1827 = vld [vmem:[%s1823 + $0x18] sm:$0xff]
        %v1828 = vld [vmem:[%s1823 + $0x20] sm:$0xff]
        %v1829 = vld [vmem:[%s1823 + $0x28] sm:$0xff]
        %v1830 = vld [vmem:[%s1823 + $0x30] sm:$0xff]
        %v1831 = vld [vmem:[%s1823 + $0x38] sm:$0xff]
        %v1832 = vld [vmem:[%s1823 + $0x40] sm:$0xff]
        %v1833 = vpack.c.bf16 %v1825, %v1824
        %v1834 = vpack.c.bf16 %v1827, %v1826
        %v1835 = vpack.c.bf16 %v1829, %v1828
        %v1836 = vpack.c.bf16 %v1831, %v1830
        %v1837 = vpack.c.bf16 %v1832, %v1832
        %v1838 = vld [vmem:[%s2 + $0x2] sm:$0x1]
        %v1839 = vlaneseq
        %v1840 = vshrl.u32 %v1839, 7
        %v1841 = vsub.s32 0, %v1840
        %v1842 = vrot.slane %v1838, %v1841
        %v1844 = vsel %vm1263, %v1819, 0
        %v1847 = vsel %vm1263, %v1820, 0
        %v1850 = vsel %vm1263, %v1821, 0
        %v1853 = vsel %vm1263, %v1822, 0
        %v1856 = vsel %vm1276, %v1837, 0
        %1858 = vmatprep.subr.bf16.mxu0 0
        %1859 = vmatpush1.bf16.msra.mxu0 %v1833
        %1860 = vmatprep.subr.bf16.mxu0 0
        %1861 = vmatpush1.bf16.msra.mxu0 %v1834
        %1862 = vmatprep.subr.bf16.mxu0 0
        %1863 = vmatpush1.bf16.msra.mxu0 %v1835
        %1864 = vmatprep.subr.bf16.mxu0 0
        %1865 = vmatpush1.bf16.msra.mxu0 %v1836
        %1866 = vmatprep.subr.bf16.mxu0 0
        %1867 = vmatpush1.bf16.msra.mxu0 %v1856
        %1868 = vmatprep.subr.bf16.mxu0 0
        %1869 = vmatpush1.bf16.msra.mxu0 0
        %1870 = vmatprep.subr.bf16.mxu0 0
        %1871 = vmatpush1.bf16.msra.mxu0 0
        %1872 = vmatprep.subr.bf16.mxu0 0
        %1873 = vmatpush1.bf16.msra.mxu0 0
        %1874 = vmatprep.subr.bf16.mxu0 0
        %1875 = vmatpush1.bf16.msra.mxu0 0
        %1876 = vmatprep.subr.bf16.mxu0 0
        %1877 = vmatpush1.bf16.msra.mxu0 0
        %1878 = vmatprep.subr.bf16.mxu0 0
        %1879 = vmatpush1.bf16.msra.mxu0 0
        %1880 = vmatprep.subr.bf16.mxu0 0
        %1881 = vmatpush1.bf16.msra.mxu0 0
        %1882 = vmatprep.subr.bf16.mxu0 0
        %1883 = vmatpush1.bf16.msra.mxu0 0
        %1884 = vmatprep.subr.bf16.mxu0 0
        %1885 = vmatpush1.bf16.msra.mxu0 0
        %1886 = vmatprep.subr.bf16.mxu0 0
        %1887 = vmatpush1.bf16.msra.mxu0 0
        %1888 = vmatprep.subr.bf16.mxu0 0
        %1889 = vmatpush1.bf16.msra.mxu0 0
        %1890 = vmatprep.mubr.bf16.mxu0 0
        %1891 = vmatmul.mubr.bf16.gmra.mrb[0].mxu0 %v1844
        %v1892 = vpop.f32.mrb[0].mxu0
        %v1893 = vadd.f32 %v1842, %v1892
        %v1894 = vpop.f32.mrb[0].mxu0
        %v1895 = vpop.f32.mrb[0].mxu0
        %v1896 = vadd.f32 %v1842, %v1895
        %v1897 = vpop.f32.mrb[0].mxu0
        %1898 = vmatprep.mubr.bf16.mxu0 0
        %1899 = vmatmul.mubr.bf16.gmra.mrb[0].mxu0 %v1847
        %v1900 = vpop.f32.mrb[0].mxu0
        %v1901 = vadd.f32 %v1842, %v1900
        %v1902 = vpop.f32.mrb[0].mxu0
        %v1903 = vpop.f32.mrb[0].mxu0
        %v1904 = vadd.f32 %v1842, %v1903
        %v1905 = vpop.f32.mrb[0].mxu0
        %1906 = vmatprep.mubr.bf16.mxu0 0
        %1907 = vmatmul.mubr.bf16.gmra.mrb[0].mxu0 %v1850
        %v1908 = vpop.f32.mrb[0].mxu0
        %v1909 = vadd.f32 %v1842, %v1908
        %v1910 = vpop.f32.mrb[0].mxu0
        %v1911 = vpop.f32.mrb[0].mxu0
        %v1912 = vadd.f32 %v1842, %v1911
        %v1913 = vpop.f32.mrb[0].mxu0
        %1914 = vmatprep.mubr.bf16.mxu0 0
        %1915 = vmatmul.mubr.bf16.gmra.mrb[0].mxu0 %v1853
        %v1916 = vpop.f32.mrb[0].mxu0
        %v1917 = vadd.f32 %v1842, %v1916
        %v1918 = vpop.f32.mrb[0].mxu0
        %v1919 = vpop.f32.mrb[0].mxu0
        %v1920 = vadd.f32 %v1842, %v1919
        %v1921 = vpop.f32.mrb[0].mxu0
        %1922 = vdwg.mxu0
        %1931 = vrot.lane.b32.xlu0 %v1893, 8
        %v1932 = vpop.permute.xlu0 %1931
        %1933 = vrot.lane.b32.xlu0 %v1896, 8
        %v1934 = vpop.permute.xlu0 %1933
        %1935 = vrot.lane.b32.xlu0 %v1901, 8
        %v1936 = vpop.permute.xlu0 %1935
        %1937 = vrot.lane.b32.xlu0 %v1904, 8
        %v1938 = vpop.permute.xlu0 %1937
        %1939 = vrot.lane.b32.xlu0 %v1909, 8
        %v1940 = vpop.permute.xlu0 %1939
        %1941 = vrot.lane.b32.xlu0 %v1912, 8
        %v1942 = vpop.permute.xlu0 %1941
        %1943 = vrot.lane.b32.xlu0 %v1917, 8
        %v1944 = vpop.permute.xlu0 %1943
        %1945 = vrot.lane.b32.xlu0 %v1920, 8
        %v1946 = vpop.permute.xlu0 %1945
        %vm1955 = vcmask 80960
        %1956 = vst.msk [vmem:[#allocation3] sm:$0xff] %vm1955, %v1932
        %1957 = vst.msk [vmem:[#allocation3 + $0x8] sm:$0xff] %vm1955, %v1934
        %1958 = vst.msk [vmem:[#allocation3 + $0x10] sm:$0xff] %vm1955, %v1936
        %1959 = vst.msk [vmem:[#allocation3 + $0x18] sm:$0xff] %vm1955, %v1938
        %1960 = vst.msk [vmem:[#allocation3 + $0x20] sm:$0xff] %vm1955, %v1940
        %1961 = vst.msk [vmem:[#allocation3 + $0x28] sm:$0xff] %vm1955, %v1942
        %1962 = vst.msk [vmem:[#allocation3 + $0x30] sm:$0xff] %vm1955, %v1944
        %1963 = vst.msk [vmem:[#allocation3 + $0x38] sm:$0xff] %vm1955, %v1946
        %v1964 = vld [vmem:[%s2 + $0x8] sm:$0x1]
        %v1965 = vld [vmem:[%s2 + $0xc] sm:$0x1]
        %v1966 = vld [vmem:[#allocation3] sm:$0xff]
        %v1967 = vld [vmem:[#allocation3 + $0x8] sm:$0xff]
        %v1968 = vld [vmem:[#allocation3 + $0x10] sm:$0xff]
        %v1969 = vld [vmem:[#allocation3 + $0x18] sm:$0xff]
        %v1970 = vld [vmem:[#allocation3 + $0x20] sm:$0xff]
        %v1971 = vld [vmem:[#allocation3 + $0x28] sm:$0xff]
        %v1972 = vld [vmem:[#allocation3 + $0x30] sm:$0xff]
        %v1973 = vld [vmem:[#allocation3 + $0x38] sm:$0xff]
        %v1974 = vlaneseq
        %v1975 = vshrl.u32 %v1974, 7
        %v1976 = vsub.s32 0, %v1975
        %v1977 = vrot.slane %v1964, %v1976
        %v1978 = vmul.f32 %v1966, %v1977
        %v1979 = vmul.f32 %v1967, %v1977
        %v1980 = vmul.f32 %v1968, %v1977
        %v1981 = vmul.f32 %v1969, %v1977
        %v1982 = vmul.f32 %v1970, %v1977
        %v1983 = vmul.f32 %v1971, %v1977
        %v1984 = vmul.f32 %v1972, %v1977
        %v1985 = vmul.f32 %v1973, %v1977
        %v1986 = vlaneseq
        %v1987 = vshrl.u32 %v1986, 7
        %v1988 = vsub.s32 0, %v1987
        %v1989 = vrot.slane %v1965, %v1988
        %v1990 = vadd.f32 %v1978, %v1989
        %v1991 = vadd.f32 %v1979, %v1989
        %v1992 = vadd.f32 %v1980, %v1989
        %v1993 = vadd.f32 %v1981, %v1989
        %v1994 = vadd.f32 %v1982, %v1989
        %v1995 = vadd.f32 %v1983, %v1989
        %v1996 = vadd.f32 %v1984, %v1989
        %v1997 = vadd.f32 %v1985, %v1989
        %v1998 = vmax.f32 %v1990, 0.0
        %v1999 = vmax.f32 %v1991, 0.0
        %v2000 = vmax.f32 %v1992, 0.0
        %v2001 = vmax.f32 %v1993, 0.0
        %v2002 = vmax.f32 %v1994, 0.0
        %v2003 = vmax.f32 %v1995, 0.0
        %v2004 = vmax.f32 %v1996, 0.0
        %v2005 = vmax.f32 %v1997, 0.0
        %vm2006 = vcmask 80896
        %2007 = vst.msk [vmem:[%s281 + $0x1] sm:$0xff] %vm2006, %v1998
        %2008 = vst.msk [vmem:[%s281 + $0x11] sm:$0xff] %vm2006, %v1999
        %2009 = vst.msk [vmem:[%s281 + $0x21] sm:$0xff] %vm2006, %v2000
        %2010 = vst.msk [vmem:[%s281 + $0x31] sm:$0xff] %vm2006, %v2001
        %2011 = vst.msk [vmem:[%s281 + $0x41] sm:$0xff] %vm2006, %v2002
        %2012 = vst.msk [vmem:[%s281 + $0x51] sm:$0xff] %vm2006, %v2003
        %2013 = vst.msk [vmem:[%s281 + $0x61] sm:$0xff] %vm2006, %v2004
        %2014 = vst.msk [vmem:[%s281 + $0x71] sm:$0xff] %vm2006, %v2005
        %v2015 = vld [vmem:[#allocation2] sm:$0xff]
        %v2016 = vld [vmem:[#allocation2 + $0x10] sm:$0xff]
        %v2017 = vld [vmem:[#allocation2 + $0x20] sm:$0xff]
        %v2018 = vld [vmem:[#allocation2 + $0x30] sm:$0xff]
        %v2019 = vld [vmem:[#allocation2 + $0x40] sm:$0xff]
        %v2020 = vld [vmem:[#allocation2 + $0x50] sm:$0xff]
        %v2021 = vld [vmem:[#allocation2 + $0x60] sm:$0xff]
        %v2022 = vld [vmem:[#allocation2 + $0x70] sm:$0xff]
        %2023 = vst.msk [vmem:[#allocation4] sm:$0xff] %vm2006, %v2015
        %2024 = vst.msk [vmem:[#allocation4 + $0x8] sm:$0xff] %vm2006, %v2016
        %2025 = vst.msk [vmem:[#allocation4 + $0x10] sm:$0xff] %vm2006, %v2017
        %2026 = vst.msk [vmem:[#allocation4 + $0x18] sm:$0xff] %vm2006, %v2018
        %2027 = vst.msk [vmem:[#allocation4 + $0x20] sm:$0xff] %vm2006, %v2019
        %2028 = vst.msk [vmem:[#allocation4 + $0x28] sm:$0xff] %vm2006, %v2020
        %2029 = vst.msk [vmem:[#allocation4 + $0x30] sm:$0xff] %vm2006, %v2021
        %2030 = vst.msk [vmem:[#allocation4 + $0x38] sm:$0xff] %vm2006, %v2022
        %v2031 = vld [vmem:[#allocation2 + $0x1] sm:$0xff]
        %v2032 = vld [vmem:[#allocation2 + $0x11] sm:$0xff]
        %v2033 = vld [vmem:[#allocation2 + $0x21] sm:$0xff]
        %v2034 = vld [vmem:[#allocation2 + $0x31] sm:$0xff]
        %v2035 = vld [vmem:[#allocation2 + $0x41] sm:$0xff]
        %v2036 = vld [vmem:[#allocation2 + $0x51] sm:$0xff]
        %v2037 = vld [vmem:[#allocation2 + $0x61] sm:$0xff]
        %v2038 = vld [vmem:[#allocation2 + $0x71] sm:$0xff]
        %2047 = vrot.lane.b32.xlu0 %v2031, 10
        %v2048 = vpop.permute.xlu0 %2047
        %2049 = vrot.lane.b32.xlu0 %v2032, 10
        %v2050 = vpop.permute.xlu0 %2049
        %2051 = vrot.lane.b32.xlu0 %v2033, 10
        %v2052 = vpop.permute.xlu0 %2051
        %2053 = vrot.lane.b32.xlu0 %v2034, 10
        %v2054 = vpop.permute.xlu0 %2053
        %2055 = vrot.lane.b32.xlu0 %v2035, 10
        %v2056 = vpop.permute.xlu0 %2055
        %2057 = vrot.lane.b32.xlu0 %v2036, 10
        %v2058 = vpop.permute.xlu0 %2057
        %2059 = vrot.lane.b32.xlu0 %v2037, 10
        %v2060 = vpop.permute.xlu0 %2059
        %2061 = vrot.lane.b32.xlu0 %v2038, 10
        %v2062 = vpop.permute.xlu0 %2061
        %vm2071 = vcmask 162896
        %2072 = vst.msk [vmem:[#allocation4] sm:$0xff] %vm2071, %v2048
        %2073 = vst.msk [vmem:[#allocation4 + $0x8] sm:$0xff] %vm2071, %v2050
        %2074 = vst.msk [vmem:[#allocation4 + $0x10] sm:$0xff] %vm2071, %v2052
        %2075 = vst.msk [vmem:[#allocation4 + $0x18] sm:$0xff] %vm2071, %v2054
        %2076 = vst.msk [vmem:[#allocation4 + $0x20] sm:$0xff] %vm2071, %v2056
        %2077 = vst.msk [vmem:[#allocation4 + $0x28] sm:$0xff] %vm2071, %v2058
        %2078 = vst.msk [vmem:[#allocation4 + $0x30] sm:$0xff] %vm2071, %v2060
        %2079 = vst.msk [vmem:[#allocation4 + $0x38] sm:$0xff] %vm2071, %v2062
        %v2080 = vld [vmem:[#allocation2 + $0x2] sm:$0xff]
        %v2081 = vld [vmem:[#allocation2 + $0x12] sm:$0xff]
        %v2082 = vld [vmem:[#allocation2 + $0x22] sm:$0xff]
        %v2083 = vld [vmem:[#allocation2 + $0x32] sm:$0xff]
        %v2084 = vld [vmem:[#allocation2 + $0x42] sm:$0xff]
        %v2085 = vld [vmem:[#allocation2 + $0x52] sm:$0xff]
        %v2086 = vld [vmem:[#allocation2 + $0x62] sm:$0xff]
        %v2087 = vld [vmem:[#allocation2 + $0x72] sm:$0xff]
        %2096 = vrot.lane.b32.xlu0 %v2080, 20
        %v2097 = vpop.permute.xlu0 %2096
        %2098 = vrot.lane.b32.xlu0 %v2081, 20
        %v2099 = vpop.permute.xlu0 %2098
        %2100 = vrot.lane.b32.xlu0 %v2082, 20
        %v2101 = vpop.permute.xlu0 %2100
        %2102 = vrot.lane.b32.xlu0 %v2083, 20
        %v2103 = vpop.permute.xlu0 %2102
        %2104 = vrot.lane.b32.xlu0 %v2084, 20
        %v2105 = vpop.permute.xlu0 %2104
        %2106 = vrot.lane.b32.xlu0 %v2085, 20
        %v2107 = vpop.permute.xlu0 %2106
        %2108 = vrot.lane.b32.xlu0 %v2086, 20
        %v2109 = vpop.permute.xlu0 %2108
        %2110 = vrot.lane.b32.xlu0 %v2087, 20
        %v2111 = vpop.permute.xlu0 %2110
        %vm2120 = vcmask 244896
        %2121 = vst.msk [vmem:[#allocation4] sm:$0xff] %vm2120, %v2097
        %2122 = vst.msk [vmem:[#allocation4 + $0x8] sm:$0xff] %vm2120, %v2099
        %2123 = vst.msk [vmem:[#allocation4 + $0x10] sm:$0xff] %vm2120, %v2101
        %2124 = vst.msk [vmem:[#allocation4 + $0x18] sm:$0xff] %vm2120, %v2103
        %2125 = vst.msk [vmem:[#allocation4 + $0x20] sm:$0xff] %vm2120, %v2105
        %2126 = vst.msk [vmem:[#allocation4 + $0x28] sm:$0xff] %vm2120, %v2107
        %2127 = vst.msk [vmem:[#allocation4 + $0x30] sm:$0xff] %vm2120, %v2109
        %2128 = vst.msk [vmem:[#allocation4 + $0x38] sm:$0xff] %vm2120, %v2111
        %v2129 = vld [vmem:[%s281] sm:$0xff]
        %v2130 = vld [vmem:[%s281 + $0x10] sm:$0xff]
        %v2131 = vld [vmem:[%s281 + $0x20] sm:$0xff]
        %v2132 = vld [vmem:[%s281 + $0x30] sm:$0xff]
        %v2133 = vld [vmem:[%s281 + $0x40] sm:$0xff]
        %v2134 = vld [vmem:[%s281 + $0x50] sm:$0xff]
        %v2135 = vld [vmem:[%s281 + $0x60] sm:$0xff]
        %v2136 = vld [vmem:[%s281 + $0x70] sm:$0xff]
        %2145 = vrot.lane.b32.xlu0 %v2129, 30
        %v2146 = vpop.permute.xlu0 %2145
        %2147 = vrot.lane.b32.xlu0 %v2130, 30
        %v2148 = vpop.permute.xlu0 %2147
        %2149 = vrot.lane.b32.xlu0 %v2131, 30
        %v2150 = vpop.permute.xlu0 %2149
        %2151 = vrot.lane.b32.xlu0 %v2132, 30
        %v2152 = vpop.permute.xlu0 %2151
        %2153 = vrot.lane.b32.xlu0 %v2133, 30
        %v2154 = vpop.permute.xlu0 %2153
        %2155 = vrot.lane.b32.xlu0 %v2134, 30
        %v2156 = vpop.permute.xlu0 %2155
        %2157 = vrot.lane.b32.xlu0 %v2135, 30
        %v2158 = vpop.permute.xlu0 %2157
        %2159 = vrot.lane.b32.xlu0 %v2136, 30
        %v2160 = vpop.permute.xlu0 %2159
        %vm2169 = vcmask 326896
        %2170 = vst.msk [vmem:[#allocation4] sm:$0xff] %vm2169, %v2146
        %2171 = vst.msk [vmem:[#allocation4 + $0x8] sm:$0xff] %vm2169, %v2148
        %2172 = vst.msk [vmem:[#allocation4 + $0x10] sm:$0xff] %vm2169, %v2150
        %2173 = vst.msk [vmem:[#allocation4 + $0x18] sm:$0xff] %vm2169, %v2152
        %2174 = vst.msk [vmem:[#allocation4 + $0x20] sm:$0xff] %vm2169, %v2154
        %2175 = vst.msk [vmem:[#allocation4 + $0x28] sm:$0xff] %vm2169, %v2156
        %2176 = vst.msk [vmem:[#allocation4 + $0x30] sm:$0xff] %vm2169, %v2158
        %2177 = vst.msk [vmem:[#allocation4 + $0x38] sm:$0xff] %vm2169, %v2160
        %v2178 = vld [vmem:[%s281 + $0x1] sm:$0xff]
        %v2179 = vld [vmem:[%s281 + $0x11] sm:$0xff]
        %v2180 = vld [vmem:[%s281 + $0x21] sm:$0xff]
        %v2181 = vld [vmem:[%s281 + $0x31] sm:$0xff]
        %v2182 = vld [vmem:[%s281 + $0x41] sm:$0xff]
        %v2183 = vld [vmem:[%s281 + $0x51] sm:$0xff]
        %v2184 = vld [vmem:[%s281 + $0x61] sm:$0xff]
        %v2185 = vld [vmem:[%s281 + $0x71] sm:$0xff]
        %2194 = vrot.lane.b32.xlu0 %v2178, 40
        %v2195 = vpop.permute.xlu0 %2194
        %2196 = vrot.lane.b32.xlu0 %v2179, 40
        %v2197 = vpop.permute.xlu0 %2196
        %2198 = vrot.lane.b32.xlu0 %v2180, 40
        %v2199 = vpop.permute.xlu0 %2198
        %2200 = vrot.lane.b32.xlu0 %v2181, 40
        %v2201 = vpop.permute.xlu0 %2200
        %2202 = vrot.lane.b32.xlu0 %v2182, 40
        %v2203 = vpop.permute.xlu0 %2202
        %2204 = vrot.lane.b32.xlu0 %v2183, 40
        %v2205 = vpop.permute.xlu0 %2204
        %2206 = vrot.lane.b32.xlu0 %v2184, 40
        %v2207 = vpop.permute.xlu0 %2206
        %2208 = vrot.lane.b32.xlu0 %v2185, 40
        %v2209 = vpop.permute.xlu0 %2208
        %vm2218 = vcmask 408896
        %2219 = vst.msk [vmem:[#allocation4] sm:$0xff] %vm2218, %v2195
        %2220 = vst.msk [vmem:[#allocation4 + $0x8] sm:$0xff] %vm2218, %v2197
        %2221 = vst.msk [vmem:[#allocation4 + $0x10] sm:$0xff] %vm2218, %v2199
        %2222 = vst.msk [vmem:[#allocation4 + $0x18] sm:$0xff] %vm2218, %v2201
        %2223 = vst.msk [vmem:[#allocation4 + $0x20] sm:$0xff] %vm2218, %v2203
        %2224 = vst.msk [vmem:[#allocation4 + $0x28] sm:$0xff] %vm2218, %v2205
        %2225 = vst.msk [vmem:[#allocation4 + $0x30] sm:$0xff] %vm2218, %v2207
        %2226 = vst.msk [vmem:[#allocation4 + $0x38] sm:$0xff] %vm2218, %v2209
        %v2227 = vld [vmem:[%s281 + $0x2] sm:$0xff]
        %v2228 = vld [vmem:[%s281 + $0x12] sm:$0xff]
        %v2229 = vld [vmem:[%s281 + $0x22] sm:$0xff]
        %v2230 = vld [vmem:[%s281 + $0x32] sm:$0xff]
        %v2231 = vld [vmem:[%s281 + $0x42] sm:$0xff]
        %v2232 = vld [vmem:[%s281 + $0x52] sm:$0xff]
        %v2233 = vld [vmem:[%s281 + $0x62] sm:$0xff]
        %v2234 = vld [vmem:[%s281 + $0x72] sm:$0xff]
        %2243 = vrot.lane.b32.xlu0 %v2227, 50
        %v2244 = vpop.permute.xlu0 %2243
        %2245 = vrot.lane.b32.xlu0 %v2228, 50
        %v2246 = vpop.permute.xlu0 %2245
        %2247 = vrot.lane.b32.xlu0 %v2229, 50
        %v2248 = vpop.permute.xlu0 %2247
        %2249 = vrot.lane.b32.xlu0 %v2230, 50
        %v2250 = vpop.permute.xlu0 %2249
        %2251 = vrot.lane.b32.xlu0 %v2231, 50
        %v2252 = vpop.permute.xlu0 %2251
        %2253 = vrot.lane.b32.xlu0 %v2232, 50
        %v2254 = vpop.permute.xlu0 %2253
        %2255 = vrot.lane.b32.xlu0 %v2233, 50
        %v2256 = vpop.permute.xlu0 %2255
        %2257 = vrot.lane.b32.xlu0 %v2234, 50
        %v2258 = vpop.permute.xlu0 %2257
        %vm2267 = vcmask 490896
        %2268 = vst.msk [vmem:[#allocation4] sm:$0xff] %vm2267, %v2244
        %2269 = vst.msk [vmem:[#allocation4 + $0x8] sm:$0xff] %vm2267, %v2246
        %2270 = vst.msk [vmem:[#allocation4 + $0x10] sm:$0xff] %vm2267, %v2248
        %2271 = vst.msk [vmem:[#allocation4 + $0x18] sm:$0xff] %vm2267, %v2250
        %2272 = vst.msk [vmem:[#allocation4 + $0x20] sm:$0xff] %vm2267, %v2252
        %2273 = vst.msk [vmem:[#allocation4 + $0x28] sm:$0xff] %vm2267, %v2254
        %2274 = vst.msk [vmem:[#allocation4 + $0x30] sm:$0xff] %vm2267, %v2256
        %2275 = vst.msk [vmem:[#allocation4 + $0x38] sm:$0xff] %vm2267, %v2258
        %v2276 = vld [vmem:[%s551] sm:$0xff]
        %v2277 = vld [vmem:[%s551 + $0x10] sm:$0xff]
        %v2278 = vld [vmem:[%s551 + $0x20] sm:$0xff]
        %v2279 = vld [vmem:[%s551 + $0x30] sm:$0xff]
        %v2280 = vld [vmem:[%s551 + $0x40] sm:$0xff]
        %v2281 = vld [vmem:[%s551 + $0x50] sm:$0xff]
        %v2282 = vld [vmem:[%s551 + $0x60] sm:$0xff]
        %v2283 = vld [vmem:[%s551 + $0x70] sm:$0xff]
        %2292 = vrot.lane.b32.xlu0 %v2276, 60
        %v2293 = vpop.permute.xlu0 %2292
        %2294 = vrot.lane.b32.xlu0 %v2277, 60
        %v2295 = vpop.permute.xlu0 %2294
        %2296 = vrot.lane.b32.xlu0 %v2278, 60
        %v2297 = vpop.permute.xlu0 %2296
        %2298 = vrot.lane.b32.xlu0 %v2279, 60
        %v2299 = vpop.permute.xlu0 %2298
        %2300 = vrot.lane.b32.xlu0 %v2280, 60
        %v2301 = vpop.permute.xlu0 %2300
        %2302 = vrot.lane.b32.xlu0 %v2281, 60
        %v2303 = vpop.permute.xlu0 %2302
        %2304 = vrot.lane.b32.xlu0 %v2282, 60
        %v2305 = vpop.permute.xlu0 %2304
        %2306 = vrot.lane.b32.xlu0 %v2283, 60
        %v2307 = vpop.permute.xlu0 %2306
        %vm2316 = vcmask 572896
        %2317 = vst.msk [vmem:[#allocation4] sm:$0xff] %vm2316, %v2293
        %2318 = vst.msk [vmem:[#allocation4 + $0x8] sm:$0xff] %vm2316, %v2295
        %2319 = vst.msk [vmem:[#allocation4 + $0x10] sm:$0xff] %vm2316, %v2297
        %2320 = vst.msk [vmem:[#allocation4 + $0x18] sm:$0xff] %vm2316, %v2299
        %2321 = vst.msk [vmem:[#allocation4 + $0x20] sm:$0xff] %vm2316, %v2301
        %2322 = vst.msk [vmem:[#allocation4 + $0x28] sm:$0xff] %vm2316, %v2303
        %2323 = vst.msk [vmem:[#allocation4 + $0x30] sm:$0xff] %vm2316, %v2305
        %2324 = vst.msk [vmem:[#allocation4 + $0x38] sm:$0xff] %vm2316, %v2307
        %v2325 = vld [vmem:[%s551 + $0x1] sm:$0xff]
        %v2326 = vld [vmem:[%s551 + $0x11] sm:$0xff]
        %v2327 = vld [vmem:[%s551 + $0x21] sm:$0xff]
        %v2328 = vld [vmem:[%s551 + $0x31] sm:$0xff]
        %v2329 = vld [vmem:[%s551 + $0x41] sm:$0xff]
        %v2330 = vld [vmem:[%s551 + $0x51] sm:$0xff]
        %v2331 = vld [vmem:[%s551 + $0x61] sm:$0xff]
        %v2332 = vld [vmem:[%s551 + $0x71] sm:$0xff]
        %2341 = vrot.lane.b32.xlu0 %v2325, 70
        %v2342 = vpop.permute.xlu0 %2341
        %2343 = vrot.lane.b32.xlu0 %v2326, 70
        %v2344 = vpop.permute.xlu0 %2343
        %2345 = vrot.lane.b32.xlu0 %v2327, 70
        %v2346 = vpop.permute.xlu0 %2345
        %2347 = vrot.lane.b32.xlu0 %v2328, 70
        %v2348 = vpop.permute.xlu0 %2347
        %2349 = vrot.lane.b32.xlu0 %v2329, 70
        %v2350 = vpop.permute.xlu0 %2349
        %2351 = vrot.lane.b32.xlu0 %v2330, 70
        %v2352 = vpop.permute.xlu0 %2351
        %2353 = vrot.lane.b32.xlu0 %v2331, 70
        %v2354 = vpop.permute.xlu0 %2353
        %2355 = vrot.lane.b32.xlu0 %v2332, 70
        %v2356 = vpop.permute.xlu0 %2355
        %vm2365 = vcmask 654896
        %2366 = vst.msk [vmem:[#allocation4] sm:$0xff] %vm2365, %v2342
        %2367 = vst.msk [vmem:[#allocation4 + $0x8] sm:$0xff] %vm2365, %v2344
        %2368 = vst.msk [vmem:[#allocation4 + $0x10] sm:$0xff] %vm2365, %v2346
        %2369 = vst.msk [vmem:[#allocation4 + $0x18] sm:$0xff] %vm2365, %v2348
        %2370 = vst.msk [vmem:[#allocation4 + $0x20] sm:$0xff] %vm2365, %v2350
        %2371 = vst.msk [vmem:[#allocation4 + $0x28] sm:$0xff] %vm2365, %v2352
        %2372 = vst.msk [vmem:[#allocation4 + $0x30] sm:$0xff] %vm2365, %v2354
        %2373 = vst.msk [vmem:[#allocation4 + $0x38] sm:$0xff] %vm2365, %v2356
        %v2374 = vld [vmem:[%s551 + $0x2] sm:$0xff]
        %v2375 = vld [vmem:[%s551 + $0x12] sm:$0xff]
        %v2376 = vld [vmem:[%s551 + $0x22] sm:$0xff]
        %v2377 = vld [vmem:[%s551 + $0x32] sm:$0xff]
        %v2378 = vld [vmem:[%s551 + $0x42] sm:$0xff]
        %v2379 = vld [vmem:[%s551 + $0x52] sm:$0xff]
        %v2380 = vld [vmem:[%s551 + $0x62] sm:$0xff]
        %v2381 = vld [vmem:[%s551 + $0x72] sm:$0xff]
        %2390 = vrot.lane.b32.xlu0 %v2374, 80
        %v2391 = vpop.permute.xlu0 %2390
        %2392 = vrot.lane.b32.xlu0 %v2375, 80
        %v2393 = vpop.permute.xlu0 %2392
        %2394 = vrot.lane.b32.xlu0 %v2376, 80
        %v2395 = vpop.permute.xlu0 %2394
        %2396 = vrot.lane.b32.xlu0 %v2377, 80
        %v2397 = vpop.permute.xlu0 %2396
        %2398 = vrot.lane.b32.xlu0 %v2378, 80
        %v2399 = vpop.permute.xlu0 %2398
        %2400 = vrot.lane.b32.xlu0 %v2379, 80
        %v2401 = vpop.permute.xlu0 %2400
        %2402 = vrot.lane.b32.xlu0 %v2380, 80
        %v2403 = vpop.permute.xlu0 %2402
        %2404 = vrot.lane.b32.xlu0 %v2381, 80
        %v2405 = vpop.permute.xlu0 %2404
        %vm2414 = vcmask 736896
        %2415 = vst.msk [vmem:[#allocation4] sm:$0xff] %vm2414, %v2391
        %2416 = vst.msk [vmem:[#allocation4 + $0x8] sm:$0xff] %vm2414, %v2393
        %2417 = vst.msk [vmem:[#allocation4 + $0x10] sm:$0xff] %vm2414, %v2395
        %2418 = vst.msk [vmem:[#allocation4 + $0x18] sm:$0xff] %vm2414, %v2397
        %2419 = vst.msk [vmem:[#allocation4 + $0x20] sm:$0xff] %vm2414, %v2399
        %2420 = vst.msk [vmem:[#allocation4 + $0x28] sm:$0xff] %vm2414, %v2401
        %2421 = vst.msk [vmem:[#allocation4 + $0x30] sm:$0xff] %vm2414, %v2403
        %2422 = vst.msk [vmem:[#allocation4 + $0x38] sm:$0xff] %vm2414, %v2405
        %v2423 = vld [vmem:[#allocation4] sm:$0xff]
        %v2424 = vld [vmem:[#allocation4 + $0x8] sm:$0xff]
        %v2425 = vld [vmem:[#allocation4 + $0x10] sm:$0xff]
        %v2426 = vld [vmem:[#allocation4 + $0x18] sm:$0xff]
        %v2427 = vld [vmem:[#allocation4 + $0x20] sm:$0xff]
        %v2428 = vld [vmem:[#allocation4 + $0x28] sm:$0xff]
        %v2429 = vld [vmem:[#allocation4 + $0x30] sm:$0xff]
        %v2430 = vld [vmem:[#allocation4 + $0x38] sm:$0xff]
        %v2431 = vpack.c.bf16 %v2424, %v2423
        %v2432 = vpack.c.bf16 %v2426, %v2425
        %v2433 = vpack.c.bf16 %v2428, %v2427
        %v2434 = vpack.c.bf16 %v2430, %v2429
        %s2435 = scalar_lea.vmem %s1, 384
        %v2436 = vld [vmem:[%s2435] sm:$0xff]
        %v2437 = vld [vmem:[%s2435 + $0x8] sm:$0xff]
        %v2438 = vld [vmem:[%s2435 + $0x10] sm:$0xff]
        %v2439 = vld [vmem:[%s2435 + $0x18] sm:$0xff]
        %v2440 = vld [vmem:[%s2435 + $0x20] sm:$0xff]
        %v2441 = vld [vmem:[%s2435 + $0x28] sm:$0xff]
        %v2442 = vld [vmem:[%s2435 + $0x30] sm:$0xff]
        %v2443 = vld [vmem:[%s2435 + $0x38] sm:$0xff]
        %v2444 = vld [vmem:[%s2435 + $0x40] sm:$0xff]
        %v2445 = vld [vmem:[%s2435 + $0x48] sm:$0xff]
        %v2446 = vld [vmem:[%s2435 + $0x50] sm:$0xff]
        %v2447 = vld [vmem:[%s2435 + $0x58] sm:$0x3]
        %v2448 = vpack.c.bf16 %v2437, %v2436
        %v2449 = vpack.c.bf16 %v2439, %v2438
        %v2450 = vpack.c.bf16 %v2441, %v2440
        %v2451 = vpack.c.bf16 %v2443, %v2442
        %v2452 = vpack.c.bf16 %v2445, %v2444
        %v2453 = vpack.c.bf16 %v2447, %v2446
        %v2454 = vld [vmem:[%s2 + $0x3] sm:$0x1]
        %v2455 = vlaneseq
        %v2456 = vshrl.u32 %v2455, 7
        %v2457 = vsub.s32 0, %v2456
        %v2458 = vrot.slane %v2454, %v2457
        %vm2459 = vcmask 736256
        %v2461 = vsel %vm2459, %v2431, 0
        %v2464 = vsel %vm2459, %v2432, 0
        %v2467 = vsel %vm2459, %v2433, 0
        %v2470 = vsel %vm2459, %v2434, 0
        %vm2472 = vcmask 1044480
        %v2474 = vsel %vm2472, %v2453, 0
        %2476 = vmatprep.subr.bf16.mxu0 0
        %2477 = vmatpush1.bf16.msra.mxu0 %v2448
        %2478 = vmatprep.subr.bf16.mxu0 0
        %2479 = vmatpush1.bf16.msra.mxu0 %v2449
        %2480 = vmatprep.subr.bf16.mxu0 0
        %2481 = vmatpush1.bf16.msra.mxu0 %v2450
        %2482 = vmatprep.subr.bf16.mxu0 0
        %2483 = vmatpush1.bf16.msra.mxu0 %v2451
        %2484 = vmatprep.subr.bf16.mxu0 0
        %2485 = vmatpush1.bf16.msra.mxu0 %v2452
        %2486 = vmatprep.subr.bf16.mxu0 0
        %2487 = vmatpush1.bf16.msra.mxu0 %v2474
        %2488 = vmatprep.subr.bf16.mxu0 0
        %2489 = vmatpush1.bf16.msra.mxu0 0
        %2490 = vmatprep.subr.bf16.mxu0 0
        %2491 = vmatpush1.bf16.msra.mxu0 0
        %2492 = vmatprep.subr.bf16.mxu0 0
        %2493 = vmatpush1.bf16.msra.mxu0 0
        %2494 = vmatprep.subr.bf16.mxu0 0
        %2495 = vmatpush1.bf16.msra.mxu0 0
        %2496 = vmatprep.subr.bf16.mxu0 0
        %2497 = vmatpush1.bf16.msra.mxu0 0
        %2498 = vmatprep.subr.bf16.mxu0 0
        %2499 = vmatpush1.bf16.msra.mxu0 0
        %2500 = vmatprep.subr.bf16.mxu0 0
        %2501 = vmatpush1.bf16.msra.mxu0 0
        %2502 = vmatprep.subr.bf16.mxu0 0
        %2503 = vmatpush1.bf16.msra.mxu0 0
        %2504 = vmatprep.subr.bf16.mxu0 0
        %2505 = vmatpush1.bf16.msra.mxu0 0
        %2506 = vmatprep.subr.bf16.mxu0 0
        %2507 = vmatpush1.bf16.msra.mxu0 0
        %2508 = vmatprep.mubr.bf16.mxu0 0
        %2509 = vmatmul.mubr.bf16.gmra.mrb[0].mxu0 %v2461
        %v2510 = vpop.f32.mrb[0].mxu0
        %v2511 = vadd.f32 %v2458, %v2510
        %v2512 = vpop.f32.mrb[0].mxu0
        %v2513 = vpop.f32.mrb[0].mxu0
        %v2514 = vadd.f32 %v2458, %v2513
        %v2515 = vpop.f32.mrb[0].mxu0
        %2516 = vmatprep.mubr.bf16.mxu0 0
        %2517 = vmatmul.mubr.bf16.gmra.mrb[0].mxu0 %v2464
        %v2518 = vpop.f32.mrb[0].mxu0
        %v2519 = vadd.f32 %v2458, %v2518
        %v2520 = vpop.f32.mrb[0].mxu0
        %v2521 = vpop.f32.mrb[0].mxu0
        %v2522 = vadd.f32 %v2458, %v2521
        %v2523 = vpop.f32.mrb[0].mxu0
        %2524 = vmatprep.mubr.bf16.mxu0 0
        %2525 = vmatmul.mubr.bf16.gmra.mrb[0].mxu0 %v2467
        %v2526 = vpop.f32.mrb[0].mxu0
        %v2527 = vadd.f32 %v2458, %v2526
        %v2528 = vpop.f32.mrb[0].mxu0
        %v2529 = vpop.f32.mrb[0].mxu0
        %v2530 = vadd.f32 %v2458, %v2529
        %v2531 = vpop.f32.mrb[0].mxu0
        %2532 = vmatprep.mubr.bf16.mxu0 0
        %2533 = vmatmul.mubr.bf16.gmra.mrb[0].mxu0 %v2470
        %v2534 = vpop.f32.mrb[0].mxu0
        %v2535 = vadd.f32 %v2458, %v2534
        %v2536 = vpop.f32.mrb[0].mxu0
        %v2537 = vpop.f32.mrb[0].mxu0
        %v2538 = vadd.f32 %v2458, %v2537
        %v2539 = vpop.f32.mrb[0].mxu0
        %2540 = vdwg.mxu0
        %2549 = vrot.lane.b32.xlu0 %v2511, 10
        %v2550 = vpop.permute.xlu0 %2549
        %2551 = vrot.lane.b32.xlu0 %v2514, 10
        %v2552 = vpop.permute.xlu0 %2551
        %2553 = vrot.lane.b32.xlu0 %v2519, 10
        %v2554 = vpop.permute.xlu0 %2553
        %2555 = vrot.lane.b32.xlu0 %v2522, 10
        %v2556 = vpop.permute.xlu0 %2555
        %2557 = vrot.lane.b32.xlu0 %v2527, 10
        %v2558 = vpop.permute.xlu0 %2557
        %2559 = vrot.lane.b32.xlu0 %v2530, 10
        %v2560 = vpop.permute.xlu0 %2559
        %2561 = vrot.lane.b32.xlu0 %v2535, 10
        %v2562 = vpop.permute.xlu0 %2561
        %2563 = vrot.lane.b32.xlu0 %v2538, 10
        %v2564 = vpop.permute.xlu0 %2563
        %vm2573 = vcmask 97360
        %2574 = vst.msk [vmem:[#allocation3] sm:$0xff] %vm2573, %v2550
        %2575 = vst.msk [vmem:[#allocation3 + $0x8] sm:$0xff] %vm2573, %v2552
        %2576 = vst.msk [vmem:[#allocation3 + $0x10] sm:$0xff] %vm2573, %v2554
        %2577 = vst.msk [vmem:[#allocation3 + $0x18] sm:$0xff] %vm2573, %v2556
        %2578 = vst.msk [vmem:[#allocation3 + $0x20] sm:$0xff] %vm2573, %v2558
        %2579 = vst.msk [vmem:[#allocation3 + $0x28] sm:$0xff] %vm2573, %v2560
        %2580 = vst.msk [vmem:[#allocation3 + $0x30] sm:$0xff] %vm2573, %v2562
        %2581 = vst.msk [vmem:[#allocation3 + $0x38] sm:$0xff] %vm2573, %v2564
        %v2582 = vld [vmem:[%s2 + $0x9] sm:$0x1]
        %v2583 = vld [vmem:[%s2 + $0xd] sm:$0x1]
        %v2584 = vld [vmem:[#allocation3] sm:$0xff]
        %v2585 = vld [vmem:[#allocation3 + $0x8] sm:$0xff]
        %v2586 = vld [vmem:[#allocation3 + $0x10] sm:$0xff]
        %v2587 = vld [vmem:[#allocation3 + $0x18] sm:$0xff]
        %v2588 = vld [vmem:[#allocation3 + $0x20] sm:$0xff]
        %v2589 = vld [vmem:[#allocation3 + $0x28] sm:$0xff]
        %v2590 = vld [vmem:[#allocation3 + $0x30] sm:$0xff]
        %v2591 = vld [vmem:[#allocation3 + $0x38] sm:$0xff]
        %v2592 = vlaneseq
        %v2593 = vshrl.u32 %v2592, 7
        %v2594 = vsub.s32 0, %v2593
        %v2595 = vrot.slane %v2582, %v2594
        %v2596 = vmul.f32 %v2584, %v2595
        %v2597 = vmul.f32 %v2585, %v2595
        %v2598 = vmul.f32 %v2586, %v2595
        %v2599 = vmul.f32 %v2587, %v2595
        %v2600 = vmul.f32 %v2588, %v2595
        %v2601 = vmul.f32 %v2589, %v2595
        %v2602 = vmul.f32 %v2590, %v2595
        %v2603 = vmul.f32 %v2591, %v2595
        %v2604 = vlaneseq
        %v2605 = vshrl.u32 %v2604, 7
        %v2606 = vsub.s32 0, %v2605
        %v2607 = vrot.slane %v2583, %v2606
        %v2608 = vadd.f32 %v2596, %v2607
        %v2609 = vadd.f32 %v2597, %v2607
        %v2610 = vadd.f32 %v2598, %v2607
        %v2611 = vadd.f32 %v2599, %v2607
        %v2612 = vadd.f32 %v2600, %v2607
        %v2613 = vadd.f32 %v2601, %v2607
        %v2614 = vadd.f32 %v2602, %v2607
        %v2615 = vadd.f32 %v2603, %v2607
        %v2616 = vmax.f32 %v2608, 0.0
        %v2617 = vmax.f32 %v2609, 0.0
        %v2618 = vmax.f32 %v2610, 0.0
        %v2619 = vmax.f32 %v2611, 0.0
        %v2620 = vmax.f32 %v2612, 0.0
        %v2621 = vmax.f32 %v2613, 0.0
        %v2622 = vmax.f32 %v2614, 0.0
        %v2623 = vmax.f32 %v2615, 0.0
        %vm2624 = vcmask 97280
        %2625 = vst.msk [vmem:[%s281 + $0x1] sm:$0xff] %vm2624, %v2616
        %2626 = vst.msk [vmem:[%s281 + $0x11] sm:$0xff] %vm2624, %v2617
        %2627 = vst.msk [vmem:[%s281 + $0x21] sm:$0xff] %vm2624, %v2618
        %2628 = vst.msk [vmem:[%s281 + $0x31] sm:$0xff] %vm2624, %v2619
        %2629 = vst.msk [vmem:[%s281 + $0x41] sm:$0xff] %vm2624, %v2620
        %2630 = vst.msk [vmem:[%s281 + $0x51] sm:$0xff] %vm2624, %v2621
        %2631 = vst.msk [vmem:[%s281 + $0x61] sm:$0xff] %vm2624, %v2622
        %2632 = vst.msk [vmem:[%s281 + $0x71] sm:$0xff] %vm2624, %v2623
        %v2633 = vld [vmem:[#allocation2] sm:$0xff]
        %v2634 = vld [vmem:[#allocation2 + $0x10] sm:$0xff]
        %v2635 = vld [vmem:[#allocation2 + $0x20] sm:$0xff]
        %v2636 = vld [vmem:[#allocation2 + $0x30] sm:$0xff]
        %v2637 = vld [vmem:[#allocation2 + $0x40] sm:$0xff]
        %v2638 = vld [vmem:[#allocation2 + $0x50] sm:$0xff]
        %v2639 = vld [vmem:[#allocation2 + $0x60] sm:$0xff]
        %v2640 = vld [vmem:[#allocation2 + $0x70] sm:$0xff]
        %2641 = vst.msk [vmem:[#allocation4] sm:$0xff] %vm2624, %v2633
        %2642 = vst.msk [vmem:[#allocation4 + $0x8] sm:$0xff] %vm2624, %v2634
        %2643 = vst.msk [vmem:[#allocation4 + $0x10] sm:$0xff] %vm2624, %v2635
        %2644 = vst.msk [vmem:[#allocation4 + $0x18] sm:$0xff] %vm2624, %v2636
        %2645 = vst.msk [vmem:[#allocation4 + $0x20] sm:$0xff] %vm2624, %v2637
        %2646 = vst.msk [vmem:[#allocation4 + $0x28] sm:$0xff] %vm2624, %v2638
        %2647 = vst.msk [vmem:[#allocation4 + $0x30] sm:$0xff] %vm2624, %v2639
        %2648 = vst.msk [vmem:[#allocation4 + $0x38] sm:$0xff] %vm2624, %v2640
        %v2649 = vld [vmem:[#allocation2 + $0x1] sm:$0xff]
        %v2650 = vld [vmem:[#allocation2 + $0x11] sm:$0xff]
        %v2651 = vld [vmem:[#allocation2 + $0x21] sm:$0xff]
        %v2652 = vld [vmem:[#allocation2 + $0x31] sm:$0xff]
        %v2653 = vld [vmem:[#allocation2 + $0x41] sm:$0xff]
        %v2654 = vld [vmem:[#allocation2 + $0x51] sm:$0xff]
        %v2655 = vld [vmem:[#allocation2 + $0x61] sm:$0xff]
        %v2656 = vld [vmem:[#allocation2 + $0x71] sm:$0xff]
        %2665 = vrot.lane.b32.xlu0 %v2649, 12
        %v2666 = vpop.permute.xlu0 %2665
        %2667 = vrot.lane.b32.xlu0 %v2650, 12
        %v2668 = vpop.permute.xlu0 %2667
        %2669 = vrot.lane.b32.xlu0 %v2651, 12
        %v2670 = vpop.permute.xlu0 %2669
        %2671 = vrot.lane.b32.xlu0 %v2652, 12
        %v2672 = vpop.permute.xlu0 %2671
        %2673 = vrot.lane.b32.xlu0 %v2653, 12
        %v2674 = vpop.permute.xlu0 %2673
        %2675 = vrot.lane.b32.xlu0 %v2654, 12
        %v2676 = vpop.permute.xlu0 %2675
        %2677 = vrot.lane.b32.xlu0 %v2655, 12
        %v2678 = vpop.permute.xlu0 %2677
        %2679 = vrot.lane.b32.xlu0 %v2656, 12
        %v2680 = vpop.permute.xlu0 %2679
        %vm2689 = vcmask 195680
        %2690 = vst.msk [vmem:[#allocation4] sm:$0xff] %vm2689, %v2666
        %2691 = vst.msk [vmem:[#allocation4 + $0x8] sm:$0xff] %vm2689, %v2668
        %2692 = vst.msk [vmem:[#allocation4 + $0x10] sm:$0xff] %vm2689, %v2670
        %2693 = vst.msk [vmem:[#allocation4 + $0x18] sm:$0xff] %vm2689, %v2672
        %2694 = vst.msk [vmem:[#allocation4 + $0x20] sm:$0xff] %vm2689, %v2674
        %2695 = vst.msk [vmem:[#allocation4 + $0x28] sm:$0xff] %vm2689, %v2676
        %2696 = vst.msk [vmem:[#allocation4 + $0x30] sm:$0xff] %vm2689, %v2678
        %2697 = vst.msk [vmem:[#allocation4 + $0x38] sm:$0xff] %vm2689, %v2680
        %v2698 = vld [vmem:[#allocation2 + $0x2] sm:$0xff]
        %v2699 = vld [vmem:[#allocation2 + $0x12] sm:$0xff]
        %v2700 = vld [vmem:[#allocation2 + $0x22] sm:$0xff]
        %v2701 = vld [vmem:[#allocation2 + $0x32] sm:$0xff]
        %v2702 = vld [vmem:[#allocation2 + $0x42] sm:$0xff]
        %v2703 = vld [vmem:[#allocation2 + $0x52] sm:$0xff]
        %v2704 = vld [vmem:[#allocation2 + $0x62] sm:$0xff]
        %v2705 = vld [vmem:[#allocation2 + $0x72] sm:$0xff]
        %2714 = vrot.lane.b32.xlu0 %v2698, 24
        %v2715 = vpop.permute.xlu0 %2714
        %2716 = vrot.lane.b32.xlu0 %v2699, 24
        %v2717 = vpop.permute.xlu0 %2716
        %2718 = vrot.lane.b32.xlu0 %v2700, 24
        %v2719 = vpop.permute.xlu0 %2718
        %2720 = vrot.lane.b32.xlu0 %v2701, 24
        %v2721 = vpop.permute.xlu0 %2720
        %2722 = vrot.lane.b32.xlu0 %v2702, 24
        %v2723 = vpop.permute.xlu0 %2722
        %2724 = vrot.lane.b32.xlu0 %v2703, 24
        %v2725 = vpop.permute.xlu0 %2724
        %2726 = vrot.lane.b32.xlu0 %v2704, 24
        %v2727 = vpop.permute.xlu0 %2726
        %2728 = vrot.lane.b32.xlu0 %v2705, 24
        %v2729 = vpop.permute.xlu0 %2728
        %vm2738 = vcmask 294080
        %2739 = vst.msk [vmem:[#allocation4] sm:$0xff] %vm2738, %v2715
        %2740 = vst.msk [vmem:[#allocation4 + $0x8] sm:$0xff] %vm2738, %v2717
        %2741 = vst.msk [vmem:[#allocation4 + $0x10] sm:$0xff] %vm2738, %v2719
        %2742 = vst.msk [vmem:[#allocation4 + $0x18] sm:$0xff] %vm2738, %v2721
        %2743 = vst.msk [vmem:[#allocation4 + $0x20] sm:$0xff] %vm2738, %v2723
        %2744 = vst.msk [vmem:[#allocation4 + $0x28] sm:$0xff] %vm2738, %v2725
        %2745 = vst.msk [vmem:[#allocation4 + $0x30] sm:$0xff] %vm2738, %v2727
        %2746 = vst.msk [vmem:[#allocation4 + $0x38] sm:$0xff] %vm2738, %v2729
        %v2747 = vld [vmem:[%s281] sm:$0xff]
        %v2748 = vld [vmem:[%s281 + $0x10] sm:$0xff]
        %v2749 = vld [vmem:[%s281 + $0x20] sm:$0xff]
        %v2750 = vld [vmem:[%s281 + $0x30] sm:$0xff]
        %v2751 = vld [vmem:[%s281 + $0x40] sm:$0xff]
        %v2752 = vld [vmem:[%s281 + $0x50] sm:$0xff]
        %v2753 = vld [vmem:[%s281 + $0x60] sm:$0xff]
        %v2754 = vld [vmem:[%s281 + $0x70] sm:$0xff]
        %2763 = vrot.lane.b32.xlu0 %v2747, 36
        %v2764 = vpop.permute.xlu0 %2763
        %2765 = vrot.lane.b32.xlu0 %v2748, 36
        %v2766 = vpop.permute.xlu0 %2765
        %2767 = vrot.lane.b32.xlu0 %v2749, 36
        %v2768 = vpop.permute.xlu0 %2767
        %2769 = vrot.lane.b32.xlu0 %v2750, 36
        %v2770 = vpop.permute.xlu0 %2769
        %2771 = vrot.lane.b32.xlu0 %v2751, 36
        %v2772 = vpop.permute.xlu0 %2771
        %2773 = vrot.lane.b32.xlu0 %v2752, 36
        %v2774 = vpop.permute.xlu0 %2773
        %2775 = vrot.lane.b32.xlu0 %v2753, 36
        %v2776 = vpop.permute.xlu0 %2775
        %2777 = vrot.lane.b32.xlu0 %v2754, 36
        %v2778 = vpop.permute.xlu0 %2777
        %vm2787 = vcmask 392480
        %2788 = vst.msk [vmem:[#allocation4] sm:$0xff] %vm2787, %v2764
        %2789 = vst.msk [vmem:[#allocation4 + $0x8] sm:$0xff] %vm2787, %v2766
        %2790 = vst.msk [vmem:[#allocation4 + $0x10] sm:$0xff] %vm2787, %v2768
        %2791 = vst.msk [vmem:[#allocation4 + $0x18] sm:$0xff] %vm2787, %v2770
        %2792 = vst.msk [vmem:[#allocation4 + $0x20] sm:$0xff] %vm2787, %v2772
        %2793 = vst.msk [vmem:[#allocation4 + $0x28] sm:$0xff] %vm2787, %v2774
        %2794 = vst.msk [vmem:[#allocation4 + $0x30] sm:$0xff] %vm2787, %v2776
        %2795 = vst.msk [vmem:[#allocation4 + $0x38] sm:$0xff] %vm2787, %v2778
        %v2796 = vld [vmem:[%s281 + $0x1] sm:$0xff]
        %v2797 = vld [vmem:[%s281 + $0x11] sm:$0xff]
        %v2798 = vld [vmem:[%s281 + $0x21] sm:$0xff]
        %v2799 = vld [vmem:[%s281 + $0x31] sm:$0xff]
        %v2800 = vld [vmem:[%s281 + $0x41] sm:$0xff]
        %v2801 = vld [vmem:[%s281 + $0x51] sm:$0xff]
        %v2802 = vld [vmem:[%s281 + $0x61] sm:$0xff]
        %v2803 = vld [vmem:[%s281 + $0x71] sm:$0xff]
        %2812 = vrot.lane.b32.xlu0 %v2796, 48
        %v2813 = vpop.permute.xlu0 %2812
        %2814 = vrot.lane.b32.xlu0 %v2797, 48
        %v2815 = vpop.permute.xlu0 %2814
        %2816 = vrot.lane.b32.xlu0 %v2798, 48
        %v2817 = vpop.permute.xlu0 %2816
        %2818 = vrot.lane.b32.xlu0 %v2799, 48
        %v2819 = vpop.permute.xlu0 %2818
        %2820 = vrot.lane.b32.xlu0 %v2800, 48
        %v2821 = vpop.permute.xlu0 %2820
        %2822 = vrot.lane.b32.xlu0 %v2801, 48
        %v2823 = vpop.permute.xlu0 %2822
        %2824 = vrot.lane.b32.xlu0 %v2802, 48
        %v2825 = vpop.permute.xlu0 %2824
        %2826 = vrot.lane.b32.xlu0 %v2803, 48
        %v2827 = vpop.permute.xlu0 %2826
        %vm2836 = vcmask 490880
        %2837 = vst.msk [vmem:[#allocation4] sm:$0xff] %vm2836, %v2813
        %2838 = vst.msk [vmem:[#allocation4 + $0x8] sm:$0xff] %vm2836, %v2815
        %2839 = vst.msk [vmem:[#allocation4 + $0x10] sm:$0xff] %vm2836, %v2817
        %2840 = vst.msk [vmem:[#allocation4 + $0x18] sm:$0xff] %vm2836, %v2819
        %2841 = vst.msk [vmem:[#allocation4 + $0x20] sm:$0xff] %vm2836, %v2821
        %2842 = vst.msk [vmem:[#allocation4 + $0x28] sm:$0xff] %vm2836, %v2823
        %2843 = vst.msk [vmem:[#allocation4 + $0x30] sm:$0xff] %vm2836, %v2825
        %2844 = vst.msk [vmem:[#allocation4 + $0x38] sm:$0xff] %vm2836, %v2827
        %v2845 = vld [vmem:[%s281 + $0x2] sm:$0xff]
        %v2846 = vld [vmem:[%s281 + $0x12] sm:$0xff]
        %v2847 = vld [vmem:[%s281 + $0x22] sm:$0xff]
        %v2848 = vld [vmem:[%s281 + $0x32] sm:$0xff]
        %v2849 = vld [vmem:[%s281 + $0x42] sm:$0xff]
        %v2850 = vld [vmem:[%s281 + $0x52] sm:$0xff]
        %v2851 = vld [vmem:[%s281 + $0x62] sm:$0xff]
        %v2852 = vld [vmem:[%s281 + $0x72] sm:$0xff]
        %2861 = vrot.lane.b32.xlu0 %v2845, 60
        %v2862 = vpop.permute.xlu0 %2861
        %2863 = vrot.lane.b32.xlu0 %v2846, 60
        %v2864 = vpop.permute.xlu0 %2863
        %2865 = vrot.lane.b32.xlu0 %v2847, 60
        %v2866 = vpop.permute.xlu0 %2865
        %2867 = vrot.lane.b32.xlu0 %v2848, 60
        %v2868 = vpop.permute.xlu0 %2867
        %2869 = vrot.lane.b32.xlu0 %v2849, 60
        %v2870 = vpop.permute.xlu0 %2869
        %2871 = vrot.lane.b32.xlu0 %v2850, 60
        %v2872 = vpop.permute.xlu0 %2871
        %2873 = vrot.lane.b32.xlu0 %v2851, 60
        %v2874 = vpop.permute.xlu0 %2873
        %2875 = vrot.lane.b32.xlu0 %v2852, 60
        %v2876 = vpop.permute.xlu0 %2875
        %vm2885 = vcmask 589280
        %2886 = vst.msk [vmem:[#allocation4] sm:$0xff] %vm2885, %v2862
        %2887 = vst.msk [vmem:[#allocation4 + $0x8] sm:$0xff] %vm2885, %v2864
        %2888 = vst.msk [vmem:[#allocation4 + $0x10] sm:$0xff] %vm2885, %v2866
        %2889 = vst.msk [vmem:[#allocation4 + $0x18] sm:$0xff] %vm2885, %v2868
        %2890 = vst.msk [vmem:[#allocation4 + $0x20] sm:$0xff] %vm2885, %v2870
        %2891 = vst.msk [vmem:[#allocation4 + $0x28] sm:$0xff] %vm2885, %v2872
        %2892 = vst.msk [vmem:[#allocation4 + $0x30] sm:$0xff] %vm2885, %v2874
        %2893 = vst.msk [vmem:[#allocation4 + $0x38] sm:$0xff] %vm2885, %v2876
        %v2894 = vld [vmem:[%s551] sm:$0xff]
        %v2895 = vld [vmem:[%s551 + $0x10] sm:$0xff]
        %v2896 = vld [vmem:[%s551 + $0x20] sm:$0xff]
        %v2897 = vld [vmem:[%s551 + $0x30] sm:$0xff]
        %v2898 = vld [vmem:[%s551 + $0x40] sm:$0xff]
        %v2899 = vld [vmem:[%s551 + $0x50] sm:$0xff]
        %v2900 = vld [vmem:[%s551 + $0x60] sm:$0xff]
        %v2901 = vld [vmem:[%s551 + $0x70] sm:$0xff]
        %2910 = vrot.lane.b32.xlu0 %v2894, 72
        %v2911 = vpop.permute.xlu0 %2910
        %2912 = vrot.lane.b32.xlu0 %v2895, 72
        %v2913 = vpop.permute.xlu0 %2912
        %2914 = vrot.lane.b32.xlu0 %v2896, 72
        %v2915 = vpop.permute.xlu0 %2914
        %2916 = vrot.lane.b32.xlu0 %v2897, 72
        %v2917 = vpop.permute.xlu0 %2916
        %2918 = vrot.lane.b32.xlu0 %v2898, 72
        %v2919 = vpop.permute.xlu0 %2918
        %2920 = vrot.lane.b32.xlu0 %v2899, 72
        %v2921 = vpop.permute.xlu0 %2920
        %2922 = vrot.lane.b32.xlu0 %v2900, 72
        %v2923 = vpop.permute.xlu0 %2922
        %2924 = vrot.lane.b32.xlu0 %v2901, 72
        %v2925 = vpop.permute.xlu0 %2924
        %vm2934 = vcmask 687680
        %2935 = vst.msk [vmem:[#allocation4] sm:$0xff] %vm2934, %v2911
        %2936 = vst.msk [vmem:[#allocation4 + $0x8] sm:$0xff] %vm2934, %v2913
        %2937 = vst.msk [vmem:[#allocation4 + $0x10] sm:$0xff] %vm2934, %v2915
        %2938 = vst.msk [vmem:[#allocation4 + $0x18] sm:$0xff] %vm2934, %v2917
        %2939 = vst.msk [vmem:[#allocation4 + $0x20] sm:$0xff] %vm2934, %v2919
        %2940 = vst.msk [vmem:[#allocation4 + $0x28] sm:$0xff] %vm2934, %v2921
        %2941 = vst.msk [vmem:[#allocation4 + $0x30] sm:$0xff] %vm2934, %v2923
        %2942 = vst.msk [vmem:[#allocation4 + $0x38] sm:$0xff] %vm2934, %v2925
        %v2943 = vld [vmem:[%s551 + $0x1] sm:$0xff]
        %v2944 = vld [vmem:[%s551 + $0x11] sm:$0xff]
        %v2945 = vld [vmem:[%s551 + $0x21] sm:$0xff]
        %v2946 = vld [vmem:[%s551 + $0x31] sm:$0xff]
        %v2947 = vld [vmem:[%s551 + $0x41] sm:$0xff]
        %v2948 = vld [vmem:[%s551 + $0x51] sm:$0xff]
        %v2949 = vld [vmem:[%s551 + $0x61] sm:$0xff]
        %v2950 = vld [vmem:[%s551 + $0x71] sm:$0xff]
        %2959 = vrot.lane.b32.xlu0 %v2943, 84
        %v2960 = vpop.permute.xlu0 %2959
        %2961 = vrot.lane.b32.xlu0 %v2944, 84
        %v2962 = vpop.permute.xlu0 %2961
        %2963 = vrot.lane.b32.xlu0 %v2945, 84
        %v2964 = vpop.permute.xlu0 %2963
        %2965 = vrot.lane.b32.xlu0 %v2946, 84
        %v2966 = vpop.permute.xlu0 %2965
        %2967 = vrot.lane.b32.xlu0 %v2947, 84
        %v2968 = vpop.permute.xlu0 %2967
        %2969 = vrot.lane.b32.xlu0 %v2948, 84
        %v2970 = vpop.permute.xlu0 %2969
        %2971 = vrot.lane.b32.xlu0 %v2949, 84
        %v2972 = vpop.permute.xlu0 %2971
        %2973 = vrot.lane.b32.xlu0 %v2950, 84
        %v2974 = vpop.permute.xlu0 %2973
        %vm2983 = vcmask 786080
        %2984 = vst.msk [vmem:[#allocation4] sm:$0xff] %vm2983, %v2960
        %2985 = vst.msk [vmem:[#allocation4 + $0x8] sm:$0xff] %vm2983, %v2962
        %2986 = vst.msk [vmem:[#allocation4 + $0x10] sm:$0xff] %vm2983, %v2964
        %2987 = vst.msk [vmem:[#allocation4 + $0x18] sm:$0xff] %vm2983, %v2966
        %2988 = vst.msk [vmem:[#allocation4 + $0x20] sm:$0xff] %vm2983, %v2968
        %2989 = vst.msk [vmem:[#allocation4 + $0x28] sm:$0xff] %vm2983, %v2970
        %2990 = vst.msk [vmem:[#allocation4 + $0x30] sm:$0xff] %vm2983, %v2972
        %2991 = vst.msk [vmem:[#allocation4 + $0x38] sm:$0xff] %vm2983, %v2974
        %v2992 = vld [vmem:[%s551 + $0x2] sm:$0xff]
        %v2993 = vld [vmem:[%s551 + $0x12] sm:$0xff]
        %v2994 = vld [vmem:[%s551 + $0x22] sm:$0xff]
        %v2995 = vld [vmem:[%s551 + $0x32] sm:$0xff]
        %v2996 = vld [vmem:[%s551 + $0x42] sm:$0xff]
        %v2997 = vld [vmem:[%s551 + $0x52] sm:$0xff]
        %v2998 = vld [vmem:[%s551 + $0x62] sm:$0xff]
        %v2999 = vld [vmem:[%s551 + $0x72] sm:$0xff]
        %3008 = vrot.lane.b32.xlu0 %v2992, 96
        %v3009 = vpop.permute.xlu0 %3008
        %3010 = vrot.lane.b32.xlu0 %v2993, 96
        %v3011 = vpop.permute.xlu0 %3010
        %3012 = vrot.lane.b32.xlu0 %v2994, 96
        %v3013 = vpop.permute.xlu0 %3012
        %3014 = vrot.lane.b32.xlu0 %v2995, 96
        %v3015 = vpop.permute.xlu0 %3014
        %3016 = vrot.lane.b32.xlu0 %v2996, 96
        %v3017 = vpop.permute.xlu0 %3016
        %3018 = vrot.lane.b32.xlu0 %v2997, 96
        %v3019 = vpop.permute.xlu0 %3018
        %3020 = vrot.lane.b32.xlu0 %v2998, 96
        %v3021 = vpop.permute.xlu0 %3020
        %3022 = vrot.lane.b32.xlu0 %v2999, 96
        %v3023 = vpop.permute.xlu0 %3022
        %vm3032 = vcmask 884480
        %3033 = vst.msk [vmem:[#allocation4] sm:$0xff] %vm3032, %v3009
        %3034 = vst.msk [vmem:[#allocation4 + $0x8] sm:$0xff] %vm3032, %v3011
        %3035 = vst.msk [vmem:[#allocation4 + $0x10] sm:$0xff] %vm3032, %v3013
        %3036 = vst.msk [vmem:[#allocation4 + $0x18] sm:$0xff] %vm3032, %v3015
        %3037 = vst.msk [vmem:[#allocation4 + $0x20] sm:$0xff] %vm3032, %v3017
        %3038 = vst.msk [vmem:[#allocation4 + $0x28] sm:$0xff] %vm3032, %v3019
        %3039 = vst.msk [vmem:[#allocation4 + $0x30] sm:$0xff] %vm3032, %v3021
        %3040 = vst.msk [vmem:[#allocation4 + $0x38] sm:$0xff] %vm3032, %v3023
        %v3041 = vld [vmem:[#allocation4] sm:$0xff]
        %v3042 = vld [vmem:[#allocation4 + $0x8] sm:$0xff]
        %v3043 = vld [vmem:[#allocation4 + $0x10] sm:$0xff]
        %v3044 = vld [vmem:[#allocation4 + $0x18] sm:$0xff]
        %v3045 = vld [vmem:[#allocation4 + $0x20] sm:$0xff]
        %v3046 = vld [vmem:[#allocation4 + $0x28] sm:$0xff]
        %v3047 = vld [vmem:[#allocation4 + $0x30] sm:$0xff]
        %v3048 = vld [vmem:[#allocation4 + $0x38] sm:$0xff]
        %v3049 = vpack.c.bf16 %v3042, %v3041
        %v3050 = vpack.c.bf16 %v3044, %v3043
        %v3051 = vpack.c.bf16 %v3046, %v3045
        %v3052 = vpack.c.bf16 %v3048, %v3047
        %s3053 = scalar_lea.vmem %s1, 512
        %v3054 = vld [vmem:[%s3053] sm:$0xff]
        %v3055 = vld [vmem:[%s3053 + $0x8] sm:$0xff]
        %v3056 = vld [vmem:[%s3053 + $0x10] sm:$0xff]
        %v3057 = vld [vmem:[%s3053 + $0x18] sm:$0xff]
        %v3058 = vld [vmem:[%s3053 + $0x20] sm:$0xff]
        %v3059 = vld [vmem:[%s3053 + $0x28] sm:$0xff]
        %v3060 = vld [vmem:[%s3053 + $0x30] sm:$0xff]
        %v3061 = vld [vmem:[%s3053 + $0x38] sm:$0xff]
        %v3062 = vld [vmem:[%s3053 + $0x40] sm:$0xff]
        %v3063 = vld [vmem:[%s3053 + $0x48] sm:$0xff]
        %v3064 = vld [vmem:[%s3053 + $0x50] sm:$0xff]
        %v3065 = vld [vmem:[%s3053 + $0x58] sm:$0xff]
        %v3066 = vld [vmem:[%s3053 + $0x60] sm:$0xff]
        %v3067 = vld [vmem:[%s3053 + $0x68] sm:$0xf]
        %v3068 = vpack.c.bf16 %v3055, %v3054
        %v3069 = vpack.c.bf16 %v3057, %v3056
        %v3070 = vpack.c.bf16 %v3059, %v3058
        %v3071 = vpack.c.bf16 %v3061, %v3060
        %v3072 = vpack.c.bf16 %v3063, %v3062
        %v3073 = vpack.c.bf16 %v3065, %v3064
        %v3074 = vpack.c.bf16 %v3067, %v3066
        %v3075 = vld [vmem:[%s2 + $0x4] sm:$0x1]
        %v3076 = vlaneseq
        %v3077 = vshrl.u32 %v3076, 7
        %v3078 = vsub.s32 0, %v3077
        %v3079 = vrot.slane %v3075, %v3078
        %vm3080 = vcmask 883712
        %v3082 = vsel %vm3080, %v3049, 0
        %v3085 = vsel %vm3080, %v3050, 0
        %v3088 = vsel %vm3080, %v3051, 0
        %v3091 = vsel %vm3080, %v3052, 0
        %vm3093 = vcmask 1045504
        %v3095 = vsel %vm3093, %v3074, 0
        %3097 = vmatprep.subr.bf16.mxu0 0
        %3098 = vmatpush1.bf16.msra.mxu0 %v3068
        %3099 = vmatprep.subr.bf16.mxu0 0
        %3100 = vmatpush1.bf16.msra.mxu0 %v3069
        %3101 = vmatprep.subr.bf16.mxu0 0
        %3102 = vmatpush1.bf16.msra.mxu0 %v3070
        %3103 = vmatprep.subr.bf16.mxu0 0
        %3104 = vmatpush1.bf16.msra.mxu0 %v3071
        %3105 = vmatprep.subr.bf16.mxu0 0
        %3106 = vmatpush1.bf16.msra.mxu0 %v3072
        %3107 = vmatprep.subr.bf16.mxu0 0
        %3108 = vmatpush1.bf16.msra.mxu0 %v3073
        %3109 = vmatprep.subr.bf16.mxu0 0
        %3110 = vmatpush1.bf16.msra.mxu0 %v3095
        %3111 = vmatprep.subr.bf16.mxu0 0
        %3112 = vmatpush1.bf16.msra.mxu0 0
        %3113 = vmatprep.subr.bf16.mxu0 0
        %3114 = vmatpush1.bf16.msra.mxu0 0
        %3115 = vmatprep.subr.bf16.mxu0 0
        %3116 = vmatpush1.bf16.msra.mxu0 0
        %3117 = vmatprep.subr.bf16.mxu0 0
        %3118 = vmatpush1.bf16.msra.mxu0 0
        %3119 = vmatprep.subr.bf16.mxu0 0
        %3120 = vmatpush1.bf16.msra.mxu0 0
        %3121 = vmatprep.subr.bf16.mxu0 0
        %3122 = vmatpush1.bf16.msra.mxu0 0
        %3123 = vmatprep.subr.bf16.mxu0 0
        %3124 = vmatpush1.bf16.msra.mxu0 0
        %3125 = vmatprep.subr.bf16.mxu0 0
        %3126 = vmatpush1.bf16.msra.mxu0 0
        %3127 = vmatprep.subr.bf16.mxu0 0
        %3128 = vmatpush1.bf16.msra.mxu0 0
        %3129 = vmatprep.mubr.bf16.mxu0 0
        %3130 = vmatmul.mubr.bf16.gmra.mrb[0].mxu0 %v3082
        %v3131 = vpop.f32.mrb[0].mxu0
        %v3132 = vadd.f32 %v3079, %v3131
        %v3133 = vpop.f32.mrb[0].mxu0
        %v3134 = vpop.f32.mrb[0].mxu0
        %v3135 = vadd.f32 %v3079, %v3134
        %v3136 = vpop.f32.mrb[0].mxu0
        %3137 = vmatprep.mubr.bf16.mxu0 0
        %3138 = vmatmul.mubr.bf16.gmra.mrb[0].mxu0 %v3085
        %v3139 = vpop.f32.mrb[0].mxu0
        %v3140 = vadd.f32 %v3079, %v3139
        %v3141 = vpop.f32.mrb[0].mxu0
        %v3142 = vpop.f32.mrb[0].mxu0
        %v3143 = vadd.f32 %v3079, %v3142
        %v3144 = vpop.f32.mrb[0].mxu0
        %3145 = vmatprep.mubr.bf16.mxu0 0
        %3146 = vmatmul.mubr.bf16.gmra.mrb[0].mxu0 %v3088
        %v3147 = vpop.f32.mrb[0].mxu0
        %v3148 = vadd.f32 %v3079, %v3147
        %v3149 = vpop.f32.mrb[0].mxu0
        %v3150 = vpop.f32.mrb[0].mxu0
        %v3151 = vadd.f32 %v3079, %v3150
        %v3152 = vpop.f32.mrb[0].mxu0
        %3153 = vmatprep.mubr.bf16.mxu0 0
        %3154 = vmatmul.mubr.bf16.gmra.mrb[0].mxu0 %v3091
        %v3155 = vpop.f32.mrb[0].mxu0
        %v3156 = vadd.f32 %v3079, %v3155
        %v3157 = vpop.f32.mrb[0].mxu0
        %v3158 = vpop.f32.mrb[0].mxu0
        %v3159 = vadd.f32 %v3079, %v3158
        %v3160 = vpop.f32.mrb[0].mxu0
        %3161 = vdwg.mxu0
        %3170 = vrot.lane.b32.xlu0 %v3132, 12
        %v3171 = vpop.permute.xlu0 %3170
        %3172 = vrot.lane.b32.xlu0 %v3135, 12
        %v3173 = vpop.permute.xlu0 %3172
        %3174 = vrot.lane.b32.xlu0 %v3140, 12
        %v3175 = vpop.permute.xlu0 %3174
        %3176 = vrot.lane.b32.xlu0 %v3143, 12
        %v3177 = vpop.permute.xlu0 %3176
        %3178 = vrot.lane.b32.xlu0 %v3148, 12
        %v3179 = vpop.permute.xlu0 %3178
        %3180 = vrot.lane.b32.xlu0 %v3151, 12
        %v3181 = vpop.permute.xlu0 %3180
        %3182 = vrot.lane.b32.xlu0 %v3156, 12
        %v3183 = vpop.permute.xlu0 %3182
        %3184 = vrot.lane.b32.xlu0 %v3159, 12
        %v3185 = vpop.permute.xlu0 %3184
        %vm3194 = vcmask 113760
        %3195 = vst.msk [vmem:[#allocation3] sm:$0xff] %vm3194, %v3171
        %3196 = vst.msk [vmem:[#allocation3 + $0x8] sm:$0xff] %vm3194, %v3173
        %3197 = vst.msk [vmem:[#allocation3 + $0x10] sm:$0xff] %vm3194, %v3175
        %3198 = vst.msk [vmem:[#allocation3 + $0x18] sm:$0xff] %vm3194, %v3177
        %3199 = vst.msk [vmem:[#allocation3 + $0x20] sm:$0xff] %vm3194, %v3179
        %3200 = vst.msk [vmem:[#allocation3 + $0x28] sm:$0xff] %vm3194, %v3181
        %3201 = vst.msk [vmem:[#allocation3 + $0x30] sm:$0xff] %vm3194, %v3183
        %3202 = vst.msk [vmem:[#allocation3 + $0x38] sm:$0xff] %vm3194, %v3185
        %v3203 = vld [vmem:[%s2 + $0xa] sm:$0x1]
        %v3204 = vld [vmem:[%s2 + $0xe] sm:$0x1]
        %v3205 = vld [vmem:[#allocation3] sm:$0xff]
        %v3206 = vld [vmem:[#allocation3 + $0x8] sm:$0xff]
        %v3207 = vld [vmem:[#allocation3 + $0x10] sm:$0xff]
        %v3208 = vld [vmem:[#allocation3 + $0x18] sm:$0xff]
        %v3209 = vld [vmem:[#allocation3 + $0x20] sm:$0xff]
        %v3210 = vld [vmem:[#allocation3 + $0x28] sm:$0xff]
        %v3211 = vld [vmem:[#allocation3 + $0x30] sm:$0xff]
        %v3212 = vld [vmem:[#allocation3 + $0x38] sm:$0xff]
        %v3213 = vlaneseq
        %v3214 = vshrl.u32 %v3213, 7
        %v3215 = vsub.s32 0, %v3214
        %v3216 = vrot.slane %v3203, %v3215
        %v3217 = vmul.f32 %v3205, %v3216
        %v3218 = vmul.f32 %v3206, %v3216
        %v3219 = vmul.f32 %v3207, %v3216
        %v3220 = vmul.f32 %v3208, %v3216
        %v3221 = vmul.f32 %v3209, %v3216
        %v3222 = vmul.f32 %v3210, %v3216
        %v3223 = vmul.f32 %v3211, %v3216
        %v3224 = vmul.f32 %v3212, %v3216
        %v3225 = vlaneseq
        %v3226 = vshrl.u32 %v3225, 7
        %v3227 = vsub.s32 0, %v3226
        %v3228 = vrot.slane %v3204, %v3227
        %v3229 = vadd.f32 %v3217, %v3228
        %v3230 = vadd.f32 %v3218, %v3228
        %v3231 = vadd.f32 %v3219, %v3228
        %v3232 = vadd.f32 %v3220, %v3228
        %v3233 = vadd.f32 %v3221, %v3228
        %v3234 = vadd.f32 %v3222, %v3228
        %v3235 = vadd.f32 %v3223, %v3228
        %v3236 = vadd.f32 %v3224, %v3228
        %v3237 = vmax.f32 %v3229, 0.0
        %v3238 = vmax.f32 %v3230, 0.0
        %v3239 = vmax.f32 %v3231, 0.0
        %v3240 = vmax.f32 %v3232, 0.0
        %v3241 = vmax.f32 %v3233, 0.0
        %v3242 = vmax.f32 %v3234, 0.0
        %v3243 = vmax.f32 %v3235, 0.0
        %v3244 = vmax.f32 %v3236, 0.0
        %vm3245 = vcmask 113664
        %3246 = vst.msk [vmem:[%s281 + $0x1] sm:$0xff] %vm3245, %v3237
        %3247 = vst.msk [vmem:[%s281 + $0x11] sm:$0xff] %vm3245, %v3238
        %3248 = vst.msk [vmem:[%s281 + $0x21] sm:$0xff] %vm3245, %v3239
        %3249 = vst.msk [vmem:[%s281 + $0x31] sm:$0xff] %vm3245, %v3240
        %3250 = vst.msk [vmem:[%s281 + $0x41] sm:$0xff] %vm3245, %v3241
        %3251 = vst.msk [vmem:[%s281 + $0x51] sm:$0xff] %vm3245, %v3242
        %3252 = vst.msk [vmem:[%s281 + $0x61] sm:$0xff] %vm3245, %v3243
        %3253 = vst.msk [vmem:[%s281 + $0x71] sm:$0xff] %vm3245, %v3244
        %v3254 = vld [vmem:[#allocation2] sm:$0xff]
        %v3255 = vld [vmem:[#allocation2 + $0x10] sm:$0xff]
        %v3256 = vld [vmem:[#allocation2 + $0x20] sm:$0xff]
        %v3257 = vld [vmem:[#allocation2 + $0x30] sm:$0xff]
        %v3258 = vld [vmem:[#allocation2 + $0x40] sm:$0xff]
        %v3259 = vld [vmem:[#allocation2 + $0x50] sm:$0xff]
        %v3260 = vld [vmem:[#allocation2 + $0x60] sm:$0xff]
        %v3261 = vld [vmem:[#allocation2 + $0x70] sm:$0xff]
        %3262 = vst.msk [vmem:[#allocation4] sm:$0xff] %vm3245, %v3254
        %3263 = vst.msk [vmem:[#allocation4 + $0x8] sm:$0xff] %vm3245, %v3255
        %3264 = vst.msk [vmem:[#allocation4 + $0x10] sm:$0xff] %vm3245, %v3256
        %3265 = vst.msk [vmem:[#allocation4 + $0x18] sm:$0xff] %vm3245, %v3257
        %3266 = vst.msk [vmem:[#allocation4 + $0x20] sm:$0xff] %vm3245, %v3258
        %3267 = vst.msk [vmem:[#allocation4 + $0x28] sm:$0xff] %vm3245, %v3259
        %3268 = vst.msk [vmem:[#allocation4 + $0x30] sm:$0xff] %vm3245, %v3260
        %3269 = vst.msk [vmem:[#allocation4 + $0x38] sm:$0xff] %vm3245, %v3261
        %v3270 = vld [vmem:[#allocation2 + $0x1] sm:$0xff]
        %v3271 = vld [vmem:[#allocation2 + $0x11] sm:$0xff]
        %v3272 = vld [vmem:[#allocation2 + $0x21] sm:$0xff]
        %v3273 = vld [vmem:[#allocation2 + $0x31] sm:$0xff]
        %v3274 = vld [vmem:[#allocation2 + $0x41] sm:$0xff]
        %v3275 = vld [vmem:[#allocation2 + $0x51] sm:$0xff]
        %v3276 = vld [vmem:[#allocation2 + $0x61] sm:$0xff]
        %v3277 = vld [vmem:[#allocation2 + $0x71] sm:$0xff]
        %3286 = vrot.lane.b32.xlu0 %v3270, 14
        %v3287 = vpop.permute.xlu0 %3286
        %3288 = vrot.lane.b32.xlu0 %v3271, 14
        %v3289 = vpop.permute.xlu0 %3288
        %3290 = vrot.lane.b32.xlu0 %v3272, 14
        %v3291 = vpop.permute.xlu0 %3290
        %3292 = vrot.lane.b32.xlu0 %v3273, 14
        %v3293 = vpop.permute.xlu0 %3292
        %3294 = vrot.lane.b32.xlu0 %v3274, 14
        %v3295 = vpop.permute.xlu0 %3294
        %3296 = vrot.lane.b32.xlu0 %v3275, 14
        %v3297 = vpop.permute.xlu0 %3296
        %3298 = vrot.lane.b32.xlu0 %v3276, 14
        %v3299 = vpop.permute.xlu0 %3298
        %3300 = vrot.lane.b32.xlu0 %v3277, 14
        %v3301 = vpop.permute.xlu0 %3300
        %vm3310 = vcmask 228464
        %3311 = vst.msk [vmem:[#allocation4] sm:$0xff] %vm3310, %v3287
        %3312 = vst.msk [vmem:[#allocation4 + $0x8] sm:$0xff] %vm3310, %v3289
        %3313 = vst.msk [vmem:[#allocation4 + $0x10] sm:$0xff] %vm3310, %v3291
        %3314 = vst.msk [vmem:[#allocation4 + $0x18] sm:$0xff] %vm3310, %v3293
        %3315 = vst.msk [vmem:[#allocation4 + $0x20] sm:$0xff] %vm3310, %v3295
        %3316 = vst.msk [vmem:[#allocation4 + $0x28] sm:$0xff] %vm3310, %v3297
        %3317 = vst.msk [vmem:[#allocation4 + $0x30] sm:$0xff] %vm3310, %v3299
        %3318 = vst.msk [vmem:[#allocation4 + $0x38] sm:$0xff] %vm3310, %v3301
        %v3319 = vld [vmem:[#allocation2 + $0x2] sm:$0xff]
        %v3320 = vld [vmem:[#allocation2 + $0x12] sm:$0xff]
        %v3321 = vld [vmem:[#allocation2 + $0x22] sm:$0xff]
        %v3322 = vld [vmem:[#allocation2 + $0x32] sm:$0xff]
        %v3323 = vld [vmem:[#allocation2 + $0x42] sm:$0xff]
        %v3324 = vld [vmem:[#allocation2 + $0x52] sm:$0xff]
        %v3325 = vld [vmem:[#allocation2 + $0x62] sm:$0xff]
        %v3326 = vld [vmem:[#allocation2 + $0x72] sm:$0xff]
        %3335 = vrot.lane.b32.xlu0 %v3319, 28
        %v3336 = vpop.permute.xlu0 %3335
        %3337 = vrot.lane.b32.xlu0 %v3320, 28
        %v3338 = vpop.permute.xlu0 %3337
        %3339 = vrot.lane.b32.xlu0 %v3321, 28
        %v3340 = vpop.permute.xlu0 %3339
        %3341 = vrot.lane.b32.xlu0 %v3322, 28
        %v3342 = vpop.permute.xlu0 %3341
        %3343 = vrot.lane.b32.xlu0 %v3323, 28
        %v3344 = vpop.permute.xlu0 %3343
        %3345 = vrot.lane.b32.xlu0 %v3324, 28
        %v3346 = vpop.permute.xlu0 %3345
        %3347 = vrot.lane.b32.xlu0 %v3325, 28
        %v3348 = vpop.permute.xlu0 %3347
        %3349 = vrot.lane.b32.xlu0 %v3326, 28
        %v3350 = vpop.permute.xlu0 %3349
        %vm3359 = vcmask 343264
        %3360 = vst.msk [vmem:[#allocation4] sm:$0xff] %vm3359, %v3336
        %3361 = vst.msk [vmem:[#allocation4 + $0x8] sm:$0xff] %vm3359, %v3338
        %3362 = vst.msk [vmem:[#allocation4 + $0x10] sm:$0xff] %vm3359, %v3340
        %3363 = vst.msk [vmem:[#allocation4 + $0x18] sm:$0xff] %vm3359, %v3342
        %3364 = vst.msk [vmem:[#allocation4 + $0x20] sm:$0xff] %vm3359, %v3344
        %3365 = vst.msk [vmem:[#allocation4 + $0x28] sm:$0xff] %vm3359, %v3346
        %3366 = vst.msk [vmem:[#allocation4 + $0x30] sm:$0xff] %vm3359, %v3348
        %3367 = vst.msk [vmem:[#allocation4 + $0x38] sm:$0xff] %vm3359, %v3350
        %v3368 = vld [vmem:[%s281] sm:$0xff]
        %v3369 = vld [vmem:[%s281 + $0x10] sm:$0xff]
        %v3370 = vld [vmem:[%s281 + $0x20] sm:$0xff]
        %v3371 = vld [vmem:[%s281 + $0x30] sm:$0xff]
        %v3372 = vld [vmem:[%s281 + $0x40] sm:$0xff]
        %v3373 = vld [vmem:[%s281 + $0x50] sm:$0xff]
        %v3374 = vld [vmem:[%s281 + $0x60] sm:$0xff]
        %v3375 = vld [vmem:[%s281 + $0x70] sm:$0xff]
        %3384 = vrot.lane.b32.xlu0 %v3368, 42
        %v3385 = vpop.permute.xlu0 %3384
        %3386 = vrot.lane.b32.xlu0 %v3369, 42
        %v3387 = vpop.permute.xlu0 %3386
        %3388 = vrot.lane.b32.xlu0 %v3370, 42
        %v3389 = vpop.permute.xlu0 %3388
        %3390 = vrot.lane.b32.xlu0 %v3371, 42
        %v3391 = vpop.permute.xlu0 %3390
        %3392 = vrot.lane.b32.xlu0 %v3372, 42
        %v3393 = vpop.permute.xlu0 %3392
        %3394 = vrot.lane.b32.xlu0 %v3373, 42
        %v3395 = vpop.permute.xlu0 %3394
        %3396 = vrot.lane.b32.xlu0 %v3374, 42
        %v3397 = vpop.permute.xlu0 %3396
        %3398 = vrot.lane.b32.xlu0 %v3375, 42
        %v3399 = vpop.permute.xlu0 %3398
        %vm3408 = vcmask 458064
        %3409 = vst.msk [vmem:[#allocation4] sm:$0xff] %vm3408, %v3385
        %3410 = vst.msk [vmem:[#allocation4 + $0x8] sm:$0xff] %vm3408, %v3387
        %3411 = vst.msk [vmem:[#allocation4 + $0x10] sm:$0xff] %vm3408, %v3389
        %3412 = vst.msk [vmem:[#allocation4 + $0x18] sm:$0xff] %vm3408, %v3391
        %3413 = vst.msk [vmem:[#allocation4 + $0x20] sm:$0xff] %vm3408, %v3393
        %3414 = vst.msk [vmem:[#allocation4 + $0x28] sm:$0xff] %vm3408, %v3395
        %3415 = vst.msk [vmem:[#allocation4 + $0x30] sm:$0xff] %vm3408, %v3397
        %3416 = vst.msk [vmem:[#allocation4 + $0x38] sm:$0xff] %vm3408, %v3399
        %v3417 = vld [vmem:[%s281 + $0x1] sm:$0xff]
        %v3418 = vld [vmem:[%s281 + $0x11] sm:$0xff]
        %v3419 = vld [vmem:[%s281 + $0x21] sm:$0xff]
        %v3420 = vld [vmem:[%s281 + $0x31] sm:$0xff]
        %v3421 = vld [vmem:[%s281 + $0x41] sm:$0xff]
        %v3422 = vld [vmem:[%s281 + $0x51] sm:$0xff]
        %v3423 = vld [vmem:[%s281 + $0x61] sm:$0xff]
        %v3424 = vld [vmem:[%s281 + $0x71] sm:$0xff]
        %3433 = vrot.lane.b32.xlu0 %v3417, 56
        %v3434 = vpop.permute.xlu0 %3433
        %3435 = vrot.lane.b32.xlu0 %v3418, 56
        %v3436 = vpop.permute.xlu0 %3435
        %3437 = vrot.lane.b32.xlu0 %v3419, 56
        %v3438 = vpop.permute.xlu0 %3437
        %3439 = vrot.lane.b32.xlu0 %v3420, 56
        %v3440 = vpop.permute.xlu0 %3439
        %3441 = vrot.lane.b32.xlu0 %v3421, 56
        %v3442 = vpop.permute.xlu0 %3441
        %3443 = vrot.lane.b32.xlu0 %v3422, 56
        %v3444 = vpop.permute.xlu0 %3443
        %3445 = vrot.lane.b32.xlu0 %v3423, 56
        %v3446 = vpop.permute.xlu0 %3445
        %3447 = vrot.lane.b32.xlu0 %v3424, 56
        %v3448 = vpop.permute.xlu0 %3447
        %vm3457 = vcmask 572864
        %3458 = vst.msk [vmem:[#allocation4] sm:$0xff] %vm3457, %v3434
        %3459 = vst.msk [vmem:[#allocation4 + $0x8] sm:$0xff] %vm3457, %v3436
        %3460 = vst.msk [vmem:[#allocation4 + $0x10] sm:$0xff] %vm3457, %v3438
        %3461 = vst.msk [vmem:[#allocation4 + $0x18] sm:$0xff] %vm3457, %v3440
        %3462 = vst.msk [vmem:[#allocation4 + $0x20] sm:$0xff] %vm3457, %v3442
        %3463 = vst.msk [vmem:[#allocation4 + $0x28] sm:$0xff] %vm3457, %v3444
        %3464 = vst.msk [vmem:[#allocation4 + $0x30] sm:$0xff] %vm3457, %v3446
        %3465 = vst.msk [vmem:[#allocation4 + $0x38] sm:$0xff] %vm3457, %v3448
        %v3466 = vld [vmem:[%s281 + $0x2] sm:$0xff]
        %v3467 = vld [vmem:[%s281 + $0x12] sm:$0xff]
        %v3468 = vld [vmem:[%s281 + $0x22] sm:$0xff]
        %v3469 = vld [vmem:[%s281 + $0x32] sm:$0xff]
        %v3470 = vld [vmem:[%s281 + $0x42] sm:$0xff]
        %v3471 = vld [vmem:[%s281 + $0x52] sm:$0xff]
        %v3472 = vld [vmem:[%s281 + $0x62] sm:$0xff]
        %v3473 = vld [vmem:[%s281 + $0x72] sm:$0xff]
        %3482 = vrot.lane.b32.xlu0 %v3466, 70
        %v3483 = vpop.permute.xlu0 %3482
        %3484 = vrot.lane.b32.xlu0 %v3467, 70
        %v3485 = vpop.permute.xlu0 %3484
        %3486 = vrot.lane.b32.xlu0 %v3468, 70
        %v3487 = vpop.permute.xlu0 %3486
        %3488 = vrot.lane.b32.xlu0 %v3469, 70
        %v3489 = vpop.permute.xlu0 %3488
        %3490 = vrot.lane.b32.xlu0 %v3470, 70
        %v3491 = vpop.permute.xlu0 %3490
        %3492 = vrot.lane.b32.xlu0 %v3471, 70
        %v3493 = vpop.permute.xlu0 %3492
        %3494 = vrot.lane.b32.xlu0 %v3472, 70
        %v3495 = vpop.permute.xlu0 %3494
        %3496 = vrot.lane.b32.xlu0 %v3473, 70
        %v3497 = vpop.permute.xlu0 %3496
        %vm3506 = vcmask 687664
        %3507 = vst.msk [vmem:[#allocation4] sm:$0xff] %vm3506, %v3483
        %3508 = vst.msk [vmem:[#allocation4 + $0x8] sm:$0xff] %vm3506, %v3485
        %3509 = vst.msk [vmem:[#allocation4 + $0x10] sm:$0xff] %vm3506, %v3487
        %3510 = vst.msk [vmem:[#allocation4 + $0x18] sm:$0xff] %vm3506, %v3489
        %3511 = vst.msk [vmem:[#allocation4 + $0x20] sm:$0xff] %vm3506, %v3491
        %3512 = vst.msk [vmem:[#allocation4 + $0x28] sm:$0xff] %vm3506, %v3493
        %3513 = vst.msk [vmem:[#allocation4 + $0x30] sm:$0xff] %vm3506, %v3495
        %3514 = vst.msk [vmem:[#allocation4 + $0x38] sm:$0xff] %vm3506, %v3497
        %v3515 = vld [vmem:[%s551] sm:$0xff]
        %v3516 = vld [vmem:[%s551 + $0x10] sm:$0xff]
        %v3517 = vld [vmem:[%s551 + $0x20] sm:$0xff]
        %v3518 = vld [vmem:[%s551 + $0x30] sm:$0xff]
        %v3519 = vld [vmem:[%s551 + $0x40] sm:$0xff]
        %v3520 = vld [vmem:[%s551 + $0x50] sm:$0xff]
        %v3521 = vld [vmem:[%s551 + $0x60] sm:$0xff]
        %v3522 = vld [vmem:[%s551 + $0x70] sm:$0xff]
        %3531 = vrot.lane.b32.xlu0 %v3515, 84
        %v3532 = vpop.permute.xlu0 %3531
        %3533 = vrot.lane.b32.xlu0 %v3516, 84
        %v3534 = vpop.permute.xlu0 %3533
        %3535 = vrot.lane.b32.xlu0 %v3517, 84
        %v3536 = vpop.permute.xlu0 %3535
        %3537 = vrot.lane.b32.xlu0 %v3518, 84
        %v3538 = vpop.permute.xlu0 %3537
        %3539 = vrot.lane.b32.xlu0 %v3519, 84
        %v3540 = vpop.permute.xlu0 %3539
        %3541 = vrot.lane.b32.xlu0 %v3520, 84
        %v3542 = vpop.permute.xlu0 %3541
        %3543 = vrot.lane.b32.xlu0 %v3521, 84
        %v3544 = vpop.permute.xlu0 %3543
        %3545 = vrot.lane.b32.xlu0 %v3522, 84
        %v3546 = vpop.permute.xlu0 %3545
        %vm3555 = vcmask 802464
        %3556 = vst.msk [vmem:[#allocation4] sm:$0xff] %vm3555, %v3532
        %3557 = vst.msk [vmem:[#allocation4 + $0x8] sm:$0xff] %vm3555, %v3534
        %3558 = vst.msk [vmem:[#allocation4 + $0x10] sm:$0xff] %vm3555, %v3536
        %3559 = vst.msk [vmem:[#allocation4 + $0x18] sm:$0xff] %vm3555, %v3538
        %3560 = vst.msk [vmem:[#allocation4 + $0x20] sm:$0xff] %vm3555, %v3540
        %3561 = vst.msk [vmem:[#allocation4 + $0x28] sm:$0xff] %vm3555, %v3542
        %3562 = vst.msk [vmem:[#allocation4 + $0x30] sm:$0xff] %vm3555, %v3544
        %3563 = vst.msk [vmem:[#allocation4 + $0x38] sm:$0xff] %vm3555, %v3546
        %v3564 = vld [vmem:[%s551 + $0x1] sm:$0xff]
        %v3565 = vld [vmem:[%s551 + $0x11] sm:$0xff]
        %v3566 = vld [vmem:[%s551 + $0x21] sm:$0xff]
        %v3567 = vld [vmem:[%s551 + $0x31] sm:$0xff]
        %v3568 = vld [vmem:[%s551 + $0x41] sm:$0xff]
        %v3569 = vld [vmem:[%s551 + $0x51] sm:$0xff]
        %v3570 = vld [vmem:[%s551 + $0x61] sm:$0xff]
        %v3571 = vld [vmem:[%s551 + $0x71] sm:$0xff]
        %3580 = vrot.lane.b32.xlu0 %v3564, 98
        %v3581 = vpop.permute.xlu0 %3580
        %3582 = vrot.lane.b32.xlu0 %v3565, 98
        %v3583 = vpop.permute.xlu0 %3582
        %3584 = vrot.lane.b32.xlu0 %v3566, 98
        %v3585 = vpop.permute.xlu0 %3584
        %3586 = vrot.lane.b32.xlu0 %v3567, 98
        %v3587 = vpop.permute.xlu0 %3586
        %3588 = vrot.lane.b32.xlu0 %v3568, 98
        %v3589 = vpop.permute.xlu0 %3588
        %3590 = vrot.lane.b32.xlu0 %v3569, 98
        %v3591 = vpop.permute.xlu0 %3590
        %3592 = vrot.lane.b32.xlu0 %v3570, 98
        %v3593 = vpop.permute.xlu0 %3592
        %3594 = vrot.lane.b32.xlu0 %v3571, 98
        %v3595 = vpop.permute.xlu0 %3594
        %vm3604 = vcmask 917264
        %3605 = vst.msk [vmem:[#allocation4] sm:$0xff] %vm3604, %v3581
        %3606 = vst.msk [vmem:[#allocation4 + $0x8] sm:$0xff] %vm3604, %v3583
        %3607 = vst.msk [vmem:[#allocation4 + $0x10] sm:$0xff] %vm3604, %v3585
        %3608 = vst.msk [vmem:[#allocation4 + $0x18] sm:$0xff] %vm3604, %v3587
        %3609 = vst.msk [vmem:[#allocation4 + $0x20] sm:$0xff] %vm3604, %v3589
        %3610 = vst.msk [vmem:[#allocation4 + $0x28] sm:$0xff] %vm3604, %v3591
        %3611 = vst.msk [vmem:[#allocation4 + $0x30] sm:$0xff] %vm3604, %v3593
        %3612 = vst.msk [vmem:[#allocation4 + $0x38] sm:$0xff] %vm3604, %v3595
        %v3613 = vld [vmem:[%s551 + $0x2] sm:$0xff]
        %v3614 = vld [vmem:[%s551 + $0x12] sm:$0xff]
        %v3615 = vld [vmem:[%s551 + $0x22] sm:$0xff]
        %v3616 = vld [vmem:[%s551 + $0x32] sm:$0xff]
        %v3617 = vld [vmem:[%s551 + $0x42] sm:$0xff]
        %v3618 = vld [vmem:[%s551 + $0x52] sm:$0xff]
        %v3619 = vld [vmem:[%s551 + $0x62] sm:$0xff]
        %v3620 = vld [vmem:[%s551 + $0x72] sm:$0xff]
        %3629 = vrot.lane.b32.xlu0 %v3613, 112
        %v3630 = vpop.permute.xlu0 %3629
        %3631 = vrot.lane.b32.xlu0 %v3614, 112
        %v3632 = vpop.permute.xlu0 %3631
        %3633 = vrot.lane.b32.xlu0 %v3615, 112
        %v3634 = vpop.permute.xlu0 %3633
        %3635 = vrot.lane.b32.xlu0 %v3616, 112
        %v3636 = vpop.permute.xlu0 %3635
        %3637 = vrot.lane.b32.xlu0 %v3617, 112
        %v3638 = vpop.permute.xlu0 %3637
        %3639 = vrot.lane.b32.xlu0 %v3618, 112
        %v3640 = vpop.permute.xlu0 %3639
        %3641 = vrot.lane.b32.xlu0 %v3619, 112
        %v3642 = vpop.permute.xlu0 %3641
        %3643 = vrot.lane.b32.xlu0 %v3620, 112
        %v3644 = vpop.permute.xlu0 %3643
        %vm3653 = vcmask 1032064
        %3654 = vst.msk [vmem:[#allocation4] sm:$0xff] %vm3653, %v3630
        %3655 = vst.msk [vmem:[#allocation4 + $0x8] sm:$0xff] %vm3653, %v3632
        %3656 = vst.msk [vmem:[#allocation4 + $0x10] sm:$0xff] %vm3653, %v3634
        %3657 = vst.msk [vmem:[#allocation4 + $0x18] sm:$0xff] %vm3653, %v3636
        %3658 = vst.msk [vmem:[#allocation4 + $0x20] sm:$0xff] %vm3653, %v3638
        %3659 = vst.msk [vmem:[#allocation4 + $0x28] sm:$0xff] %vm3653, %v3640
        %3660 = vst.msk [vmem:[#allocation4 + $0x30] sm:$0xff] %vm3653, %v3642
        %3661 = vst.msk [vmem:[#allocation4 + $0x38] sm:$0xff] %vm3653, %v3644
        %v3662 = vld [vmem:[#allocation4] sm:$0xff]
        %v3663 = vld [vmem:[#allocation4 + $0x8] sm:$0xff]
        %v3664 = vld [vmem:[#allocation4 + $0x10] sm:$0xff]
        %v3665 = vld [vmem:[#allocation4 + $0x18] sm:$0xff]
        %v3666 = vld [vmem:[#allocation4 + $0x20] sm:$0xff]
        %v3667 = vld [vmem:[#allocation4 + $0x28] sm:$0xff]
        %v3668 = vld [vmem:[#allocation4 + $0x30] sm:$0xff]
        %v3669 = vld [vmem:[#allocation4 + $0x38] sm:$0xff]
        %v3670 = vpack.c.bf16 %v3663, %v3662
        %v3671 = vpack.c.bf16 %v3665, %v3664
        %v3672 = vpack.c.bf16 %v3667, %v3666
        %v3673 = vpack.c.bf16 %v3669, %v3668
        %s3674 = scalar_lea.vmem %s1, 640
        %v3675 = vld [vmem:[%s3674] sm:$0xff]
        %v3676 = vld [vmem:[%s3674 + $0x8] sm:$0xff]
        %v3677 = vld [vmem:[%s3674 + $0x10] sm:$0xff]
        %v3678 = vld [vmem:[%s3674 + $0x18] sm:$0xff]
        %v3679 = vld [vmem:[%s3674 + $0x20] sm:$0xff]
        %v3680 = vld [vmem:[%s3674 + $0x28] sm:$0xff]
        %v3681 = vld [vmem:[%s3674 + $0x30] sm:$0xff]
        %v3682 = vld [vmem:[%s3674 + $0x38] sm:$0xff]
        %v3683 = vld [vmem:[%s3674 + $0x40] sm:$0xff]
        %v3684 = vld [vmem:[%s3674 + $0x48] sm:$0xff]
        %v3685 = vld [vmem:[%s3674 + $0x50] sm:$0xff]
        %v3686 = vld [vmem:[%s3674 + $0x58] sm:$0xff]
        %v3687 = vld [vmem:[%s3674 + $0x60] sm:$0xff]
        %v3688 = vld [vmem:[%s3674 + $0x68] sm:$0xff]
        %v3689 = vld [vmem:[%s3674 + $0x70] sm:$0xff]
        %v3690 = vld [vmem:[%s3674 + $0x78] sm:$0x3f]
        %v3691 = vpack.c.bf16 %v3676, %v3675
        %v3692 = vpack.c.bf16 %v3678, %v3677
        %v3693 = vpack.c.bf16 %v3680, %v3679
        %v3694 = vpack.c.bf16 %v3682, %v3681
        %v3695 = vpack.c.bf16 %v3684, %v3683
        %v3696 = vpack.c.bf16 %v3686, %v3685
        %v3697 = vpack.c.bf16 %v3688, %v3687
        %v3698 = vpack.c.bf16 %v3690, %v3689
        %v3699 = vld [vmem:[%s2 + $0x5] sm:$0x1]
        %v3700 = vlaneseq
        %v3701 = vshrl.u32 %v3700, 7
        %v3702 = vsub.s32 0, %v3701
        %v3703 = vrot.slane %v3699, %v3702
        %vm3704 = vcmask 1031168
        %v3706 = vsel %vm3704, %v3670, 0
        %v3709 = vsel %vm3704, %v3671, 0
        %v3712 = vsel %vm3704, %v3672, 0
        %v3715 = vsel %vm3704, %v3673, 0
        %vm3717 = vcmask 1046528
        %v3719 = vsel %vm3717, %v3698, 0
        %3721 = vmatprep.subr.bf16.mxu0 0
        %3722 = vmatpush1.bf16.msra.mxu0 %v3691
        %3723 = vmatprep.subr.bf16.mxu0 0
        %3724 = vmatpush1.bf16.msra.mxu0 %v3692
        %3725 = vmatprep.subr.bf16.mxu0 0
        %3726 = vmatpush1.bf16.msra.mxu0 %v3693
        %3727 = vmatprep.subr.bf16.mxu0 0
        %3728 = vmatpush1.bf16.msra.mxu0 %v3694
        %3729 = vmatprep.subr.bf16.mxu0 0
        %3730 = vmatpush1.bf16.msra.mxu0 %v3695
        %3731 = vmatprep.subr.bf16.mxu0 0
        %3732 = vmatpush1.bf16.msra.mxu0 %v3696
        %3733 = vmatprep.subr.bf16.mxu0 0
        %3734 = vmatpush1.bf16.msra.mxu0 %v3697
        %3735 = vmatprep.subr.bf16.mxu0 0
        %3736 = vmatpush1.bf16.msra.mxu0 %v3719
        %3737 = vmatprep.subr.bf16.mxu0 0
        %3738 = vmatpush1.bf16.msra.mxu0 0
        %3739 = vmatprep.subr.bf16.mxu0 0
        %3740 = vmatpush1.bf16.msra.mxu0 0
        %3741 = vmatprep.subr.bf16.mxu0 0
        %3742 = vmatpush1.bf16.msra.mxu0 0
        %3743 = vmatprep.subr.bf16.mxu0 0
        %3744 = vmatpush1.bf16.msra.mxu0 0
        %3745 = vmatprep.subr.bf16.mxu0 0
        %3746 = vmatpush1.bf16.msra.mxu0 0
        %3747 = vmatprep.subr.bf16.mxu0 0
        %3748 = vmatpush1.bf16.msra.mxu0 0
        %3749 = vmatprep.subr.bf16.mxu0 0
        %3750 = vmatpush1.bf16.msra.mxu0 0
        %3751 = vmatprep.subr.bf16.mxu0 0
        %3752 = vmatpush1.bf16.msra.mxu0 0
        %3753 = vmatprep.mubr.bf16.mxu0 0
        %3754 = vmatmul.mubr.bf16.gmra.mrb[0].mxu0 %v3706
        %v3755 = vpop.f32.mrb[0].mxu0
        %v3756 = vadd.f32 %v3703, %v3755
        %v3757 = vpop.f32.mrb[0].mxu0
        %v3758 = vpop.f32.mrb[0].mxu0
        %v3759 = vadd.f32 %v3703, %v3758
        %v3760 = vpop.f32.mrb[0].mxu0
        %3761 = vmatprep.mubr.bf16.mxu0 0
        %3762 = vmatmul.mubr.bf16.gmra.mrb[0].mxu0 %v3709
        %v3763 = vpop.f32.mrb[0].mxu0
        %v3764 = vadd.f32 %v3703, %v3763
        %v3765 = vpop.f32.mrb[0].mxu0
        %v3766 = vpop.f32.mrb[0].mxu0
        %v3767 = vadd.f32 %v3703, %v3766
        %v3768 = vpop.f32.mrb[0].mxu0
        %3769 = vmatprep.mubr.bf16.mxu0 0
        %3770 = vmatmul.mubr.bf16.gmra.mrb[0].mxu0 %v3712
        %v3771 = vpop.f32.mrb[0].mxu0
        %v3772 = vadd.f32 %v3703, %v3771
        %v3773 = vpop.f32.mrb[0].mxu0
        %v3774 = vpop.f32.mrb[0].mxu0
        %v3775 = vadd.f32 %v3703, %v3774
        %v3776 = vpop.f32.mrb[0].mxu0
        %3777 = vmatprep.mubr.bf16.mxu0 0
        %3778 = vmatmul.mubr.bf16.gmra.mrb[0].mxu0 %v3715
        %v3779 = vpop.f32.mrb[0].mxu0
        %v3780 = vadd.f32 %v3703, %v3779
        %v3781 = vpop.f32.mrb[0].mxu0
        %v3782 = vpop.f32.mrb[0].mxu0
        %v3783 = vadd.f32 %v3703, %v3782
        %v3784 = vpop.f32.mrb[0].mxu0
        %3785 = vdwg.mxu0
        %3794 = vrot.lane.b32.xlu0 %v3756, 14
        %v3795 = vpop.permute.xlu0 %3794
        %3796 = vrot.lane.b32.xlu0 %v3759, 14
        %v3797 = vpop.permute.xlu0 %3796
        %3798 = vrot.lane.b32.xlu0 %v3764, 14
        %v3799 = vpop.permute.xlu0 %3798
        %3800 = vrot.lane.b32.xlu0 %v3767, 14
        %v3801 = vpop.permute.xlu0 %3800
        %3802 = vrot.lane.b32.xlu0 %v3772, 14
        %v3803 = vpop.permute.xlu0 %3802
        %3804 = vrot.lane.b32.xlu0 %v3775, 14
        %v3805 = vpop.permute.xlu0 %3804
        %3806 = vrot.lane.b32.xlu0 %v3780, 14
        %v3807 = vpop.permute.xlu0 %3806
        %3808 = vrot.lane.b32.xlu0 %v3783, 14
        %v3809 = vpop.permute.xlu0 %3808
        %vm3818 = vcmask 130160
        %3819 = vst.msk [vmem:[#allocation3] sm:$0xff] %vm3818, %v3795
        %3820 = vst.msk [vmem:[#allocation3 + $0x8] sm:$0xff] %vm3818, %v3797
        %3821 = vst.msk [vmem:[#allocation3 + $0x10] sm:$0xff] %vm3818, %v3799
        %3822 = vst.msk [vmem:[#allocation3 + $0x18] sm:$0xff] %vm3818, %v3801
        %3823 = vst.msk [vmem:[#allocation3 + $0x20] sm:$0xff] %vm3818, %v3803
        %3824 = vst.msk [vmem:[#allocation3 + $0x28] sm:$0xff] %vm3818, %v3805
        %3825 = vst.msk [vmem:[#allocation3 + $0x30] sm:$0xff] %vm3818, %v3807
        %3826 = vst.msk [vmem:[#allocation3 + $0x38] sm:$0xff] %vm3818, %v3809
        %v3827 = vld [vmem:[#allocation3] sm:$0xff]
        %v3828 = vld [vmem:[#allocation3 + $0x8] sm:$0xff]
        %v3829 = vld [vmem:[#allocation3 + $0x10] sm:$0xff]
        %v3830 = vld [vmem:[#allocation3 + $0x18] sm:$0xff]
        %v3831 = vld [vmem:[#allocation3 + $0x20] sm:$0xff]
        %v3832 = vld [vmem:[#allocation3 + $0x28] sm:$0xff]
        %v3833 = vld [vmem:[#allocation3 + $0x30] sm:$0xff]
        %v3834 = vld [vmem:[#allocation3 + $0x38] sm:$0xff]
        %v3835 = vpack.c.bf16 %v3828, %v3827
        %v3836 = vpack.c.bf16 %v3830, %v3829
        %v3837 = vpack.c.bf16 %v3832, %v3831
        %v3838 = vpack.c.bf16 %v3834, %v3833
        %s3839 = scalar_lea.vmem %s1, 768
        %v3840 = vld [vmem:[%s3839] sm:$0xff]
        %v3841 = vld [vmem:[%s3839 + $0x8] sm:$0xff]
        %v3842 = vpack.c.bf16 %v3841, %v3840
        %v3843 = vld [vmem:[%s2 + $0x6] sm:$0x1]
        %v3844 = vlaneseq
        %v3845 = vshrl.u32 %v3844, 7
        %v3846 = vsub.s32 0, %v3845
        %v3847 = vrot.slane %v3843, %v3846
        %v3849 = vsel %vm170, %v3835, 0
        %v3852 = vsel %vm170, %v3836, 0
        %v3855 = vsel %vm170, %v3837, 0
        %v3858 = vsel %vm170, %v3838, 0
        %3860 = vmatprep.subr.bf16.mxu0 0
        %3861 = vmatpush1.bf16.msra.mxu0 %v3842
        %3862 = vmatprep.subr.bf16.mxu0 0
        %3863 = vmatpush1.bf16.msra.mxu0 0
        %3864 = vmatprep.subr.bf16.mxu0 0
        %3865 = vmatpush1.bf16.msra.mxu0 0
        %3866 = vmatprep.subr.bf16.mxu0 0
        %3867 = vmatpush1.bf16.msra.mxu0 0
        %3868 = vmatprep.subr.bf16.mxu0 0
        %3869 = vmatpush1.bf16.msra.mxu0 0
        %3870 = vmatprep.subr.bf16.mxu0 0
        %3871 = vmatpush1.bf16.msra.mxu0 0
        %3872 = vmatprep.subr.bf16.mxu0 0
        %3873 = vmatpush1.bf16.msra.mxu0 0
        %3874 = vmatprep.subr.bf16.mxu0 0
        %3875 = vmatpush1.bf16.msra.mxu0 0
        %3876 = vmatprep.subr.bf16.mxu0 0
        %3877 = vmatpush1.bf16.msra.mxu0 0
        %3878 = vmatprep.subr.bf16.mxu0 0
        %3879 = vmatpush1.bf16.msra.mxu0 0
        %3880 = vmatprep.subr.bf16.mxu0 0
        %3881 = vmatpush1.bf16.msra.mxu0 0
        %3882 = vmatprep.subr.bf16.mxu0 0
        %3883 = vmatpush1.bf16.msra.mxu0 0
        %3884 = vmatprep.subr.bf16.mxu0 0
        %3885 = vmatpush1.bf16.msra.mxu0 0
        %3886 = vmatprep.subr.bf16.mxu0 0
        %3887 = vmatpush1.bf16.msra.mxu0 0
        %3888 = vmatprep.subr.bf16.mxu0 0
        %3889 = vmatpush1.bf16.msra.mxu0 0
        %3890 = vmatprep.subr.bf16.mxu0 0
        %3891 = vmatpush1.bf16.msra.mxu0 0
        %3892 = vmatprep.mubr.bf16.mxu0 0
        %3893 = vmatmul.mubr.bf16.gmra.mrb[0].mxu0 %v3849
        %v3894 = vpop.f32.mrb[0].mxu0
        %v3895 = vadd.f32 %v3847, %v3894
        %v3896 = vpop.f32.mrb[0].mxu0
        %v3897 = vpop.f32.mrb[0].mxu0
        %v3898 = vadd.f32 %v3847, %v3897
        %v3899 = vpop.f32.mrb[0].mxu0
        %3900 = vmatprep.mubr.bf16.mxu0 0
        %3901 = vmatmul.mubr.bf16.gmra.mrb[0].mxu0 %v3852
        %v3902 = vpop.f32.mrb[0].mxu0
        %v3903 = vadd.f32 %v3847, %v3902
        %v3904 = vpop.f32.mrb[0].mxu0
        %v3905 = vpop.f32.mrb[0].mxu0
        %v3906 = vadd.f32 %v3847, %v3905
        %v3907 = vpop.f32.mrb[0].mxu0
        %3908 = vmatprep.mubr.bf16.mxu0 0
        %3909 = vmatmul.mubr.bf16.gmra.mrb[0].mxu0 %v3855
        %v3910 = vpop.f32.mrb[0].mxu0
        %v3911 = vadd.f32 %v3847, %v3910
        %v3912 = vpop.f32.mrb[0].mxu0
        %v3913 = vpop.f32.mrb[0].mxu0
        %v3914 = vadd.f32 %v3847, %v3913
        %v3915 = vpop.f32.mrb[0].mxu0
        %3916 = vmatprep.mubr.bf16.mxu0 0
        %3917 = vmatmul.mubr.bf16.gmra.mrb[0].mxu0 %v3858
        %v3918 = vpop.f32.mrb[0].mxu0
        %v3919 = vadd.f32 %v3847, %v3918
        %v3920 = vpop.f32.mrb[0].mxu0
        %v3921 = vpop.f32.mrb[0].mxu0
        %v3922 = vadd.f32 %v3847, %v3921
        %v3923 = vpop.f32.mrb[0].mxu0
        %3924 = vdwg.mxu0
        %3925 = vst.msk [vmem:[%s163] sm:$0xff] %vm170, %v3895
        %3926 = vst.msk [vmem:[%s163 + $0x8] sm:$0xff] %vm170, %v3898
        %3927 = vst.msk [vmem:[%s163 + $0x10] sm:$0xff] %vm170, %v3903
        %3928 = vst.msk [vmem:[%s163 + $0x18] sm:$0xff] %vm170, %v3906
        %3929 = vst.msk [vmem:[%s163 + $0x20] sm:$0xff] %vm170, %v3911
        %3930 = vst.msk [vmem:[%s163 + $0x28] sm:$0xff] %vm170, %v3914
        %3931 = vst.msk [vmem:[%s163 + $0x30] sm:$0xff] %vm170, %v3919
        %3932 = vst.msk [vmem:[%s163 + $0x38] sm:$0xff] %vm170, %v3922
        %s3933 = sand.u32 %s93, 1
        %s3934 = scalar_lea.sflag [#allocation6], %s3933
        %s3935 = sand.u32 %s93, 1
        %s3936 = smul.addr %s3935, 64
        %s3937 = scalar_lea.vmem [#allocation5], %s3936
        // Predicated region
        $region33: #{down_forward.1} parent=31 // pred_check
          %p3938 = pneg %p103
        $region34: #{down_forward.1} parent=31 // pred_check_branch
          %3940 = sbr.rel (%p3938) target = $region36
        $region35: #{down_forward.1} parent=31 // pred_region
          %s3942 = ssub.s32 1024, 1024
          %3943 = vsyncadd %s3934, %s3942
          %s3944 = smul.addr %s17, 8
          %s3945 = smul.addr %s3944, 128
          %s3946 = scalar_lea.hbm %s3, %s3945
          %s3947 = sshll.u32 %s3937, 4
          %s3948 = int_to_ptr.vmem [resolvable:$true] %s3947
          %3953 = dma.vmem_to_hbm [thread:$0]  %s3948, 1024, %s3946, %s3934, 128, 128, 8
        $region36: #{down_forward.1} parent=31 // pred_fallthru
          _
      $region32: #{down_forward.1} parent=5 // pred_fallthru
        _
      %p3954 = scmp.le.s32.totalorder 2, %s12
      // Predicated region
      $region37: #{down_forward.1} parent=5 // pred_check
        %p3955 = pneg %p3954
      $region38: #{down_forward.1} parent=5 // pred_check_branch
        %3957 = sbr.rel (%p3955) target = $region40
      $region39: #{down_forward.1} parent=5 // pred_region
        %s3958 = ssub.s32 %s12, 2
        // Predicated region
        $region41: #{down_forward.1} parent=39 // pred_check
          %p3959 = pneg %p109
        $region42: #{down_forward.1} parent=39 // pred_check_branch
          %3961 = sbr.rel (%p3959) target = $region44
        $region43: #{down_forward.1} parent=39 // pred_region
          %s3962 = sand.u32 %s94, 1
          %s3963 = scalar_lea.sflag [#allocation6], %s3962
          %s3964 = sand.u32 %s94, 1
          %s3965 = smul.addr %s3964, 64
          %s3966 = scalar_lea.vmem [#allocation5], %s3965
          %3967 = dma.done %s3963, 1024
        $region44: #{down_forward.1} parent=39 // pred_fallthru
          _
      $region40: #{down_forward.1} parent=5 // pred_fallthru
        _
    $region6: #{down_forward.1} parent=1 // loop_footer
      %s16 = sadd.s32 1, %s12
    $region7: #{down_forward.1} parent=1 // loop_footer_branch
      %11 = sbr.rel target = $region3
    $region8: #{down_forward.1} parent=1 // loop_exit
      _
    %3968 = vsyncpa [#allocation6], 1
    %s3969 = scalar_lea.sflag [#allocation6], 1
    %3970 = vsyncpa %s3969, 1

</llo_original>
